<compile_context>
chip_gen: v7x
topology: tpu7x:2x2x1
jax: 0.10.0
libtpu: 0.0.40
codegen_flags: <defaults>
</compile_context>

<pallas_src>
import jax
import jax.numpy as jnp
import numpy as np
from jax import lax
from jax.experimental import pallas as pl
from jax.experimental.pallas import tpu as pltpu


# ----------------------------- Pallas kernel ---------------------------------
def rnn_model_kernel(sent_ref,    # SMEM [seq]        int32 word indices
                     xg0_ref,     # VMEM [V, 4Hp]     emb @ Wih0^T + b0 (gate-padded)
                     whh0_ref,    # VMEM [Hp, 4Hp]    layer-0 recurrent weight (T, padded)
                     w1_ref,      # VMEM [2Hp, 4Hp]   layer-1 fused [Wih1^T ; Whh1^T] (padded)
                     b1_ref,      # VMEM [1, 4Hp]     layer-1 bias (bih1 + bhh1, padded)
                     wfc_ref,     # VMEM [Hp, V]      fc weight (T, row-padded)
                     bfc_ref,     # VMEM [1, V]       fc bias
                     out_ref,     # VMEM [seq, V]     log-probabilities
                     hbuf_ref):   # VMEM scratch [seq, Hp]  layer-1 hidden states
    f32 = jnp.float32
    seq = out_ref.shape[0]
    Hp = whh0_ref.shape[0]        # padded hidden dim (multiple of 128)

    whh0 = whh0_ref[...]
    w1 = w1_ref[...]
    b1 = b1_ref[...]

    def gates_act(gates):
        # PyTorch gate order i, f, g, o; each slice is one aligned 128-lane span.
        i = jax.nn.sigmoid(gates[:, 0 * Hp:1 * Hp])
        f = jax.nn.sigmoid(gates[:, 1 * Hp:2 * Hp])
        g = jnp.tanh(gates[:, 2 * Hp:3 * Hp])
        o = jax.nn.sigmoid(gates[:, 3 * Hp:4 * Hp])
        return i, f, g, o

    def step(t, carry):
        h1, c1, h2, c2 = carry

        # Layer 0: x_t @ Wih0^T + b0 was pre-folded into the gather table.
        idx = sent_ref[t]
        xg0 = xg0_ref[pl.ds(idx, 1), :]                               # [1, 4Hp]
        gates0 = xg0 + jnp.dot(h1, whh0, preferred_element_type=f32)
        i0, f0, g0, o0 = gates_act(gates0)
        c1 = f0 * c1 + i0 * g0
        h1 = o0 * jnp.tanh(c1)

        # Layer 1: fused input/recurrent weight -> one matmul per step.
        in1 = jnp.concatenate([h1, h2], axis=-1)                      # [1, 2Hp]
        gates1 = jnp.dot(in1, w1, preferred_element_type=f32) + b1
        i1, f1, g1, o1 = gates_act(gates1)
        c2 = f1 * c2 + i1 * g1
        h2 = o1 * jnp.tanh(c2)

        hbuf_ref[pl.ds(t, 1), :] = h2                                 # lane-dense store
        return h1, c1, h2, c2

    zero = jnp.zeros((1, Hp), f32)
    lax.fori_loop(0, seq, step, (zero, zero, zero, zero), unroll=True)

    # fc -> ReLU -> log_softmax over the vocab axis (dim=1)
    logits = (jnp.dot(hbuf_ref[...], wfc_ref[...], preferred_element_type=f32)
              + bfc_ref[...])                                         # [seq, V]
    y = jnp.maximum(logits, 0.0)
    m = jnp.max(y, axis=-1, keepdims=True)
    lse = m + jnp.log(jnp.sum(jnp.exp(y - m), axis=-1, keepdims=True))
    out_ref[...] = y - lse


# ------------------------- one-time parameter prep ----------------------------
def _round_up(x, m):
    return (x + m - 1) // m * m


def prepare_kernel_params(params):
    """One-time weight prep: transpose, fuse W_ih/W_hh and biases, pad H -> Hp
    (128-lane aligned gates), and fold embedding + layer-0 input projection into
    a single gather table."""
    emb = params["emb"].astype(jnp.float32)
    H = params["whh0"].shape[1]
    Hp = _round_up(H, 128)

    def pad_gate_cols(w_t):
        # [K, 4H] -> [K, 4Hp]: place each gate's H columns at a 128-aligned offset.
        out = jnp.zeros((w_t.shape[0], 4 * Hp), jnp.float32)
        for k in range(4):
            out = out.at[:, k * Hp:k * Hp + H].set(w_t[:, k * H:(k + 1) * H])
        return out

    def pad_rows(w, rows):
        return jnp.zeros((rows, w.shape[1]), jnp.float32).at[:w.shape[0], :].set(w)

    # Layer 0: fold embedding lookup + input projection + bias into a gather table.
    wih0_t = pad_gate_cols(params["wih0"].T)                               # [E, 4Hp]
    b0 = pad_gate_cols((params["bih0"] + params["bhh0"])[None, :])         # [1, 4Hp]
    xg0_table = emb @ wih0_t + b0                                          # [V, 4Hp]
    whh0_t = pad_rows(pad_gate_cols(params["whh0"].T), Hp)                 # [Hp, 4Hp]

    # Layer 1: fuse W_ih / W_hh into one weight; fuse biases.
    wih1_t = pad_rows(pad_gate_cols(params["wih1"].T), Hp)                 # [Hp, 4Hp]
    whh1_t = pad_rows(pad_gate_cols(params["whh1"].T), Hp)                 # [Hp, 4Hp]
    w1 = jnp.concatenate([wih1_t, whh1_t], axis=0)                         # [2Hp, 4Hp]
    b1 = pad_gate_cols((params["bih1"] + params["bhh1"])[None, :])         # [1, 4Hp]

    wfc_t = pad_rows(params["wfc"].T, Hp)                                  # [Hp, V]
    bfc = params["bfc"][None, :]                                           # [1, V]

    return {"xg0_table": xg0_table, "whh0": whh0_t, "w1": w1, "b1": b1,
            "wfc": wfc_t, "bfc": bfc}


# ------------------------------ wrapper ---------------------------------------
def rnn_model_forward(sentence, prep):
    """sentence: int32 [seq] word indices. Returns log-probs [seq, vocab]."""
    seq = sentence.shape[0]
    Hp = prep["whh0"].shape[0]
    V = prep["wfc"].shape[1]

    vmem = pl.BlockSpec(memory_space=pltpu.MemorySpace.VMEM)
    smem = pl.BlockSpec(memory_space=pltpu.MemorySpace.SMEM)

    return pl.pallas_call(
        rnn_model_kernel,
        out_shape=jax.ShapeDtypeStruct((seq, V), jnp.float32),
        in_specs=[smem, vmem, vmem, vmem, vmem, vmem, vmem],
        out_specs=vmem,
        scratch_shapes=[pltpu.VMEM((seq, Hp), jnp.float32)],
    )(sentence.astype(jnp.int32), prep["xg0_table"], prep["whh0"],
      prep["w1"], prep["b1"], prep["wfc"], prep["bfc"])


# ----------------------- pure-JAX reference (for checking) --------------------
def rnn_model_reference(sentence, params):
    x = params["emb"][sentence]
    H = params["whh0"].shape[1]

    def cell(x_t, h, c, wih, whh, bih, bhh):
        gates = x_t @ wih.T + h @ whh.T + bih + bhh
        i = jax.nn.sigmoid(gates[0 * H:1 * H])
        f = jax.nn.sigmoid(gates[1 * H:2 * H])
        g = jnp.tanh(gates[2 * H:3 * H])
        o = jax.nn.sigmoid(gates[3 * H:4 * H])
        c = f * c + i * g
        h = o * jnp.tanh(c)
        return h, c

    h1 = c1 = h2 = c2 = jnp.zeros((H,), jnp.float32)
    hs = []
    for t in range(x.shape[0]):
        h1, c1 = cell(x[t], h1, c1, params["wih0"], params["whh0"],
                      params["bih0"], params["bhh0"])
        h2, c2 = cell(h1, h2, c2, params["wih1"], params["whh1"],
                      params["bih1"], params["bhh1"])
        hs.append(h2)
    hseq = jnp.stack(hs, axis=0)
    y = jnp.maximum(hseq @ params["wfc"].T + params["bfc"], 0.0)
    return jax.nn.log_softmax(y, axis=1)


# ------------------------------ param init ------------------------------------
def init_params(key, vocab_len, embedding_dim, hidden_dim):
    ks = jax.random.split(key, 12)
    H, E, V = hidden_dim, embedding_dim, vocab_len
    k_lstm = 1.0 / np.sqrt(H)                       # PyTorch default LSTM init
    w_fc = np.sqrt(6.0 / (H + V))                   # weights_init Xavier uniform

    def u(k, shape, bound):
        return jax.random.uniform(k, shape, jnp.float32, -bound, bound)

    return {
        "emb": jax.random.normal(ks[0], (V, E), jnp.float32),
        # LSTM layer 0
        "wih0": u(ks[1], (4 * H, E), k_lstm),
        "whh0": u(ks[2], (4 * H, H), k_lstm),
        "bih0": u(ks[3], (4 * H,), k_lstm),
        "bhh0": u(ks[4], (4 * H,), k_lstm),
        # LSTM layer 1
        "wih1": u(ks[5], (4 * H, H), k_lstm),
        "whh1": u(ks[6], (4 * H, H), k_lstm),
        "bih1": u(ks[7], (4 * H,), k_lstm),
        "bhh1": u(ks[8], (4 * H,), k_lstm),
        # fc (weights_init: Xavier uniform, bias = 0)
        "wfc": u(ks[9], (V, H), w_fc),
        "bfc": jnp.zeros((V,), jnp.float32),
    }


# --------------------------------- main ----------------------------------------
if __name__ == "__main__":
    SEQ_LEN = 8
    VOCAB_LEN = 128
    EMBED_DIM = 32
    HIDDEN_DIM = 32

    key = jax.random.PRNGKey(0)
    k_param, k_sent = jax.random.split(key)
    params = init_params(k_param, VOCAB_LEN, EMBED_DIM, HIDDEN_DIM)
    sentence = jax.random.randint(k_sent, (SEQ_LEN,), 0, VOCAB_LEN, jnp.int32)

    # One-time weight prep (transpose / fuse / pad / fold embedding + input projection).
    prep = prepare_kernel_params(params)

    out = rnn_model_forward(sentence, prep)
    out = jax.block_until_ready(out)

    ref = rnn_model_reference(sentence, params)
    np.testing.assert_allclose(np.asarray(out), np.asarray(ref), atol=1e-4, rtol=1e-4)

    assert out.shape == (SEQ_LEN, VOCAB_LEN)
    print("KERNEL_OK")
</pallas_src>

<mosaic_0001>
module attributes {stable_mosaic.version = 11 : i64} {
  func.func @rnn_model_kernel(%arg0: memref<8xi32, #tpu.memory_space<smem>>, %arg1: memref<128x512xf32, #tpu.memory_space<vmem>>, %arg2: memref<128x512xf32, #tpu.memory_space<vmem>>, %arg3: memref<256x512xf32, #tpu.memory_space<vmem>>, %arg4: memref<1x512xf32, #tpu.memory_space<vmem>>, %arg5: memref<128x128xf32, #tpu.memory_space<vmem>>, %arg6: memref<1x128xf32, #tpu.memory_space<vmem>>, %arg7: memref<8x128xf32, #tpu.memory_space<vmem>>, %arg8: memref<8x128xf32, #tpu.memory_space<vmem>>) attributes {dimension_semantics = [], scalar_prefetch = 0 : i64, scratch_operands = 1 : i64, tpu.core_type = #tpu.core_type<tc>} {
    %c0 = arith.constant 0 : index
    %c0_0 = arith.constant 0 : index
    %0 = vector.load %arg2[%c0, %c0_0] : memref<128x512xf32, #tpu.memory_space<vmem>>, vector<128x512xf32>
    %c0_1 = arith.constant 0 : index
    %c0_2 = arith.constant 0 : index
    %1 = vector.load %arg3[%c0_1, %c0_2] : memref<256x512xf32, #tpu.memory_space<vmem>>, vector<256x512xf32>
    %c0_3 = arith.constant 0 : index
    %c0_4 = arith.constant 0 : index
    %2 = vector.load %arg4[%c0_3, %c0_4] : memref<1x512xf32, #tpu.memory_space<vmem>>, vector<1x512xf32>
    %cst = arith.constant 0.000000e+00 : f32
    %3 = vector.broadcast %cst : f32 to vector<1x128xf32>
    %c0_i32 = arith.constant 0 : i32
    %4 = arith.index_cast %c0_i32 : i32 to index
    %5 = memref.load %arg0[%4] : memref<8xi32, #tpu.memory_space<smem>>
    %6 = arith.index_cast %5 : i32 to index
    %c0_5 = arith.constant 0 : index
    %7 = vector.load %arg1[%6, %c0_5] : memref<128x512xf32, #tpu.memory_space<vmem>>, vector<1x512xf32>
    %cst_6 = arith.constant dense<0.000000e+00> : vector<1x512xf32>
    %8 = tpu.matmul %3, %0, %cst_6 {dimension_numbers = #tpu.dot_dimension_numbers<[1], [0], [0], [1], [0, 0, 1, 1], [], []>} : vector<1x128xf32>, vector<128x512xf32>, vector<1x512xf32> -> vector<1x512xf32>
    %9 = arith.addf %7, %8 : vector<1x512xf32>
    %10 = vector.extract_strided_slice %9 {offsets = [0, 0], sizes = [1, 128], strides = [1, 1]} : vector<1x512xf32> to vector<1x128xf32>
    %11 = arith.negf %10 : vector<1x128xf32>
    %12 = math.exp %11 : vector<1x128xf32>
    %cst_7 = arith.constant 1.000000e+00 : f32
    %13 = vector.broadcast %cst_7 : f32 to vector<1x128xf32>
    %14 = arith.addf %13, %12 : vector<1x128xf32>
    %15 = arith.divf %13, %14 : vector<1x128xf32>
    %16 = vector.extract_strided_slice %9 {offsets = [0, 128], sizes = [1, 128], strides = [1, 1]} : vector<1x512xf32> to vector<1x128xf32>
    %17 = arith.negf %16 : vector<1x128xf32>
    %18 = math.exp %17 : vector<1x128xf32>
    %cst_8 = arith.constant 1.000000e+00 : f32
    %19 = vector.broadcast %cst_8 : f32 to vector<1x128xf32>
    %20 = arith.addf %19, %18 : vector<1x128xf32>
    %21 = arith.divf %19, %20 : vector<1x128xf32>
    %22 = vector.extract_strided_slice %9 {offsets = [0, 256], sizes = [1, 128], strides = [1, 1]} : vector<1x512xf32> to vector<1x128xf32>
    %23 = math.tanh %22 : vector<1x128xf32>
    %24 = vector.extract_strided_slice %9 {offsets = [0, 384], sizes = [1, 128], strides = [1, 1]} : vector<1x512xf32> to vector<1x128xf32>
    %25 = arith.negf %24 : vector<1x128xf32>
    %26 = math.exp %25 : vector<1x128xf32>
    %cst_9 = arith.constant 1.000000e+00 : f32
    %27 = vector.broadcast %cst_9 : f32 to vector<1x128xf32>
    %28 = arith.addf %27, %26 : vector<1x128xf32>
    %29 = arith.divf %27, %28 : vector<1x128xf32>
    %30 = arith.mulf %21, %3 : vector<1x128xf32>
    %31 = arith.mulf %15, %23 : vector<1x128xf32>
    %32 = arith.addf %30, %31 : vector<1x128xf32>
    %33 = math.tanh %32 : vector<1x128xf32>
    %34 = arith.mulf %29, %33 : vector<1x128xf32>
    %35 = tpu.concatenate %34, %3 in 1 : vector<1x128xf32>, vector<1x128xf32> -> vector<1x256xf32>
    %cst_10 = arith.constant dense<0.000000e+00> : vector<1x512xf32>
    %36 = tpu.matmul %35, %1, %cst_10 {dimension_numbers = #tpu.dot_dimension_numbers<[1], [0], [0], [1], [0, 0, 1, 1], [], []>} : vector<1x256xf32>, vector<256x512xf32>, vector<1x512xf32> -> vector<1x512xf32>
    %37 = arith.addf %36, %2 : vector<1x512xf32>
    %38 = vector.extract_strided_slice %37 {offsets = [0, 0], sizes = [1, 128], strides = [1, 1]} : vector<1x512xf32> to vector<1x128xf32>
    %39 = arith.negf %38 : vector<1x128xf32>
    %40 = math.exp %39 : vector<1x128xf32>
    %cst_11 = arith.constant 1.000000e+00 : f32
    %41 = vector.broadcast %cst_11 : f32 to vector<1x128xf32>
    %42 = arith.addf %41, %40 : vector<1x128xf32>
    %43 = arith.divf %41, %42 : vector<1x128xf32>
    %44 = vector.extract_strided_slice %37 {offsets = [0, 128], sizes = [1, 128], strides = [1, 1]} : vector<1x512xf32> to vector<1x128xf32>
    %45 = arith.negf %44 : vector<1x128xf32>
    %46 = math.exp %45 : vector<1x128xf32>
    %cst_12 = arith.constant 1.000000e+00 : f32
    %47 = vector.broadcast %cst_12 : f32 to vector<1x128xf32>
    %48 = arith.addf %47, %46 : vector<1x128xf32>
    %49 = arith.divf %47, %48 : vector<1x128xf32>
    %50 = vector.extract_strided_slice %37 {offsets = [0, 256], sizes = [1, 128], strides = [1, 1]} : vector<1x512xf32> to vector<1x128xf32>
    %51 = math.tanh %50 : vector<1x128xf32>
    %52 = vector.extract_strided_slice %37 {offsets = [0, 384], sizes = [1, 128], strides = [1, 1]} : vector<1x512xf32> to vector<1x128xf32>
    %53 = arith.negf %52 : vector<1x128xf32>
    %54 = math.exp %53 : vector<1x128xf32>
    %cst_13 = arith.constant 1.000000e+00 : f32
    %55 = vector.broadcast %cst_13 : f32 to vector<1x128xf32>
    %56 = arith.addf %55, %54 : vector<1x128xf32>
    %57 = arith.divf %55, %56 : vector<1x128xf32>
    %58 = arith.mulf %49, %3 : vector<1x128xf32>
    %59 = arith.mulf %43, %51 : vector<1x128xf32>
    %60 = arith.addf %58, %59 : vector<1x128xf32>
    %61 = math.tanh %60 : vector<1x128xf32>
    %62 = arith.mulf %57, %61 : vector<1x128xf32>
    %63 = arith.index_cast %c0_i32 : i32 to index
    %c0_14 = arith.constant 0 : index
    %64 = vector.load %arg8[%63, %c0_14] : memref<8x128xf32, #tpu.memory_space<vmem>>, vector<1x128xf32>
    tpu.vector_store %arg8[%63, %c0_14], %62 {strides = array<i32>} : memref<8x128xf32, #tpu.memory_space<vmem>>, vector<1x128xf32>,
    %c1_i32 = arith.constant 1 : i32
    %65 = arith.index_cast %c1_i32 : i32 to index
    %66 = memref.load %arg0[%65] : memref<8xi32, #tpu.memory_space<smem>>
    %67 = arith.index_cast %66 : i32 to index
    %c0_15 = arith.constant 0 : index
    %68 = vector.load %arg1[%67, %c0_15] : memref<128x512xf32, #tpu.memory_space<vmem>>, vector<1x512xf32>
    %cst_16 = arith.constant dense<0.000000e+00> : vector<1x512xf32>
    %69 = tpu.matmul %34, %0, %cst_16 {dimension_numbers = #tpu.dot_dimension_numbers<[1], [0], [0], [1], [0, 0, 1, 1], [], []>} : vector<1x128xf32>, vector<128x512xf32>, vector<1x512xf32> -> vector<1x512xf32>
    %70 = arith.addf %68, %69 : vector<1x512xf32>
    %71 = vector.extract_strided_slice %70 {offsets = [0, 0], sizes = [1, 128], strides = [1, 1]} : vector<1x512xf32> to vector<1x128xf32>
    %72 = arith.negf %71 : vector<1x128xf32>
    %73 = math.exp %72 : vector<1x128xf32>
    %cst_17 = arith.constant 1.000000e+00 : f32
    %74 = vector.broadcast %cst_17 : f32 to vector<1x128xf32>
    %75 = arith.addf %74, %73 : vector<1x128xf32>
    %76 = arith.divf %74, %75 : vector<1x128xf32>
    %77 = vector.extract_strided_slice %70 {offsets = [0, 128], sizes = [1, 128], strides = [1, 1]} : vector<1x512xf32> to vector<1x128xf32>
    %78 = arith.negf %77 : vector<1x128xf32>
    %79 = math.exp %78 : vector<1x128xf32>
    %cst_18 = arith.constant 1.000000e+00 : f32
    %80 = vector.broadcast %cst_18 : f32 to vector<1x128xf32>
    %81 = arith.addf %80, %79 : vector<1x128xf32>
    %82 = arith.divf %80, %81 : vector<1x128xf32>
    %83 = vector.extract_strided_slice %70 {offsets = [0, 256], sizes = [1, 128], strides = [1, 1]} : vector<1x512xf32> to vector<1x128xf32>
    %84 = math.tanh %83 : vector<1x128xf32>
    %85 = vector.extract_strided_slice %70 {offsets = [0, 384], sizes = [1, 128], strides = [1, 1]} : vector<1x512xf32> to vector<1x128xf32>
    %86 = arith.negf %85 : vector<1x128xf32>
    %87 = math.exp %86 : vector<1x128xf32>
    %cst_19 = arith.constant 1.000000e+00 : f32
    %88 = vector.broadcast %cst_19 : f32 to vector<1x128xf32>
    %89 = arith.addf %88, %87 : vector<1x128xf32>
    %90 = arith.divf %88, %89 : vector<1x128xf32>
    %91 = arith.mulf %82, %32 : vector<1x128xf32>
    %92 = arith.mulf %76, %84 : vector<1x128xf32>
    %93 = arith.addf %91, %92 : vector<1x128xf32>
    %94 = math.tanh %93 : vector<1x128xf32>
    %95 = arith.mulf %90, %94 : vector<1x128xf32>
    %96 = tpu.concatenate %95, %62 in 1 : vector<1x128xf32>, vector<1x128xf32> -> vector<1x256xf32>
    %cst_20 = arith.constant dense<0.000000e+00> : vector<1x512xf32>
    %97 = tpu.matmul %96, %1, %cst_20 {dimension_numbers = #tpu.dot_dimension_numbers<[1], [0], [0], [1], [0, 0, 1, 1], [], []>} : vector<1x256xf32>, vector<256x512xf32>, vector<1x512xf32> -> vector<1x512xf32>
    %98 = arith.addf %97, %2 : vector<1x512xf32>
    %99 = vector.extract_strided_slice %98 {offsets = [0, 0], sizes = [1, 128], strides = [1, 1]} : vector<1x512xf32> to vector<1x128xf32>
    %100 = arith.negf %99 : vector<1x128xf32>
    %101 = math.exp %100 : vector<1x128xf32>
    %cst_21 = arith.constant 1.000000e+00 : f32
    %102 = vector.broadcast %cst_21 : f32 to vector<1x128xf32>
    %103 = arith.addf %102, %101 : vector<1x128xf32>
    %104 = arith.divf %102, %103 : vector<1x128xf32>
    %105 = vector.extract_strided_slice %98 {offsets = [0, 128], sizes = [1, 128], strides = [1, 1]} : vector<1x512xf32> to vector<1x128xf32>
    %106 = arith.negf %105 : vector<1x128xf32>
    %107 = math.exp %106 : vector<1x128xf32>
    %cst_22 = arith.constant 1.000000e+00 : f32
    %108 = vector.broadcast %cst_22 : f32 to vector<1x128xf32>
    %109 = arith.addf %108, %107 : vector<1x128xf32>
    %110 = arith.divf %108, %109 : vector<1x128xf32>
    %111 = vector.extract_strided_slice %98 {offsets = [0, 256], sizes = [1, 128], strides = [1, 1]} : vector<1x512xf32> to vector<1x128xf32>
    %112 = math.tanh %111 : vector<1x128xf32>
    %113 = vector.extract_strided_slice %98 {offsets = [0, 384], sizes = [1, 128], strides = [1, 1]} : vector<1x512xf32> to vector<1x128xf32>
    %114 = arith.negf %113 : vector<1x128xf32>
    %115 = math.exp %114 : vector<1x128xf32>
    %cst_23 = arith.constant 1.000000e+00 : f32
    %116 = vector.broadcast %cst_23 : f32 to vector<1x128xf32>
    %117 = arith.addf %116, %115 : vector<1x128xf32>
    %118 = arith.divf %116, %117 : vector<1x128xf32>
    %119 = arith.mulf %110, %60 : vector<1x128xf32>
    %120 = arith.mulf %104, %112 : vector<1x128xf32>
    %121 = arith.addf %119, %120 : vector<1x128xf32>
    %122 = math.tanh %121 : vector<1x128xf32>
    %123 = arith.mulf %118, %122 : vector<1x128xf32>
    %124 = arith.index_cast %c1_i32 : i32 to index
    %c0_24 = arith.constant 0 : index
    %125 = vector.load %arg8[%124, %c0_24] : memref<8x128xf32, #tpu.memory_space<vmem>>, vector<1x128xf32>
    tpu.vector_store %arg8[%124, %c0_24], %123 {strides = array<i32>} : memref<8x128xf32, #tpu.memory_space<vmem>>, vector<1x128xf32>,
    %c2_i32 = arith.constant 2 : i32
    %126 = arith.index_cast %c2_i32 : i32 to index
    %127 = memref.load %arg0[%126] : memref<8xi32, #tpu.memory_space<smem>>
    %128 = arith.index_cast %127 : i32 to index
    %c0_25 = arith.constant 0 : index
    %129 = vector.load %arg1[%128, %c0_25] : memref<128x512xf32, #tpu.memory_space<vmem>>, vector<1x512xf32>
    %cst_26 = arith.constant dense<0.000000e+00> : vector<1x512xf32>
    %130 = tpu.matmul %95, %0, %cst_26 {dimension_numbers = #tpu.dot_dimension_numbers<[1], [0], [0], [1], [0, 0, 1, 1], [], []>} : vector<1x128xf32>, vector<128x512xf32>, vector<1x512xf32> -> vector<1x512xf32>
    %131 = arith.addf %129, %130 : vector<1x512xf32>
    %132 = vector.extract_strided_slice %131 {offsets = [0, 0], sizes = [1, 128], strides = [1, 1]} : vector<1x512xf32> to vector<1x128xf32>
    %133 = arith.negf %132 : vector<1x128xf32>
    %134 = math.exp %133 : vector<1x128xf32>
    %cst_27 = arith.constant 1.000000e+00 : f32
    %135 = vector.broadcast %cst_27 : f32 to vector<1x128xf32>
    %136 = arith.addf %135, %134 : vector<1x128xf32>
    %137 = arith.divf %135, %136 : vector<1x128xf32>
    %138 = vector.extract_strided_slice %131 {offsets = [0, 128], sizes = [1, 128], strides = [1, 1]} : vector<1x512xf32> to vector<1x128xf32>
    %139 = arith.negf %138 : vector<1x128xf32>
    %140 = math.exp %139 : vector<1x128xf32>
    %cst_28 = arith.constant 1.000000e+00 : f32
    %141 = vector.broadcast %cst_28 : f32 to vector<1x128xf32>
    %142 = arith.addf %141, %140 : vector<1x128xf32>
    %143 = arith.divf %141, %142 : vector<1x128xf32>
    %144 = vector.extract_strided_slice %131 {offsets = [0, 256], sizes = [1, 128], strides = [1, 1]} : vector<1x512xf32> to vector<1x128xf32>
    %145 = math.tanh %144 : vector<1x128xf32>
    %146 = vector.extract_strided_slice %131 {offsets = [0, 384], sizes = [1, 128], strides = [1, 1]} : vector<1x512xf32> to vector<1x128xf32>
    %147 = arith.negf %146 : vector<1x128xf32>
    %148 = math.exp %147 : vector<1x128xf32>
    %cst_29 = arith.constant 1.000000e+00 : f32
    %149 = vector.broadcast %cst_29 : f32 to vector<1x128xf32>
    %150 = arith.addf %149, %148 : vector<1x128xf32>
    %151 = arith.divf %149, %150 : vector<1x128xf32>
    %152 = arith.mulf %143, %93 : vector<1x128xf32>
    %153 = arith.mulf %137, %145 : vector<1x128xf32>
    %154 = arith.addf %152, %153 : vector<1x128xf32>
    %155 = math.tanh %154 : vector<1x128xf32>
    %156 = arith.mulf %151, %155 : vector<1x128xf32>
    %157 = tpu.concatenate %156, %123 in 1 : vector<1x128xf32>, vector<1x128xf32> -> vector<1x256xf32>
    %cst_30 = arith.constant dense<0.000000e+00> : vector<1x512xf32>
    %158 = tpu.matmul %157, %1, %cst_30 {dimension_numbers = #tpu.dot_dimension_numbers<[1], [0], [0], [1], [0, 0, 1, 1], [], []>} : vector<1x256xf32>, vector<256x512xf32>, vector<1x512xf32> -> vector<1x512xf32>
    %159 = arith.addf %158, %2 : vector<1x512xf32>
    %160 = vector.extract_strided_slice %159 {offsets = [0, 0], sizes = [1, 128], strides = [1, 1]} : vector<1x512xf32> to vector<1x128xf32>
    %161 = arith.negf %160 : vector<1x128xf32>
    %162 = math.exp %161 : vector<1x128xf32>
    %cst_31 = arith.constant 1.000000e+00 : f32
    %163 = vector.broadcast %cst_31 : f32 to vector<1x128xf32>
    %164 = arith.addf %163, %162 : vector<1x128xf32>
    %165 = arith.divf %163, %164 : vector<1x128xf32>
    %166 = vector.extract_strided_slice %159 {offsets = [0, 128], sizes = [1, 128], strides = [1, 1]} : vector<1x512xf32> to vector<1x128xf32>
    %167 = arith.negf %166 : vector<1x128xf32>
    %168 = math.exp %167 : vector<1x128xf32>
    %cst_32 = arith.constant 1.000000e+00 : f32
    %169 = vector.broadcast %cst_32 : f32 to vector<1x128xf32>
    %170 = arith.addf %169, %168 : vector<1x128xf32>
    %171 = arith.divf %169, %170 : vector<1x128xf32>
    %172 = vector.extract_strided_slice %159 {offsets = [0, 256], sizes = [1, 128], strides = [1, 1]} : vector<1x512xf32> to vector<1x128xf32>
    %173 = math.tanh %172 : vector<1x128xf32>
    %174 = vector.extract_strided_slice %159 {offsets = [0, 384], sizes = [1, 128], strides = [1, 1]} : vector<1x512xf32> to vector<1x128xf32>
    %175 = arith.negf %174 : vector<1x128xf32>
    %176 = math.exp %175 : vector<1x128xf32>
    %cst_33 = arith.constant 1.000000e+00 : f32
    %177 = vector.broadcast %cst_33 : f32 to vector<1x128xf32>
    %178 = arith.addf %177, %176 : vector<1x128xf32>
    %179 = arith.divf %177, %178 : vector<1x128xf32>
    %180 = arith.mulf %171, %121 : vector<1x128xf32>
    %181 = arith.mulf %165, %173 : vector<1x128xf32>
    %182 = arith.addf %180, %181 : vector<1x128xf32>
    %183 = math.tanh %182 : vector<1x128xf32>
    %184 = arith.mulf %179, %183 : vector<1x128xf32>
    %185 = arith.index_cast %c2_i32 : i32 to index
    %c0_34 = arith.constant 0 : index
    %186 = vector.load %arg8[%185, %c0_34] : memref<8x128xf32, #tpu.memory_space<vmem>>, vector<1x128xf32>
    tpu.vector_store %arg8[%185, %c0_34], %184 {strides = array<i32>} : memref<8x128xf32, #tpu.memory_space<vmem>>, vector<1x128xf32>,
    %c3_i32 = arith.constant 3 : i32
    %187 = arith.index_cast %c3_i32 : i32 to index
    %188 = memref.load %arg0[%187] : memref<8xi32, #tpu.memory_space<smem>>
    %189 = arith.index_cast %188 : i32 to index
    %c0_35 = arith.constant 0 : index
    %190 = vector.load %arg1[%189, %c0_35] : memref<128x512xf32, #tpu.memory_space<vmem>>, vector<1x512xf32>
    %cst_36 = arith.constant dense<0.000000e+00> : vector<1x512xf32>
    %191 = tpu.matmul %156, %0, %cst_36 {dimension_numbers = #tpu.dot_dimension_numbers<[1], [0], [0], [1], [0, 0, 1, 1], [], []>} : vector<1x128xf32>, vector<128x512xf32>, vector<1x512xf32> -> vector<1x512xf32>
    %192 = arith.addf %190, %191 : vector<1x512xf32>
    %193 = vector.extract_strided_slice %192 {offsets = [0, 0], sizes = [1, 128], strides = [1, 1]} : vector<1x512xf32> to vector<1x128xf32>
    %194 = arith.negf %193 : vector<1x128xf32>
    %195 = math.exp %194 : vector<1x128xf32>
    %cst_37 = arith.constant 1.000000e+00 : f32
    %196 = vector.broadcast %cst_37 : f32 to vector<1x128xf32>
    %197 = arith.addf %196, %195 : vector<1x128xf32>
    %198 = arith.divf %196, %197 : vector<1x128xf32>
    %199 = vector.extract_strided_slice %192 {offsets = [0, 128], sizes = [1, 128], strides = [1, 1]} : vector<1x512xf32> to vector<1x128xf32>
    %200 = arith.negf %199 : vector<1x128xf32>
    %201 = math.exp %200 : vector<1x128xf32>
    %cst_38 = arith.constant 1.000000e+00 : f32
    %202 = vector.broadcast %cst_38 : f32 to vector<1x128xf32>
    %203 = arith.addf %202, %201 : vector<1x128xf32>
    %204 = arith.divf %202, %203 : vector<1x128xf32>
    %205 = vector.extract_strided_slice %192 {offsets = [0, 256], sizes = [1, 128], strides = [1, 1]} : vector<1x512xf32> to vector<1x128xf32>
    %206 = math.tanh %205 : vector<1x128xf32>
    %207 = vector.extract_strided_slice %192 {offsets = [0, 384], sizes = [1, 128], strides = [1, 1]} : vector<1x512xf32> to vector<1x128xf32>
    %208 = arith.negf %207 : vector<1x128xf32>
    %209 = math.exp %208 : vector<1x128xf32>
    %cst_39 = arith.constant 1.000000e+00 : f32
    %210 = vector.broadcast %cst_39 : f32 to vector<1x128xf32>
    %211 = arith.addf %210, %209 : vector<1x128xf32>
    %212 = arith.divf %210, %211 : vector<1x128xf32>
    %213 = arith.mulf %204, %154 : vector<1x128xf32>
    %214 = arith.mulf %198, %206 : vector<1x128xf32>
    %215 = arith.addf %213, %214 : vector<1x128xf32>
    %216 = math.tanh %215 : vector<1x128xf32>
    %217 = arith.mulf %212, %216 : vector<1x128xf32>
    %218 = tpu.concatenate %217, %184 in 1 : vector<1x128xf32>, vector<1x128xf32> -> vector<1x256xf32>
    %cst_40 = arith.constant dense<0.000000e+00> : vector<1x512xf32>
    %219 = tpu.matmul %218, %1, %cst_40 {dimension_numbers = #tpu.dot_dimension_numbers<[1], [0], [0], [1], [0, 0, 1, 1], [], []>} : vector<1x256xf32>, vector<256x512xf32>, vector<1x512xf32> -> vector<1x512xf32>
    %220 = arith.addf %219, %2 : vector<1x512xf32>
    %221 = vector.extract_strided_slice %220 {offsets = [0, 0], sizes = [1, 128], strides = [1, 1]} : vector<1x512xf32> to vector<1x128xf32>
    %222 = arith.negf %221 : vector<1x128xf32>
    %223 = math.exp %222 : vector<1x128xf32>
    %cst_41 = arith.constant 1.000000e+00 : f32
    %224 = vector.broadcast %cst_41 : f32 to vector<1x128xf32>
    %225 = arith.addf %224, %223 : vector<1x128xf32>
    %226 = arith.divf %224, %225 : vector<1x128xf32>
    %227 = vector.extract_strided_slice %220 {offsets = [0, 128], sizes = [1, 128], strides = [1, 1]} : vector<1x512xf32> to vector<1x128xf32>
    %228 = arith.negf %227 : vector<1x128xf32>
    %229 = math.exp %228 : vector<1x128xf32>
    %cst_42 = arith.constant 1.000000e+00 : f32
    %230 = vector.broadcast %cst_42 : f32 to vector<1x128xf32>
    %231 = arith.addf %230, %229 : vector<1x128xf32>
    %232 = arith.divf %230, %231 : vector<1x128xf32>
    %233 = vector.extract_strided_slice %220 {offsets = [0, 256], sizes = [1, 128], strides = [1, 1]} : vector<1x512xf32> to vector<1x128xf32>
    %234 = math.tanh %233 : vector<1x128xf32>
    %235 = vector.extract_strided_slice %220 {offsets = [0, 384], sizes = [1, 128], strides = [1, 1]} : vector<1x512xf32> to vector<1x128xf32>
    %236 = arith.negf %235 : vector<1x128xf32>
    %237 = math.exp %236 : vector<1x128xf32>
    %cst_43 = arith.constant 1.000000e+00 : f32
    %238 = vector.broadcast %cst_43 : f32 to vector<1x128xf32>
    %239 = arith.addf %238, %237 : vector<1x128xf32>
    %240 = arith.divf %238, %239 : vector<1x128xf32>
    %241 = arith.mulf %232, %182 : vector<1x128xf32>
    %242 = arith.mulf %226, %234 : vector<1x128xf32>
    %243 = arith.addf %241, %242 : vector<1x128xf32>
    %244 = math.tanh %243 : vector<1x128xf32>
    %245 = arith.mulf %240, %244 : vector<1x128xf32>
    %246 = arith.index_cast %c3_i32 : i32 to index
    %c0_44 = arith.constant 0 : index
    %247 = vector.load %arg8[%246, %c0_44] : memref<8x128xf32, #tpu.memory_space<vmem>>, vector<1x128xf32>
    tpu.vector_store %arg8[%246, %c0_44], %245 {strides = array<i32>} : memref<8x128xf32, #tpu.memory_space<vmem>>, vector<1x128xf32>,
    %c4_i32 = arith.constant 4 : i32
    %248 = arith.index_cast %c4_i32 : i32 to index
    %249 = memref.load %arg0[%248] : memref<8xi32, #tpu.memory_space<smem>>
    %250 = arith.index_cast %249 : i32 to index
    %c0_45 = arith.constant 0 : index
    %251 = vector.load %arg1[%250, %c0_45] : memref<128x512xf32, #tpu.memory_space<vmem>>, vector<1x512xf32>
    %cst_46 = arith.constant dense<0.000000e+00> : vector<1x512xf32>
    %252 = tpu.matmul %217, %0, %cst_46 {dimension_numbers = #tpu.dot_dimension_numbers<[1], [0], [0], [1], [0, 0, 1, 1], [], []>} : vector<1x128xf32>, vector<128x512xf32>, vector<1x512xf32> -> vector<1x512xf32>
    %253 = arith.addf %251, %252 : vector<1x512xf32>
    %254 = vector.extract_strided_slice %253 {offsets = [0, 0], sizes = [1, 128], strides = [1, 1]} : vector<1x512xf32> to vector<1x128xf32>
    %255 = arith.negf %254 : vector<1x128xf32>
    %256 = math.exp %255 : vector<1x128xf32>
    %cst_47 = arith.constant 1.000000e+00 : f32
    %257 = vector.broadcast %cst_47 : f32 to vector<1x128xf32>
    %258 = arith.addf %257, %256 : vector<1x128xf32>
    %259 = arith.divf %257, %258 : vector<1x128xf32>
    %260 = vector.extract_strided_slice %253 {offsets = [0, 128], sizes = [1, 128], strides = [1, 1]} : vector<1x512xf32> to vector<1x128xf32>
    %261 = arith.negf %260 : vector<1x128xf32>
    %262 = math.exp %261 : vector<1x128xf32>
    %cst_48 = arith.constant 1.000000e+00 : f32
    %263 = vector.broadcast %cst_48 : f32 to vector<1x128xf32>
    %264 = arith.addf %263, %262 : vector<1x128xf32>
    %265 = arith.divf %263, %264 : vector<1x128xf32>
    %266 = vector.extract_strided_slice %253 {offsets = [0, 256], sizes = [1, 128], strides = [1, 1]} : vector<1x512xf32> to vector<1x128xf32>
    %267 = math.tanh %266 : vector<1x128xf32>
    %268 = vector.extract_strided_slice %253 {offsets = [0, 384], sizes = [1, 128], strides = [1, 1]} : vector<1x512xf32> to vector<1x128xf32>
    %269 = arith.negf %268 : vector<1x128xf32>
    %270 = math.exp %269 : vector<1x128xf32>
    %cst_49 = arith.constant 1.000000e+00 : f32
    %271 = vector.broadcast %cst_49 : f32 to vector<1x128xf32>
    %272 = arith.addf %271, %270 : vector<1x128xf32>
    %273 = arith.divf %271, %272 : vector<1x128xf32>
    %274 = arith.mulf %265, %215 : vector<1x128xf32>
    %275 = arith.mulf %259, %267 : vector<1x128xf32>
    %276 = arith.addf %274, %275 : vector<1x128xf32>
    %277 = math.tanh %276 : vector<1x128xf32>
    %278 = arith.mulf %273, %277 : vector<1x128xf32>
    %279 = tpu.concatenate %278, %245 in 1 : vector<1x128xf32>, vector<1x128xf32> -> vector<1x256xf32>
    %cst_50 = arith.constant dense<0.000000e+00> : vector<1x512xf32>
    %280 = tpu.matmul %279, %1, %cst_50 {dimension_numbers = #tpu.dot_dimension_numbers<[1], [0], [0], [1], [0, 0, 1, 1], [], []>} : vector<1x256xf32>, vector<256x512xf32>, vector<1x512xf32> -> vector<1x512xf32>
    %281 = arith.addf %280, %2 : vector<1x512xf32>
    %282 = vector.extract_strided_slice %281 {offsets = [0, 0], sizes = [1, 128], strides = [1, 1]} : vector<1x512xf32> to vector<1x128xf32>
    %283 = arith.negf %282 : vector<1x128xf32>
    %284 = math.exp %283 : vector<1x128xf32>
    %cst_51 = arith.constant 1.000000e+00 : f32
    %285 = vector.broadcast %cst_51 : f32 to vector<1x128xf32>
    %286 = arith.addf %285, %284 : vector<1x128xf32>
    %287 = arith.divf %285, %286 : vector<1x128xf32>
    %288 = vector.extract_strided_slice %281 {offsets = [0, 128], sizes = [1, 128], strides = [1, 1]} : vector<1x512xf32> to vector<1x128xf32>
    %289 = arith.negf %288 : vector<1x128xf32>
    %290 = math.exp %289 : vector<1x128xf32>
    %cst_52 = arith.constant 1.000000e+00 : f32
    %291 = vector.broadcast %cst_52 : f32 to vector<1x128xf32>
    %292 = arith.addf %291, %290 : vector<1x128xf32>
    %293 = arith.divf %291, %292 : vector<1x128xf32>
    %294 = vector.extract_strided_slice %281 {offsets = [0, 256], sizes = [1, 128], strides = [1, 1]} : vector<1x512xf32> to vector<1x128xf32>
    %295 = math.tanh %294 : vector<1x128xf32>
    %296 = vector.extract_strided_slice %281 {offsets = [0, 384], sizes = [1, 128], strides = [1, 1]} : vector<1x512xf32> to vector<1x128xf32>
    %297 = arith.negf %296 : vector<1x128xf32>
    %298 = math.exp %297 : vector<1x128xf32>
    %cst_53 = arith.constant 1.000000e+00 : f32
    %299 = vector.broadcast %cst_53 : f32 to vector<1x128xf32>
    %300 = arith.addf %299, %298 : vector<1x128xf32>
    %301 = arith.divf %299, %300 : vector<1x128xf32>
    %302 = arith.mulf %293, %243 : vector<1x128xf32>
    %303 = arith.mulf %287, %295 : vector<1x128xf32>
    %304 = arith.addf %302, %303 : vector<1x128xf32>
    %305 = math.tanh %304 : vector<1x128xf32>
    %306 = arith.mulf %301, %305 : vector<1x128xf32>
    %307 = arith.index_cast %c4_i32 : i32 to index
    %c0_54 = arith.constant 0 : index
    %308 = vector.load %arg8[%307, %c0_54] : memref<8x128xf32, #tpu.memory_space<vmem>>, vector<1x128xf32>
    tpu.vector_store %arg8[%307, %c0_54], %306 {strides = array<i32>} : memref<8x128xf32, #tpu.memory_space<vmem>>, vector<1x128xf32>,
    %c5_i32 = arith.constant 5 : i32
    %309 = arith.index_cast %c5_i32 : i32 to index
    %310 = memref.load %arg0[%309] : memref<8xi32, #tpu.memory_space<smem>>
    %311 = arith.index_cast %310 : i32 to index
    %c0_55 = arith.constant 0 : index
    %312 = vector.load %arg1[%311, %c0_55] : memref<128x512xf32, #tpu.memory_space<vmem>>, vector<1x512xf32>
    %cst_56 = arith.constant dense<0.000000e+00> : vector<1x512xf32>
    %313 = tpu.matmul %278, %0, %cst_56 {dimension_numbers = #tpu.dot_dimension_numbers<[1], [0], [0], [1], [0, 0, 1, 1], [], []>} : vector<1x128xf32>, vector<128x512xf32>, vector<1x512xf32> -> vector<1x512xf32>
    %314 = arith.addf %312, %313 : vector<1x512xf32>
    %315 = vector.extract_strided_slice %314 {offsets = [0, 0], sizes = [1, 128], strides = [1, 1]} : vector<1x512xf32> to vector<1x128xf32>
    %316 = arith.negf %315 : vector<1x128xf32>
    %317 = math.exp %316 : vector<1x128xf32>
    %cst_57 = arith.constant 1.000000e+00 : f32
    %318 = vector.broadcast %cst_57 : f32 to vector<1x128xf32>
    %319 = arith.addf %318, %317 : vector<1x128xf32>
    %320 = arith.divf %318, %319 : vector<1x128xf32>
    %321 = vector.extract_strided_slice %314 {offsets = [0, 128], sizes = [1, 128], strides = [1, 1]} : vector<1x512xf32> to vector<1x128xf32>
    %322 = arith.negf %321 : vector<1x128xf32>
    %323 = math.exp %322 : vector<1x128xf32>
    %cst_58 = arith.constant 1.000000e+00 : f32
    %324 = vector.broadcast %cst_58 : f32 to vector<1x128xf32>
    %325 = arith.addf %324, %323 : vector<1x128xf32>
    %326 = arith.divf %324, %325 : vector<1x128xf32>
    %327 = vector.extract_strided_slice %314 {offsets = [0, 256], sizes = [1, 128], strides = [1, 1]} : vector<1x512xf32> to vector<1x128xf32>
    %328 = math.tanh %327 : vector<1x128xf32>
    %329 = vector.extract_strided_slice %314 {offsets = [0, 384], sizes = [1, 128], strides = [1, 1]} : vector<1x512xf32> to vector<1x128xf32>
    %330 = arith.negf %329 : vector<1x128xf32>
    %331 = math.exp %330 : vector<1x128xf32>
    %cst_59 = arith.constant 1.000000e+00 : f32
    %332 = vector.broadcast %cst_59 : f32 to vector<1x128xf32>
    %333 = arith.addf %332, %331 : vector<1x128xf32>
    %334 = arith.divf %332, %333 : vector<1x128xf32>
    %335 = arith.mulf %326, %276 : vector<1x128xf32>
    %336 = arith.mulf %320, %328 : vector<1x128xf32>
    %337 = arith.addf %335, %336 : vector<1x128xf32>
    %338 = math.tanh %337 : vector<1x128xf32>
    %339 = arith.mulf %334, %338 : vector<1x128xf32>
    %340 = tpu.concatenate %339, %306 in 1 : vector<1x128xf32>, vector<1x128xf32> -> vector<1x256xf32>
    %cst_60 = arith.constant dense<0.000000e+00> : vector<1x512xf32>
    %341 = tpu.matmul %340, %1, %cst_60 {dimension_numbers = #tpu.dot_dimension_numbers<[1], [0], [0], [1], [0, 0, 1, 1], [], []>} : vector<1x256xf32>, vector<256x512xf32>, vector<1x512xf32> -> vector<1x512xf32>
    %342 = arith.addf %341, %2 : vector<1x512xf32>
    %343 = vector.extract_strided_slice %342 {offsets = [0, 0], sizes = [1, 128], strides = [1, 1]} : vector<1x512xf32> to vector<1x128xf32>
    %344 = arith.negf %343 : vector<1x128xf32>
    %345 = math.exp %344 : vector<1x128xf32>
    %cst_61 = arith.constant 1.000000e+00 : f32
    %346 = vector.broadcast %cst_61 : f32 to vector<1x128xf32>
    %347 = arith.addf %346, %345 : vector<1x128xf32>
    %348 = arith.divf %346, %347 : vector<1x128xf32>
    %349 = vector.extract_strided_slice %342 {offsets = [0, 128], sizes = [1, 128], strides = [1, 1]} : vector<1x512xf32> to vector<1x128xf32>
    %350 = arith.negf %349 : vector<1x128xf32>
    %351 = math.exp %350 : vector<1x128xf32>
    %cst_62 = arith.constant 1.000000e+00 : f32
    %352 = vector.broadcast %cst_62 : f32 to vector<1x128xf32>
    %353 = arith.addf %352, %351 : vector<1x128xf32>
    %354 = arith.divf %352, %353 : vector<1x128xf32>
    %355 = vector.extract_strided_slice %342 {offsets = [0, 256], sizes = [1, 128], strides = [1, 1]} : vector<1x512xf32> to vector<1x128xf32>
    %356 = math.tanh %355 : vector<1x128xf32>
    %357 = vector.extract_strided_slice %342 {offsets = [0, 384], sizes = [1, 128], strides = [1, 1]} : vector<1x512xf32> to vector<1x128xf32>
    %358 = arith.negf %357 : vector<1x128xf32>
    %359 = math.exp %358 : vector<1x128xf32>
    %cst_63 = arith.constant 1.000000e+00 : f32
    %360 = vector.broadcast %cst_63 : f32 to vector<1x128xf32>
    %361 = arith.addf %360, %359 : vector<1x128xf32>
    %362 = arith.divf %360, %361 : vector<1x128xf32>
    %363 = arith.mulf %354, %304 : vector<1x128xf32>
    %364 = arith.mulf %348, %356 : vector<1x128xf32>
    %365 = arith.addf %363, %364 : vector<1x128xf32>
    %366 = math.tanh %365 : vector<1x128xf32>
    %367 = arith.mulf %362, %366 : vector<1x128xf32>
    %368 = arith.index_cast %c5_i32 : i32 to index
    %c0_64 = arith.constant 0 : index
    %369 = vector.load %arg8[%368, %c0_64] : memref<8x128xf32, #tpu.memory_space<vmem>>, vector<1x128xf32>
    tpu.vector_store %arg8[%368, %c0_64], %367 {strides = array<i32>} : memref<8x128xf32, #tpu.memory_space<vmem>>, vector<1x128xf32>,
    %c6_i32 = arith.constant 6 : i32
    %370 = arith.index_cast %c6_i32 : i32 to index
    %371 = memref.load %arg0[%370] : memref<8xi32, #tpu.memory_space<smem>>
    %372 = arith.index_cast %371 : i32 to index
    %c0_65 = arith.constant 0 : index
    %373 = vector.load %arg1[%372, %c0_65] : memref<128x512xf32, #tpu.memory_space<vmem>>, vector<1x512xf32>
    %cst_66 = arith.constant dense<0.000000e+00> : vector<1x512xf32>
    %374 = tpu.matmul %339, %0, %cst_66 {dimension_numbers = #tpu.dot_dimension_numbers<[1], [0], [0], [1], [0, 0, 1, 1], [], []>} : vector<1x128xf32>, vector<128x512xf32>, vector<1x512xf32> -> vector<1x512xf32>
    %375 = arith.addf %373, %374 : vector<1x512xf32>
    %376 = vector.extract_strided_slice %375 {offsets = [0, 0], sizes = [1, 128], strides = [1, 1]} : vector<1x512xf32> to vector<1x128xf32>
    %377 = arith.negf %376 : vector<1x128xf32>
    %378 = math.exp %377 : vector<1x128xf32>
    %cst_67 = arith.constant 1.000000e+00 : f32
    %379 = vector.broadcast %cst_67 : f32 to vector<1x128xf32>
    %380 = arith.addf %379, %378 : vector<1x128xf32>
    %381 = arith.divf %379, %380 : vector<1x128xf32>
    %382 = vector.extract_strided_slice %375 {offsets = [0, 128], sizes = [1, 128], strides = [1, 1]} : vector<1x512xf32> to vector<1x128xf32>
    %383 = arith.negf %382 : vector<1x128xf32>
    %384 = math.exp %383 : vector<1x128xf32>
    %cst_68 = arith.constant 1.000000e+00 : f32
    %385 = vector.broadcast %cst_68 : f32 to vector<1x128xf32>
    %386 = arith.addf %385, %384 : vector<1x128xf32>
    %387 = arith.divf %385, %386 : vector<1x128xf32>
    %388 = vector.extract_strided_slice %375 {offsets = [0, 256], sizes = [1, 128], strides = [1, 1]} : vector<1x512xf32> to vector<1x128xf32>
    %389 = math.tanh %388 : vector<1x128xf32>
    %390 = vector.extract_strided_slice %375 {offsets = [0, 384], sizes = [1, 128], strides = [1, 1]} : vector<1x512xf32> to vector<1x128xf32>
    %391 = arith.negf %390 : vector<1x128xf32>
    %392 = math.exp %391 : vector<1x128xf32>
    %cst_69 = arith.constant 1.000000e+00 : f32
    %393 = vector.broadcast %cst_69 : f32 to vector<1x128xf32>
    %394 = arith.addf %393, %392 : vector<1x128xf32>
    %395 = arith.divf %393, %394 : vector<1x128xf32>
    %396 = arith.mulf %387, %337 : vector<1x128xf32>
    %397 = arith.mulf %381, %389 : vector<1x128xf32>
    %398 = arith.addf %396, %397 : vector<1x128xf32>
    %399 = math.tanh %398 : vector<1x128xf32>
    %400 = arith.mulf %395, %399 : vector<1x128xf32>
    %401 = tpu.concatenate %400, %367 in 1 : vector<1x128xf32>, vector<1x128xf32> -> vector<1x256xf32>
    %cst_70 = arith.constant dense<0.000000e+00> : vector<1x512xf32>
    %402 = tpu.matmul %401, %1, %cst_70 {dimension_numbers = #tpu.dot_dimension_numbers<[1], [0], [0], [1], [0, 0, 1, 1], [], []>} : vector<1x256xf32>, vector<256x512xf32>, vector<1x512xf32> -> vector<1x512xf32>
    %403 = arith.addf %402, %2 : vector<1x512xf32>
    %404 = vector.extract_strided_slice %403 {offsets = [0, 0], sizes = [1, 128], strides = [1, 1]} : vector<1x512xf32> to vector<1x128xf32>
    %405 = arith.negf %404 : vector<1x128xf32>
    %406 = math.exp %405 : vector<1x128xf32>
    %cst_71 = arith.constant 1.000000e+00 : f32
    %407 = vector.broadcast %cst_71 : f32 to vector<1x128xf32>
    %408 = arith.addf %407, %406 : vector<1x128xf32>
    %409 = arith.divf %407, %408 : vector<1x128xf32>
    %410 = vector.extract_strided_slice %403 {offsets = [0, 128], sizes = [1, 128], strides = [1, 1]} : vector<1x512xf32> to vector<1x128xf32>
    %411 = arith.negf %410 : vector<1x128xf32>
    %412 = math.exp %411 : vector<1x128xf32>
    %cst_72 = arith.constant 1.000000e+00 : f32
    %413 = vector.broadcast %cst_72 : f32 to vector<1x128xf32>
    %414 = arith.addf %413, %412 : vector<1x128xf32>
    %415 = arith.divf %413, %414 : vector<1x128xf32>
    %416 = vector.extract_strided_slice %403 {offsets = [0, 256], sizes = [1, 128], strides = [1, 1]} : vector<1x512xf32> to vector<1x128xf32>
    %417 = math.tanh %416 : vector<1x128xf32>
    %418 = vector.extract_strided_slice %403 {offsets = [0, 384], sizes = [1, 128], strides = [1, 1]} : vector<1x512xf32> to vector<1x128xf32>
    %419 = arith.negf %418 : vector<1x128xf32>
    %420 = math.exp %419 : vector<1x128xf32>
    %cst_73 = arith.constant 1.000000e+00 : f32
    %421 = vector.broadcast %cst_73 : f32 to vector<1x128xf32>
    %422 = arith.addf %421, %420 : vector<1x128xf32>
    %423 = arith.divf %421, %422 : vector<1x128xf32>
    %424 = arith.mulf %415, %365 : vector<1x128xf32>
    %425 = arith.mulf %409, %417 : vector<1x128xf32>
    %426 = arith.addf %424, %425 : vector<1x128xf32>
    %427 = math.tanh %426 : vector<1x128xf32>
    %428 = arith.mulf %423, %427 : vector<1x128xf32>
    %429 = arith.index_cast %c6_i32 : i32 to index
    %c0_74 = arith.constant 0 : index
    %430 = vector.load %arg8[%429, %c0_74] : memref<8x128xf32, #tpu.memory_space<vmem>>, vector<1x128xf32>
    tpu.vector_store %arg8[%429, %c0_74], %428 {strides = array<i32>} : memref<8x128xf32, #tpu.memory_space<vmem>>, vector<1x128xf32>,
    %c7_i32 = arith.constant 7 : i32
    %431 = arith.index_cast %c7_i32 : i32 to index
    %432 = memref.load %arg0[%431] : memref<8xi32, #tpu.memory_space<smem>>
    %433 = arith.index_cast %432 : i32 to index
    %c0_75 = arith.constant 0 : index
    %434 = vector.load %arg1[%433, %c0_75] : memref<128x512xf32, #tpu.memory_space<vmem>>, vector<1x512xf32>
    %cst_76 = arith.constant dense<0.000000e+00> : vector<1x512xf32>
    %435 = tpu.matmul %400, %0, %cst_76 {dimension_numbers = #tpu.dot_dimension_numbers<[1], [0], [0], [1], [0, 0, 1, 1], [], []>} : vector<1x128xf32>, vector<128x512xf32>, vector<1x512xf32> -> vector<1x512xf32>
    %436 = arith.addf %434, %435 : vector<1x512xf32>
    %437 = vector.extract_strided_slice %436 {offsets = [0, 0], sizes = [1, 128], strides = [1, 1]} : vector<1x512xf32> to vector<1x128xf32>
    %438 = arith.negf %437 : vector<1x128xf32>
    %439 = math.exp %438 : vector<1x128xf32>
    %cst_77 = arith.constant 1.000000e+00 : f32
    %440 = vector.broadcast %cst_77 : f32 to vector<1x128xf32>
    %441 = arith.addf %440, %439 : vector<1x128xf32>
    %442 = arith.divf %440, %441 : vector<1x128xf32>
    %443 = vector.extract_strided_slice %436 {offsets = [0, 128], sizes = [1, 128], strides = [1, 1]} : vector<1x512xf32> to vector<1x128xf32>
    %444 = arith.negf %443 : vector<1x128xf32>
    %445 = math.exp %444 : vector<1x128xf32>
    %cst_78 = arith.constant 1.000000e+00 : f32
    %446 = vector.broadcast %cst_78 : f32 to vector<1x128xf32>
    %447 = arith.addf %446, %445 : vector<1x128xf32>
    %448 = arith.divf %446, %447 : vector<1x128xf32>
    %449 = vector.extract_strided_slice %436 {offsets = [0, 256], sizes = [1, 128], strides = [1, 1]} : vector<1x512xf32> to vector<1x128xf32>
    %450 = math.tanh %449 : vector<1x128xf32>
    %451 = vector.extract_strided_slice %436 {offsets = [0, 384], sizes = [1, 128], strides = [1, 1]} : vector<1x512xf32> to vector<1x128xf32>
    %452 = arith.negf %451 : vector<1x128xf32>
    %453 = math.exp %452 : vector<1x128xf32>
    %cst_79 = arith.constant 1.000000e+00 : f32
    %454 = vector.broadcast %cst_79 : f32 to vector<1x128xf32>
    %455 = arith.addf %454, %453 : vector<1x128xf32>
    %456 = arith.divf %454, %455 : vector<1x128xf32>
    %457 = arith.mulf %448, %398 : vector<1x128xf32>
    %458 = arith.mulf %442, %450 : vector<1x128xf32>
    %459 = arith.addf %457, %458 : vector<1x128xf32>
    %460 = math.tanh %459 : vector<1x128xf32>
    %461 = arith.mulf %456, %460 : vector<1x128xf32>
    %462 = tpu.concatenate %461, %428 in 1 : vector<1x128xf32>, vector<1x128xf32> -> vector<1x256xf32>
    %cst_80 = arith.constant dense<0.000000e+00> : vector<1x512xf32>
    %463 = tpu.matmul %462, %1, %cst_80 {dimension_numbers = #tpu.dot_dimension_numbers<[1], [0], [0], [1], [0, 0, 1, 1], [], []>} : vector<1x256xf32>, vector<256x512xf32>, vector<1x512xf32> -> vector<1x512xf32>
    %464 = arith.addf %463, %2 : vector<1x512xf32>
    %465 = vector.extract_strided_slice %464 {offsets = [0, 0], sizes = [1, 128], strides = [1, 1]} : vector<1x512xf32> to vector<1x128xf32>
    %466 = arith.negf %465 : vector<1x128xf32>
    %467 = math.exp %466 : vector<1x128xf32>
    %cst_81 = arith.constant 1.000000e+00 : f32
    %468 = vector.broadcast %cst_81 : f32 to vector<1x128xf32>
    %469 = arith.addf %468, %467 : vector<1x128xf32>
    %470 = arith.divf %468, %469 : vector<1x128xf32>
    %471 = vector.extract_strided_slice %464 {offsets = [0, 128], sizes = [1, 128], strides = [1, 1]} : vector<1x512xf32> to vector<1x128xf32>
    %472 = arith.negf %471 : vector<1x128xf32>
    %473 = math.exp %472 : vector<1x128xf32>
    %cst_82 = arith.constant 1.000000e+00 : f32
    %474 = vector.broadcast %cst_82 : f32 to vector<1x128xf32>
    %475 = arith.addf %474, %473 : vector<1x128xf32>
    %476 = arith.divf %474, %475 : vector<1x128xf32>
    %477 = vector.extract_strided_slice %464 {offsets = [0, 256], sizes = [1, 128], strides = [1, 1]} : vector<1x512xf32> to vector<1x128xf32>
    %478 = math.tanh %477 : vector<1x128xf32>
    %479 = vector.extract_strided_slice %464 {offsets = [0, 384], sizes = [1, 128], strides = [1, 1]} : vector<1x512xf32> to vector<1x128xf32>
    %480 = arith.negf %479 : vector<1x128xf32>
    %481 = math.exp %480 : vector<1x128xf32>
    %cst_83 = arith.constant 1.000000e+00 : f32
    %482 = vector.broadcast %cst_83 : f32 to vector<1x128xf32>
    %483 = arith.addf %482, %481 : vector<1x128xf32>
    %484 = arith.divf %482, %483 : vector<1x128xf32>
    %485 = arith.mulf %476, %426 : vector<1x128xf32>
    %486 = arith.mulf %470, %478 : vector<1x128xf32>
    %487 = arith.addf %485, %486 : vector<1x128xf32>
    %488 = math.tanh %487 : vector<1x128xf32>
    %489 = arith.mulf %484, %488 : vector<1x128xf32>
    %490 = arith.index_cast %c7_i32 : i32 to index
    %c0_84 = arith.constant 0 : index
    %491 = vector.load %arg8[%490, %c0_84] : memref<8x128xf32, #tpu.memory_space<vmem>>, vector<1x128xf32>
    tpu.vector_store %arg8[%490, %c0_84], %489 {strides = array<i32>} : memref<8x128xf32, #tpu.memory_space<vmem>>, vector<1x128xf32>,
    %c8_i32 = arith.constant 8 : i32
    %c0_85 = arith.constant 0 : index
    %c0_86 = arith.constant 0 : index
    %492 = vector.load %arg8[%c0_85, %c0_86] : memref<8x128xf32, #tpu.memory_space<vmem>>, vector<8x128xf32>
    %c0_87 = arith.constant 0 : index
    %c0_88 = arith.constant 0 : index
    %493 = vector.load %arg5[%c0_87, %c0_88] : memref<128x128xf32, #tpu.memory_space<vmem>>, vector<128x128xf32>
    %cst_89 = arith.constant dense<0.000000e+00> : vector<8x128xf32>
    %494 = tpu.matmul %492, %493, %cst_89 {dimension_numbers = #tpu.dot_dimension_numbers<[1], [0], [0], [1], [0, 0, 1, 1], [], []>} : vector<8x128xf32>, vector<128x128xf32>, vector<8x128xf32> -> vector<8x128xf32>
    %c0_90 = arith.constant 0 : index
    %c0_91 = arith.constant 0 : index
    %495 = vector.load %arg6[%c0_90, %c0_91] : memref<1x128xf32, #tpu.memory_space<vmem>>, vector<1x128xf32>
    %496 = vector.broadcast %495 : vector<1x128xf32> to vector<8x128xf32>
    %497 = arith.addf %494, %496 : vector<8x128xf32>
    %cst_92 = arith.constant 0.000000e+00 : f32
    %498 = vector.broadcast %cst_92 : f32 to vector<8x128xf32>
    %499 = arith.maximumf %497, %498 : vector<8x128xf32>
    %cst_93 = arith.constant dense<0xFF800000> : vector<8xf32>
    %500 = vector.multi_reduction <maximumf>, %499, %cst_93 [1] : vector<8x128xf32> to vector<8xf32>
    %501 = vector.shape_cast %500 : vector<8xf32> to vector<8x1xf32>
    %502 = vector.broadcast %501 : vector<8x1xf32> to vector<8x128xf32>
    %503 = arith.subf %499, %502 : vector<8x128xf32>
    %504 = math.exp %503 : vector<8x128xf32>
    %cst_94 = arith.constant dense<0.000000e+00> : vector<8xf32>
    %505 = vector.multi_reduction <add>, %504, %cst_94 [1] : vector<8x128xf32> to vector<8xf32>
    %506 = vector.shape_cast %505 : vector<8xf32> to vector<8x1xf32>
    %507 = math.log %506 : vector<8x1xf32>
    %508 = arith.addf %501, %507 : vector<8x1xf32>
    %509 = vector.broadcast %508 : vector<8x1xf32> to vector<8x128xf32>
    %510 = arith.subf %499, %509 : vector<8x128xf32>
    %c0_95 = arith.constant 0 : index
    %c0_96 = arith.constant 0 : index
    %511 = vector.load %arg7[%c0_95, %c0_96] : memref<8x128xf32, #tpu.memory_space<vmem>>, vector<8x128xf32>
    tpu.vector_store %arg7[%c0_95, %c0_96], %510 {strides = array<i32>} : memref<8x128xf32, #tpu.memory_space<vmem>>, vector<8x128xf32>,
    return
  }
}

</mosaic_0001>

<llo_original>
// kernel: tpu_custom_call.1
$region0: #{tpu_custom_call.1}
  #allocation0 [shape = 'u32[]', space=smem, size = 0x4, offset = 0x4, fixed_abs, tag = 'smem constant byte address 0x4 - core index']
  #allocation1 [shape = 'u32[144,128]{1,0:T(1,128)}', space=vmem, size = 0x12000, scoped, tag = 'internal scratch']
  #allocation2 [shape = 'f32[8,128]{1,0:T(8,128)}', space=vmem, size = 0x1000, scoped, tag = 'scratch operand']
  %s0 = inlined_call_operand.hbm [shape: s32[8], index: 0, kind: input, shape index: {}]
  %s1 = inlined_call_operand.hbm [shape: f32[128,512], index: 1, kind: input, shape index: {}]
  %s2 = inlined_call_operand.hbm [shape: f32[128,512], index: 2, kind: input, shape index: {}]
  %s3 = inlined_call_operand.hbm [shape: f32[256,512], index: 3, kind: input, shape index: {}]
  %s4 = inlined_call_operand.vmem [shape: f32[1,512], index: 4, kind: input, shape index: {}]
  %s5 = inlined_call_operand.hbm [shape: f32[128,128], index: 5, kind: input, shape index: {}]
  %s6 = inlined_call_operand.vmem [shape: f32[1,128], index: 6, kind: input, shape index: {}]
  %s7 = inlined_call_operand.hbm [shape: f32[8,128], index: 7, kind: output, shape index: {}]
  %s8 = sld [smem:[#allocation0]]
  $region58: #{tpu_custom_call.1} parent=0
    _
  %s10 = ssub.s32 1, %s8
  %s11 = scalar_select 0, %s10, %s8
  $region1: #{tpu_custom_call.1} parent=0
    #allocation3 [shape = 'u8[512]{0}', space=smem, size = 0x200, scoped, tag = 'input window, operand 0, single buffered']
    #allocation4 [shape = 's32[1]{0}', space=sflag, size = 0x4, scoped, tag = 'scoped memory for tpu_custom_call.1']
    #allocation5 [shape = 's32[1]{0}', space=sflag, size = 0x4, scoped, tag = 'scoped memory for tpu_custom_call.1']
    #allocation6 [shape = 's32[1]{0}', space=sflag, size = 0x4, scoped, tag = 'scoped memory for tpu_custom_call.1']
    #allocation7 [shape = 'u8[262144]{0}', space=vmem, size = 0x40000, scoped, tag = 'input window, operand 1, single buffered']
    #allocation8 [shape = 'u8[262144]{0}', space=vmem, size = 0x40000, scoped, tag = 'input window, operand 2, single buffered']
    #allocation9 [shape = 's32[1]{0}', space=sflag, size = 0x4, scoped, tag = 'scoped memory for tpu_custom_call.1']
    #allocation10 [shape = 'u8[524288]{0}', space=vmem, size = 0x80000, scoped, tag = 'input window, operand 3, single buffered']
    #allocation11 [shape = 'u8[65536]{0}', space=vmem, size = 0x10000, scoped, tag = 'input window, operand 5, single buffered']
    #allocation12 [shape = 's32[1]{0}', space=sflag, size = 0x4, scoped, tag = 'scoped memory for tpu_custom_call.1']
    #allocation13 [shape = 'u8[4096]{0}', space=vmem, size = 0x1000, scoped, tag = 'output window, operand 0, single buffered']
    %12 = vsyncpa [#allocation6], 0
    %13 = vsyncpa [#allocation4], 0
    %14 = vsyncpa [#allocation9], 0
    %15 = vsyncpa [#allocation12], 0
    %16 = vsyncpa [#allocation5], 0
    // Predicated region
    $region2: #{tpu_custom_call.1} parent=1 // pred_check
      _
    $region3: #{tpu_custom_call.1} parent=1 // pred_check_branch
      %18 = sbr.rel (0) target = $region5
    $region4: #{tpu_custom_call.1} parent=1 // pred_region
      %s20 = ssub.s32 16, 16
      %21 = vsyncadd [#allocation6], %s20
      %24 = dma.hbm_to_smem %s0, 16, [#allocation3], [#allocation6]
    $region5: #{tpu_custom_call.1} parent=1 // pred_fallthru
      _
    // Predicated region
    $region6: #{tpu_custom_call.1} parent=1 // pred_check
      _
    $region7: #{tpu_custom_call.1} parent=1 // pred_check_branch
      %26 = sbr.rel (0) target = $region9
    $region8: #{tpu_custom_call.1} parent=1 // pred_region
      %s28 = ssub.s32 8192, 8192
      %29 = vsyncadd [#allocation4], %s28
      %s30 = sshll.u32 [#allocation7], 4
      %s31 = int_to_ptr.vmem [resolvable:$true] %s30
      %36 = dma.hbm_to_vmem [thread:$0]  %s1, 8192, %s31, [#allocation4], 512, 512, 32
    $region9: #{tpu_custom_call.1} parent=1 // pred_fallthru
      _
    // Predicated region
    $region10: #{tpu_custom_call.1} parent=1 // pred_check
      _
    $region11: #{tpu_custom_call.1} parent=1 // pred_check_branch
      %38 = sbr.rel (0) target = $region13
    $region12: #{tpu_custom_call.1} parent=1 // pred_region
      %s40 = ssub.s32 8192, 8192
      %41 = vsyncadd [#allocation9], %s40
      %s42 = sshll.u32 [#allocation8], 4
      %s43 = int_to_ptr.vmem [resolvable:$true] %s42
      %48 = dma.hbm_to_vmem [thread:$0]  %s2, 8192, %s43, [#allocation9], 512, 512, 32
    $region13: #{tpu_custom_call.1} parent=1 // pred_fallthru
      _
    // Predicated region
    $region14: #{tpu_custom_call.1} parent=1 // pred_check
      _
    $region15: #{tpu_custom_call.1} parent=1 // pred_check_branch
      %50 = sbr.rel (0) target = $region17
    $region16: #{tpu_custom_call.1} parent=1 // pred_region
      %s52 = ssub.s32 16384, 16384
      %53 = vsyncadd [#allocation9], %s52
      %s54 = sshll.u32 [#allocation10], 4
      %s55 = int_to_ptr.vmem [resolvable:$true] %s54
      %60 = dma.hbm_to_vmem [thread:$0]  %s3, 16384, %s55, [#allocation9], 512, 512, 32
    $region17: #{tpu_custom_call.1} parent=1 // pred_fallthru
      _
    // Predicated region
    $region18: #{tpu_custom_call.1} parent=1 // pred_check
      _
    $region19: #{tpu_custom_call.1} parent=1 // pred_check_branch
      %62 = sbr.rel (0) target = $region21
    $region20: #{tpu_custom_call.1} parent=1 // pred_region
      _
    $region21: #{tpu_custom_call.1} parent=1 // pred_fallthru
      _
    // Predicated region
    $region22: #{tpu_custom_call.1} parent=1 // pred_check
      _
    $region23: #{tpu_custom_call.1} parent=1 // pred_check_branch
      %64 = sbr.rel (0) target = $region25
    $region24: #{tpu_custom_call.1} parent=1 // pred_region
      %s66 = ssub.s32 2048, 2048
      %67 = vsyncadd [#allocation12], %s66
      %s68 = sshll.u32 [#allocation11], 4
      %s69 = int_to_ptr.vmem [resolvable:$true] %s68
      %74 = dma.hbm_to_vmem [thread:$0]  %s5, 2048, %s69, [#allocation12], 128, 128, 8
    $region25: #{tpu_custom_call.1} parent=1 // pred_fallthru
      _
    // Predicated region
    $region26: #{tpu_custom_call.1} parent=1 // pred_check
      _
    $region27: #{tpu_custom_call.1} parent=1 // pred_check_branch
      %76 = sbr.rel (0) target = $region29
    $region28: #{tpu_custom_call.1} parent=1 // pred_region
      _
    $region29: #{tpu_custom_call.1} parent=1 // pred_fallthru
      _
    // Predicated region
    $region30: #{tpu_custom_call.1} parent=1 // pred_check
      _
    $region31: #{tpu_custom_call.1} parent=1 // pred_check_branch
      %78 = sbr.rel (0) target = $region33
    $region32: #{tpu_custom_call.1} parent=1 // pred_region
      %79 = dma.done [#allocation6], 16
    $region33: #{tpu_custom_call.1} parent=1 // pred_fallthru
      _
    // Predicated region
    $region34: #{tpu_custom_call.1} parent=1 // pred_check
      _
    $region35: #{tpu_custom_call.1} parent=1 // pred_check_branch
      %81 = sbr.rel (0) target = $region37
    $region36: #{tpu_custom_call.1} parent=1 // pred_region
      %82 = dma.done [#allocation4], 8192
    $region37: #{tpu_custom_call.1} parent=1 // pred_fallthru
      _
    // Predicated region
    $region38: #{tpu_custom_call.1} parent=1 // pred_check
      _
    $region39: #{tpu_custom_call.1} parent=1 // pred_check_branch
      %84 = sbr.rel (0) target = $region41
    $region40: #{tpu_custom_call.1} parent=1 // pred_region
      %85 = dma.done [#allocation9], 8192
    $region41: #{tpu_custom_call.1} parent=1 // pred_fallthru
      _
    // Predicated region
    $region42: #{tpu_custom_call.1} parent=1 // pred_check
      _
    $region43: #{tpu_custom_call.1} parent=1 // pred_check_branch
      %87 = sbr.rel (0) target = $region45
    $region44: #{tpu_custom_call.1} parent=1 // pred_region
      %88 = dma.done [#allocation9], 16384
    $region45: #{tpu_custom_call.1} parent=1 // pred_fallthru
      _
    // Predicated region
    $region46: #{tpu_custom_call.1} parent=1 // pred_check
      _
    $region47: #{tpu_custom_call.1} parent=1 // pred_check_branch
      %90 = sbr.rel (0) target = $region49
    $region48: #{tpu_custom_call.1} parent=1 // pred_region
      %91 = dma.done [#allocation12], 2048
    $region49: #{tpu_custom_call.1} parent=1 // pred_fallthru
      _
    %92 = sfence
    %v93 = vld [vmem:[#allocation8] sm:$0xff]
    %v94 = vld [vmem:[#allocation8 + $0x8] sm:$0xff]
    %v95 = vld [vmem:[#allocation8 + $0x10] sm:$0xff]
    %v96 = vld [vmem:[#allocation8 + $0x18] sm:$0xff]
    %v97 = vld [vmem:[#allocation8 + $0x20] sm:$0xff]
    %v98 = vld [vmem:[#allocation8 + $0x28] sm:$0xff]
    %v99 = vld [vmem:[#allocation8 + $0x30] sm:$0xff]
    %v100 = vld [vmem:[#allocation8 + $0x38] sm:$0xff]
    %v101 = vld [vmem:[#allocation8 + $0x40] sm:$0xff]
    %v102 = vld [vmem:[#allocation8 + $0x48] sm:$0xff]
    %v103 = vld [vmem:[#allocation8 + $0x50] sm:$0xff]
    %v104 = vld [vmem:[#allocation8 + $0x58] sm:$0xff]
    %v105 = vld [vmem:[#allocation8 + $0x60] sm:$0xff]
    %v106 = vld [vmem:[#allocation8 + $0x68] sm:$0xff]
    %v107 = vld [vmem:[#allocation8 + $0x70] sm:$0xff]
    %v108 = vld [vmem:[#allocation8 + $0x78] sm:$0xff]
    %v109 = vld [vmem:[#allocation8 + $0x80] sm:$0xff]
    %v110 = vld [vmem:[#allocation8 + $0x88] sm:$0xff]
    %v111 = vld [vmem:[#allocation8 + $0x90] sm:$0xff]
    %v112 = vld [vmem:[#allocation8 + $0x98] sm:$0xff]
    %v113 = vld [vmem:[#allocation8 + $0xa0] sm:$0xff]
    %v114 = vld [vmem:[#allocation8 + $0xa8] sm:$0xff]
    %v115 = vld [vmem:[#allocation8 + $0xb0] sm:$0xff]
    %v116 = vld [vmem:[#allocation8 + $0xb8] sm:$0xff]
    %v117 = vld [vmem:[#allocation8 + $0xc0] sm:$0xff]
    %v118 = vld [vmem:[#allocation8 + $0xc8] sm:$0xff]
    %v119 = vld [vmem:[#allocation8 + $0xd0] sm:$0xff]
    %v120 = vld [vmem:[#allocation8 + $0xd8] sm:$0xff]
    %v121 = vld [vmem:[#allocation8 + $0xe0] sm:$0xff]
    %v122 = vld [vmem:[#allocation8 + $0xe8] sm:$0xff]
    %v123 = vld [vmem:[#allocation8 + $0xf0] sm:$0xff]
    %v124 = vld [vmem:[#allocation8 + $0xf8] sm:$0xff]
    %v125 = vld [vmem:[#allocation8 + $0x100] sm:$0xff]
    %v126 = vld [vmem:[#allocation8 + $0x108] sm:$0xff]
    %v127 = vld [vmem:[#allocation8 + $0x110] sm:$0xff]
    %v128 = vld [vmem:[#allocation8 + $0x118] sm:$0xff]
    %v129 = vld [vmem:[#allocation8 + $0x120] sm:$0xff]
    %v130 = vld [vmem:[#allocation8 + $0x128] sm:$0xff]
    %v131 = vld [vmem:[#allocation8 + $0x130] sm:$0xff]
    %v132 = vld [vmem:[#allocation8 + $0x138] sm:$0xff]
    %v133 = vld [vmem:[#allocation8 + $0x140] sm:$0xff]
    %v134 = vld [vmem:[#allocation8 + $0x148] sm:$0xff]
    %v135 = vld [vmem:[#allocation8 + $0x150] sm:$0xff]
    %v136 = vld [vmem:[#allocation8 + $0x158] sm:$0xff]
    %v137 = vld [vmem:[#allocation8 + $0x160] sm:$0xff]
    %v138 = vld [vmem:[#allocation8 + $0x168] sm:$0xff]
    %v139 = vld [vmem:[#allocation8 + $0x170] sm:$0xff]
    %v140 = vld [vmem:[#allocation8 + $0x178] sm:$0xff]
    %v141 = vld [vmem:[#allocation8 + $0x180] sm:$0xff]
    %v142 = vld [vmem:[#allocation8 + $0x188] sm:$0xff]
    %v143 = vld [vmem:[#allocation8 + $0x190] sm:$0xff]
    %v144 = vld [vmem:[#allocation8 + $0x198] sm:$0xff]
    %v145 = vld [vmem:[#allocation8 + $0x1a0] sm:$0xff]
    %v146 = vld [vmem:[#allocation8 + $0x1a8] sm:$0xff]
    %v147 = vld [vmem:[#allocation8 + $0x1b0] sm:$0xff]
    %v148 = vld [vmem:[#allocation8 + $0x1b8] sm:$0xff]
    %v149 = vld [vmem:[#allocation8 + $0x1c0] sm:$0xff]
    %v150 = vld [vmem:[#allocation8 + $0x1c8] sm:$0xff]
    %v151 = vld [vmem:[#allocation8 + $0x1d0] sm:$0xff]
    %v152 = vld [vmem:[#allocation8 + $0x1d8] sm:$0xff]
    %v153 = vld [vmem:[#allocation8 + $0x1e0] sm:$0xff]
    %v154 = vld [vmem:[#allocation8 + $0x1e8] sm:$0xff]
    %v155 = vld [vmem:[#allocation8 + $0x1f0] sm:$0xff]
    %v156 = vld [vmem:[#allocation8 + $0x1f8] sm:$0xff]
    %v157 = vld [vmem:[#allocation10] sm:$0xff]
    %v158 = vld [vmem:[#allocation10 + $0x8] sm:$0xff]
    %v159 = vld [vmem:[#allocation10 + $0x10] sm:$0xff]
    %v160 = vld [vmem:[#allocation10 + $0x18] sm:$0xff]
    %v161 = vld [vmem:[#allocation10 + $0x20] sm:$0xff]
    %v162 = vld [vmem:[#allocation10 + $0x28] sm:$0xff]
    %v163 = vld [vmem:[#allocation10 + $0x30] sm:$0xff]
    %v164 = vld [vmem:[#allocation10 + $0x38] sm:$0xff]
    %v165 = vld [vmem:[#allocation10 + $0x40] sm:$0xff]
    %v166 = vld [vmem:[#allocation10 + $0x48] sm:$0xff]
    %v167 = vld [vmem:[#allocation10 + $0x50] sm:$0xff]
    %v168 = vld [vmem:[#allocation10 + $0x58] sm:$0xff]
    %v169 = vld [vmem:[#allocation10 + $0x60] sm:$0xff]
    %v170 = vld [vmem:[#allocation10 + $0x68] sm:$0xff]
    %v171 = vld [vmem:[#allocation10 + $0x70] sm:$0xff]
    %v172 = vld [vmem:[#allocation10 + $0x78] sm:$0xff]
    %v173 = vld [vmem:[#allocation10 + $0x80] sm:$0xff]
    %v174 = vld [vmem:[#allocation10 + $0x88] sm:$0xff]
    %v175 = vld [vmem:[#allocation10 + $0x90] sm:$0xff]
    %v176 = vld [vmem:[#allocation10 + $0x98] sm:$0xff]
    %v177 = vld [vmem:[#allocation10 + $0xa0] sm:$0xff]
    %v178 = vld [vmem:[#allocation10 + $0xa8] sm:$0xff]
    %v179 = vld [vmem:[#allocation10 + $0xb0] sm:$0xff]
    %v180 = vld [vmem:[#allocation10 + $0xb8] sm:$0xff]
    %v181 = vld [vmem:[#allocation10 + $0xc0] sm:$0xff]
    %v182 = vld [vmem:[#allocation10 + $0xc8] sm:$0xff]
    %v183 = vld [vmem:[#allocation10 + $0xd0] sm:$0xff]
    %v184 = vld [vmem:[#allocation10 + $0xd8] sm:$0xff]
    %v185 = vld [vmem:[#allocation10 + $0xe0] sm:$0xff]
    %v186 = vld [vmem:[#allocation10 + $0xe8] sm:$0xff]
    %v187 = vld [vmem:[#allocation10 + $0xf0] sm:$0xff]
    %v188 = vld [vmem:[#allocation10 + $0xf8] sm:$0xff]
    %v189 = vld [vmem:[#allocation10 + $0x100] sm:$0xff]
    %v190 = vld [vmem:[#allocation10 + $0x108] sm:$0xff]
    %v191 = vld [vmem:[#allocation10 + $0x110] sm:$0xff]
    %v192 = vld [vmem:[#allocation10 + $0x118] sm:$0xff]
    %v193 = vld [vmem:[#allocation10 + $0x120] sm:$0xff]
    %v194 = vld [vmem:[#allocation10 + $0x128] sm:$0xff]
    %v195 = vld [vmem:[#allocation10 + $0x130] sm:$0xff]
    %v196 = vld [vmem:[#allocation10 + $0x138] sm:$0xff]
    %v197 = vld [vmem:[#allocation10 + $0x140] sm:$0xff]
    %v198 = vld [vmem:[#allocation10 + $0x148] sm:$0xff]
    %v199 = vld [vmem:[#allocation10 + $0x150] sm:$0xff]
    %v200 = vld [vmem:[#allocation10 + $0x158] sm:$0xff]
    %v201 = vld [vmem:[#allocation10 + $0x160] sm:$0xff]
    %v202 = vld [vmem:[#allocation10 + $0x168] sm:$0xff]
    %v203 = vld [vmem:[#allocation10 + $0x170] sm:$0xff]
    %v204 = vld [vmem:[#allocation10 + $0x178] sm:$0xff]
    %v205 = vld [vmem:[#allocation10 + $0x180] sm:$0xff]
    %v206 = vld [vmem:[#allocation10 + $0x188] sm:$0xff]
    %v207 = vld [vmem:[#allocation10 + $0x190] sm:$0xff]
    %v208 = vld [vmem:[#allocation10 + $0x198] sm:$0xff]
    %v209 = vld [vmem:[#allocation10 + $0x1a0] sm:$0xff]
    %v210 = vld [vmem:[#allocation10 + $0x1a8] sm:$0xff]
    %v211 = vld [vmem:[#allocation10 + $0x1b0] sm:$0xff]
    %v212 = vld [vmem:[#allocation10 + $0x1b8] sm:$0xff]
    %v213 = vld [vmem:[#allocation10 + $0x1c0] sm:$0xff]
    %v214 = vld [vmem:[#allocation10 + $0x1c8] sm:$0xff]
    %v215 = vld [vmem:[#allocation10 + $0x1d0] sm:$0xff]
    %v216 = vld [vmem:[#allocation10 + $0x1d8] sm:$0xff]
    %v217 = vld [vmem:[#allocation10 + $0x1e0] sm:$0xff]
    %v218 = vld [vmem:[#allocation10 + $0x1e8] sm:$0xff]
    %v219 = vld [vmem:[#allocation10 + $0x1f0] sm:$0xff]
    %v220 = vld [vmem:[#allocation10 + $0x1f8] sm:$0xff]
    %v221 = vld [vmem:[#allocation10 + $0x200] sm:$0xff]
    %v222 = vld [vmem:[#allocation10 + $0x208] sm:$0xff]
    %v223 = vld [vmem:[#allocation10 + $0x210] sm:$0xff]
    %v224 = vld [vmem:[#allocation10 + $0x218] sm:$0xff]
    %v225 = vld [vmem:[#allocation10 + $0x220] sm:$0xff]
    %v226 = vld [vmem:[#allocation10 + $0x228] sm:$0xff]
    %v227 = vld [vmem:[#allocation10 + $0x230] sm:$0xff]
    %v228 = vld [vmem:[#allocation10 + $0x238] sm:$0xff]
    %v229 = vld [vmem:[#allocation10 + $0x240] sm:$0xff]
    %v230 = vld [vmem:[#allocation10 + $0x248] sm:$0xff]
    %v231 = vld [vmem:[#allocation10 + $0x250] sm:$0xff]
    %v232 = vld [vmem:[#allocation10 + $0x258] sm:$0xff]
    %v233 = vld [vmem:[#allocation10 + $0x260] sm:$0xff]
    %v234 = vld [vmem:[#allocation10 + $0x268] sm:$0xff]
    %v235 = vld [vmem:[#allocation10 + $0x270] sm:$0xff]
    %v236 = vld [vmem:[#allocation10 + $0x278] sm:$0xff]
    %v237 = vld [vmem:[#allocation10 + $0x280] sm:$0xff]
    %v238 = vld [vmem:[#allocation10 + $0x288] sm:$0xff]
    %v239 = vld [vmem:[#allocation10 + $0x290] sm:$0xff]
    %v240 = vld [vmem:[#allocation10 + $0x298] sm:$0xff]
    %v241 = vld [vmem:[#allocation10 + $0x2a0] sm:$0xff]
    %v242 = vld [vmem:[#allocation10 + $0x2a8] sm:$0xff]
    %v243 = vld [vmem:[#allocation10 + $0x2b0] sm:$0xff]
    %v244 = vld [vmem:[#allocation10 + $0x2b8] sm:$0xff]
    %v245 = vld [vmem:[#allocation10 + $0x2c0] sm:$0xff]
    %v246 = vld [vmem:[#allocation10 + $0x2c8] sm:$0xff]
    %v247 = vld [vmem:[#allocation10 + $0x2d0] sm:$0xff]
    %v248 = vld [vmem:[#allocation10 + $0x2d8] sm:$0xff]
    %v249 = vld [vmem:[#allocation10 + $0x2e0] sm:$0xff]
    %v250 = vld [vmem:[#allocation10 + $0x2e8] sm:$0xff]
    %v251 = vld [vmem:[#allocation10 + $0x2f0] sm:$0xff]
    %v252 = vld [vmem:[#allocation10 + $0x2f8] sm:$0xff]
    %v253 = vld [vmem:[#allocation10 + $0x300] sm:$0xff]
    %v254 = vld [vmem:[#allocation10 + $0x308] sm:$0xff]
    %v255 = vld [vmem:[#allocation10 + $0x310] sm:$0xff]
    %v256 = vld [vmem:[#allocation10 + $0x318] sm:$0xff]
    %v257 = vld [vmem:[#allocation10 + $0x320] sm:$0xff]
    %v258 = vld [vmem:[#allocation10 + $0x328] sm:$0xff]
    %v259 = vld [vmem:[#allocation10 + $0x330] sm:$0xff]
    %v260 = vld [vmem:[#allocation10 + $0x338] sm:$0xff]
    %v261 = vld [vmem:[#allocation10 + $0x340] sm:$0xff]
    %v262 = vld [vmem:[#allocation10 + $0x348] sm:$0xff]
    %v263 = vld [vmem:[#allocation10 + $0x350] sm:$0xff]
    %v264 = vld [vmem:[#allocation10 + $0x358] sm:$0xff]
    %v265 = vld [vmem:[#allocation10 + $0x360] sm:$0xff]
    %v266 = vld [vmem:[#allocation10 + $0x368] sm:$0xff]
    %v267 = vld [vmem:[#allocation10 + $0x370] sm:$0xff]
    %v268 = vld [vmem:[#allocation10 + $0x378] sm:$0xff]
    %v269 = vld [vmem:[#allocation10 + $0x380] sm:$0xff]
    %v270 = vld [vmem:[#allocation10 + $0x388] sm:$0xff]
    %v271 = vld [vmem:[#allocation10 + $0x390] sm:$0xff]
    %v272 = vld [vmem:[#allocation10 + $0x398] sm:$0xff]
    %v273 = vld [vmem:[#allocation10 + $0x3a0] sm:$0xff]
    %v274 = vld [vmem:[#allocation10 + $0x3a8] sm:$0xff]
    %v275 = vld [vmem:[#allocation10 + $0x3b0] sm:$0xff]
    %v276 = vld [vmem:[#allocation10 + $0x3b8] sm:$0xff]
    %v277 = vld [vmem:[#allocation10 + $0x3c0] sm:$0xff]
    %v278 = vld [vmem:[#allocation10 + $0x3c8] sm:$0xff]
    %v279 = vld [vmem:[#allocation10 + $0x3d0] sm:$0xff]
    %v280 = vld [vmem:[#allocation10 + $0x3d8] sm:$0xff]
    %v281 = vld [vmem:[#allocation10 + $0x3e0] sm:$0xff]
    %v282 = vld [vmem:[#allocation10 + $0x3e8] sm:$0xff]
    %v283 = vld [vmem:[#allocation10 + $0x3f0] sm:$0xff]
    %v284 = vld [vmem:[#allocation10 + $0x3f8] sm:$0xff]
    %v285 = vld [vmem:[%s4] sm:$0xf]
    %s286 = sld [smem:[#allocation3]]
    %s287 = sshra.s32 %s286, 3
    %s288 = sand.u32 %s286, 7
    %s289 = sshra.s32 %s286, 3
    %s290 = sand.u32 %s286, 7
    %s291 = smul.u32 %s287, 4
    %s292 = smul.u32 %s291, 8
    %s293 = sadd.s32 %s292, %s290
    %s294 = scalar_lea.vmem [#allocation7], %s293
    %v295 = vld [vmem:[%s294] ss:$8 sm:$0xf]
    %296 = vmatprep.subr.mxu0 %v94
    %297 = vmatpush1.msra.mxu0 %v93
    %298 = vmatprep.subr.mxu0 %v98
    %299 = vmatpush1.msra.mxu0 %v97
    %300 = vmatprep.subr.mxu0 %v102
    %301 = vmatpush1.msra.mxu0 %v101
    %302 = vmatprep.subr.mxu0 %v106
    %303 = vmatpush1.msra.mxu0 %v105
    %304 = vmatprep.subr.mxu0 %v110
    %305 = vmatpush1.msra.mxu0 %v109
    %306 = vmatprep.subr.mxu0 %v114
    %307 = vmatpush1.msra.mxu0 %v113
    %308 = vmatprep.subr.mxu0 %v118
    %309 = vmatpush1.msra.mxu0 %v117
    %310 = vmatprep.subr.mxu0 %v122
    %311 = vmatpush1.msra.mxu0 %v121
    %312 = vmatprep.subr.mxu0 %v126
    %313 = vmatpush1.msra.mxu0 %v125
    %314 = vmatprep.subr.mxu0 %v130
    %315 = vmatpush1.msra.mxu0 %v129
    %316 = vmatprep.subr.mxu0 %v134
    %317 = vmatpush1.msra.mxu0 %v133
    %318 = vmatprep.subr.mxu0 %v138
    %319 = vmatpush1.msra.mxu0 %v137
    %320 = vmatprep.subr.mxu0 %v142
    %321 = vmatpush1.msra.mxu0 %v141
    %322 = vmatprep.subr.mxu0 %v146
    %323 = vmatpush1.msra.mxu0 %v145
    %324 = vmatprep.subr.mxu0 %v150
    %325 = vmatpush1.msra.mxu0 %v149
    %326 = vmatprep.subr.mxu0 %v154
    %327 = vmatpush1.msra.mxu0 %v153
    %328 = vmatprep.subr.mxu0 0.0
    %329 = vmatpush1.msra.mxu0 0.0
    %330 = vmatprep.subr.mxu0 0.0
    %331 = vmatpush1.msra.mxu0 0.0
    %332 = vmatprep.subr.mxu0 0.0
    %333 = vmatpush1.msra.mxu0 0.0
    %334 = vmatprep.subr.mxu0 0.0
    %335 = vmatpush1.msra.mxu0 0.0
    %336 = vmatprep.subr.mxu0 0.0
    %337 = vmatpush1.msra.mxu0 0.0
    %338 = vmatprep.subr.mxu0 0.0
    %339 = vmatpush1.msra.mxu0 0.0
    %340 = vmatprep.subr.mxu0 0.0
    %341 = vmatpush1.msra.mxu0 0.0
    %342 = vmatprep.subr.mxu0 0.0
    %343 = vmatpush1.msra.mxu0 0.0
    %344 = vmatprep.subr.mxu0 0.0
    %345 = vmatpush1.msra.mxu0 0.0
    %346 = vmatprep.subr.mxu0 0.0
    %347 = vmatpush1.msra.mxu0 0.0
    %348 = vmatprep.subr.mxu0 0.0
    %349 = vmatpush1.msra.mxu0 0.0
    %350 = vmatprep.subr.mxu0 0.0
    %351 = vmatpush1.msra.mxu0 0.0
    %352 = vmatprep.subr.mxu0 0.0
    %353 = vmatpush1.msra.mxu0 0.0
    %354 = vmatprep.subr.mxu0 0.0
    %355 = vmatpush1.msra.mxu0 0.0
    %356 = vmatprep.subr.mxu0 0.0
    %357 = vmatpush1.msra.mxu0 0.0
    %358 = vmatprep.subr.mxu0 0.0
    %359 = vmatpush1.msra.mxu0 0.0
    %360 = vmatprep.mubr.f32.mxu0 0.0
    %361 = vmatmul.mubr.f32.gmra.mrb[0].mxu0 0.0
    %v362 = vpop.f32.mrb[0].mxu0
    %v363 = vadd.f32 0.0, %v362
    %v364 = vpop.f32.mrb[0].mxu0
    %v365 = vadd.f32 0.0, %v364
    %366 = vdwg.mxu0
    %367 = vmatprep.subr.mxu0 %v96
    %368 = vmatpush1.msra.mxu0 %v95
    %369 = vmatprep.subr.mxu0 %v100
    %370 = vmatpush1.msra.mxu0 %v99
    %371 = vmatprep.subr.mxu0 %v104
    %372 = vmatpush1.msra.mxu0 %v103
    %373 = vmatprep.subr.mxu0 %v108
    %374 = vmatpush1.msra.mxu0 %v107
    %375 = vmatprep.subr.mxu0 %v112
    %376 = vmatpush1.msra.mxu0 %v111
    %377 = vmatprep.subr.mxu0 %v116
    %378 = vmatpush1.msra.mxu0 %v115
    %379 = vmatprep.subr.mxu0 %v120
    %380 = vmatpush1.msra.mxu0 %v119
    %381 = vmatprep.subr.mxu0 %v124
    %382 = vmatpush1.msra.mxu0 %v123
    %383 = vmatprep.subr.mxu0 %v128
    %384 = vmatpush1.msra.mxu0 %v127
    %385 = vmatprep.subr.mxu0 %v132
    %386 = vmatpush1.msra.mxu0 %v131
    %387 = vmatprep.subr.mxu0 %v136
    %388 = vmatpush1.msra.mxu0 %v135
    %389 = vmatprep.subr.mxu0 %v140
    %390 = vmatpush1.msra.mxu0 %v139
    %391 = vmatprep.subr.mxu0 %v144
    %392 = vmatpush1.msra.mxu0 %v143
    %393 = vmatprep.subr.mxu0 %v148
    %394 = vmatpush1.msra.mxu0 %v147
    %395 = vmatprep.subr.mxu0 %v152
    %396 = vmatpush1.msra.mxu0 %v151
    %397 = vmatprep.subr.mxu0 %v156
    %398 = vmatpush1.msra.mxu0 %v155
    %399 = vmatprep.subr.mxu0 0.0
    %400 = vmatpush1.msra.mxu0 0.0
    %401 = vmatprep.subr.mxu0 0.0
    %402 = vmatpush1.msra.mxu0 0.0
    %403 = vmatprep.subr.mxu0 0.0
    %404 = vmatpush1.msra.mxu0 0.0
    %405 = vmatprep.subr.mxu0 0.0
    %406 = vmatpush1.msra.mxu0 0.0
    %407 = vmatprep.subr.mxu0 0.0
    %408 = vmatpush1.msra.mxu0 0.0
    %409 = vmatprep.subr.mxu0 0.0
    %410 = vmatpush1.msra.mxu0 0.0
    %411 = vmatprep.subr.mxu0 0.0
    %412 = vmatpush1.msra.mxu0 0.0
    %413 = vmatprep.subr.mxu0 0.0
    %414 = vmatpush1.msra.mxu0 0.0
    %415 = vmatprep.subr.mxu0 0.0
    %416 = vmatpush1.msra.mxu0 0.0
    %417 = vmatprep.subr.mxu0 0.0
    %418 = vmatpush1.msra.mxu0 0.0
    %419 = vmatprep.subr.mxu0 0.0
    %420 = vmatpush1.msra.mxu0 0.0
    %421 = vmatprep.subr.mxu0 0.0
    %422 = vmatpush1.msra.mxu0 0.0
    %423 = vmatprep.subr.mxu0 0.0
    %424 = vmatpush1.msra.mxu0 0.0
    %425 = vmatprep.subr.mxu0 0.0
    %426 = vmatpush1.msra.mxu0 0.0
    %427 = vmatprep.subr.mxu0 0.0
    %428 = vmatpush1.msra.mxu0 0.0
    %429 = vmatprep.subr.mxu0 0.0
    %430 = vmatpush1.msra.mxu0 0.0
    %431 = vmatprep.mubr.f32.mxu0 0.0
    %432 = vmatmul.mubr.f32.gmra.mrb[0].mxu0 0.0
    %v433 = vpop.f32.mrb[0].mxu0
    %v434 = vadd.f32 0.0, %v433
    %v435 = vpop.f32.mrb[0].mxu0
    %v436 = vadd.f32 0.0, %v435
    %437 = vdwg.mxu0
    %v442 = vcombine.low %v363, %v365
    %v443 = vcombine.low %v434, %v436
    %v445 = vunpack.c.l.s4 1966171168
    %v446 = vunpack.c.0.s8 %v445
    %v447 = vlaneseq
    %v448 = vshrl.u32 %v447, 7
    %v449 = vsub.s32 %v446, %v448
    %v450 = vrot.slane %v442, %v449
    %v452 = vunpack.c.l.s4 1966171168
    %v453 = vunpack.c.0.s8 %v452
    %v454 = vlaneseq
    %v455 = vshrl.u32 %v454, 7
    %v456 = vsub.s32 %v453, %v455
    %v457 = vrot.slane %v443, %v456
    %v458 = vcombine.low %v450, %v457
    %v460 = vunpack.c.l.s4 1966171168
    %v461 = vunpack.c.0.s8 %v460
    %v462 = vlaneseq
    %v463 = vshrl.u32 %v462, 7
    %v464 = vsub.s32 %v461, %v463
    %v465 = vrot.slane %v458, %v464
    %v467 = vadd.f32 %v295, %v465
    %v468 = vxor.u32 %v467, 2147483648
    %v469 = vmul.f32 %v468, 1.442695
    %v470 = vpow.pop %v469
    %v471 = vadd.f32 %v470, 1.0
    %v472 = vrcp.pop %v471
    %v473 = vmul.f32 1.0, %v472
    %v475 = vrot.slane %v467, 1
    %v477 = vxor.u32 %v475, 2147483648
    %v478 = vmul.f32 %v477, 1.442695
    %v479 = vpow.pop %v478
    %v480 = vadd.f32 %v479, 1.0
    %v481 = vrcp.pop %v480
    %v482 = vmul.f32 1.0, %v481
    %v483 = vrot.slane %v467, 2
    %v485 = vtanh.pop %v483
    %v486 = vrot.slane %v467, 3
    %v488 = vxor.u32 %v486, 2147483648
    %v489 = vmul.f32 %v488, 1.442695
    %v490 = vpow.pop %v489
    %v491 = vadd.f32 %v490, 1.0
    %v492 = vrcp.pop %v491
    %v493 = vmul.f32 1.0, %v492
    %v494 = vmul.f32 %v482, 0.0
    %v495 = vmul.f32 %v473, %v485
    %v496 = vadd.f32 %v494, %v495
    %v497 = vtanh.pop %v496
    %v498 = vmul.f32 %v493, %v497
    %v500 = vlaneseq
    %v501 = vshrl.u32 %v500, 7
    %v502 = vsub.s32 0, %v501
    %v503 = vrot.slane %v285, %v502
    %v504 = vlaneseq
    %v505 = vshrl.u32 %v504, 7
    %v506 = vsub.s32 1, %v505
    %v507 = vrot.slane %v285, %v506
    %v508 = vlaneseq
    %v509 = vshrl.u32 %v508, 7
    %v510 = vsub.s32 2, %v509
    %v511 = vrot.slane %v285, %v510
    %v512 = vlaneseq
    %v513 = vshrl.u32 %v512, 7
    %v514 = vsub.s32 3, %v513
    %v515 = vrot.slane %v285, %v514
    %520 = vmatprep.subr.mxu0 %v158
    %521 = vmatpush1.msra.mxu0 %v157
    %522 = vmatprep.subr.mxu0 %v162
    %523 = vmatpush1.msra.mxu0 %v161
    %524 = vmatprep.subr.mxu0 %v166
    %525 = vmatpush1.msra.mxu0 %v165
    %526 = vmatprep.subr.mxu0 %v170
    %527 = vmatpush1.msra.mxu0 %v169
    %528 = vmatprep.subr.mxu0 %v174
    %529 = vmatpush1.msra.mxu0 %v173
    %530 = vmatprep.subr.mxu0 %v178
    %531 = vmatpush1.msra.mxu0 %v177
    %532 = vmatprep.subr.mxu0 %v182
    %533 = vmatpush1.msra.mxu0 %v181
    %534 = vmatprep.subr.mxu0 %v186
    %535 = vmatpush1.msra.mxu0 %v185
    %536 = vmatprep.subr.mxu0 %v190
    %537 = vmatpush1.msra.mxu0 %v189
    %538 = vmatprep.subr.mxu0 %v194
    %539 = vmatpush1.msra.mxu0 %v193
    %540 = vmatprep.subr.mxu0 %v198
    %541 = vmatpush1.msra.mxu0 %v197
    %542 = vmatprep.subr.mxu0 %v202
    %543 = vmatpush1.msra.mxu0 %v201
    %544 = vmatprep.subr.mxu0 %v206
    %545 = vmatpush1.msra.mxu0 %v205
    %546 = vmatprep.subr.mxu0 %v210
    %547 = vmatpush1.msra.mxu0 %v209
    %548 = vmatprep.subr.mxu0 %v214
    %549 = vmatpush1.msra.mxu0 %v213
    %550 = vmatprep.subr.mxu0 %v218
    %551 = vmatpush1.msra.mxu0 %v217
    %552 = vmatprep.subr.mxu0 %v222
    %553 = vmatpush1.msra.mxu0 %v221
    %554 = vmatprep.subr.mxu0 %v226
    %555 = vmatpush1.msra.mxu0 %v225
    %556 = vmatprep.subr.mxu0 %v230
    %557 = vmatpush1.msra.mxu0 %v229
    %558 = vmatprep.subr.mxu0 %v234
    %559 = vmatpush1.msra.mxu0 %v233
    %560 = vmatprep.subr.mxu0 %v238
    %561 = vmatpush1.msra.mxu0 %v237
    %562 = vmatprep.subr.mxu0 %v242
    %563 = vmatpush1.msra.mxu0 %v241
    %564 = vmatprep.subr.mxu0 %v246
    %565 = vmatpush1.msra.mxu0 %v245
    %566 = vmatprep.subr.mxu0 %v250
    %567 = vmatpush1.msra.mxu0 %v249
    %568 = vmatprep.subr.mxu0 %v254
    %569 = vmatpush1.msra.mxu0 %v253
    %570 = vmatprep.subr.mxu0 %v258
    %571 = vmatpush1.msra.mxu0 %v257
    %572 = vmatprep.subr.mxu0 %v262
    %573 = vmatpush1.msra.mxu0 %v261
    %574 = vmatprep.subr.mxu0 %v266
    %575 = vmatpush1.msra.mxu0 %v265
    %576 = vmatprep.subr.mxu0 %v270
    %577 = vmatpush1.msra.mxu0 %v269
    %578 = vmatprep.subr.mxu0 %v274
    %579 = vmatpush1.msra.mxu0 %v273
    %580 = vmatprep.subr.mxu0 %v278
    %581 = vmatpush1.msra.mxu0 %v277
    %582 = vmatprep.subr.mxu0 %v282
    %583 = vmatpush1.msra.mxu0 %v281
    %584 = vmatprep.mubr.f32.mxu0 0.0
    %585 = vmatmul.mubr.f32.gmra.mrb[0].mxu0 %v498
    %v586 = vpop.f32.mrb[0].mxu0
    %v587 = vadd.f32 %v503, %v586
    %v588 = vpop.f32.mrb[0].mxu0
    %v589 = vadd.f32 %v507, %v588
    %590 = vdwg.mxu0
    %591 = vmatprep.subr.mxu0 %v160
    %592 = vmatpush1.msra.mxu0 %v159
    %593 = vmatprep.subr.mxu0 %v164
    %594 = vmatpush1.msra.mxu0 %v163
    %595 = vmatprep.subr.mxu0 %v168
    %596 = vmatpush1.msra.mxu0 %v167
    %597 = vmatprep.subr.mxu0 %v172
    %598 = vmatpush1.msra.mxu0 %v171
    %599 = vmatprep.subr.mxu0 %v176
    %600 = vmatpush1.msra.mxu0 %v175
    %601 = vmatprep.subr.mxu0 %v180
    %602 = vmatpush1.msra.mxu0 %v179
    %603 = vmatprep.subr.mxu0 %v184
    %604 = vmatpush1.msra.mxu0 %v183
    %605 = vmatprep.subr.mxu0 %v188
    %606 = vmatpush1.msra.mxu0 %v187
    %607 = vmatprep.subr.mxu0 %v192
    %608 = vmatpush1.msra.mxu0 %v191
    %609 = vmatprep.subr.mxu0 %v196
    %610 = vmatpush1.msra.mxu0 %v195
    %611 = vmatprep.subr.mxu0 %v200
    %612 = vmatpush1.msra.mxu0 %v199
    %613 = vmatprep.subr.mxu0 %v204
    %614 = vmatpush1.msra.mxu0 %v203
    %615 = vmatprep.subr.mxu0 %v208
    %616 = vmatpush1.msra.mxu0 %v207
    %617 = vmatprep.subr.mxu0 %v212
    %618 = vmatpush1.msra.mxu0 %v211
    %619 = vmatprep.subr.mxu0 %v216
    %620 = vmatpush1.msra.mxu0 %v215
    %621 = vmatprep.subr.mxu0 %v220
    %622 = vmatpush1.msra.mxu0 %v219
    %623 = vmatprep.subr.mxu0 %v224
    %624 = vmatpush1.msra.mxu0 %v223
    %625 = vmatprep.subr.mxu0 %v228
    %626 = vmatpush1.msra.mxu0 %v227
    %627 = vmatprep.subr.mxu0 %v232
    %628 = vmatpush1.msra.mxu0 %v231
    %629 = vmatprep.subr.mxu0 %v236
    %630 = vmatpush1.msra.mxu0 %v235
    %631 = vmatprep.subr.mxu0 %v240
    %632 = vmatpush1.msra.mxu0 %v239
    %633 = vmatprep.subr.mxu0 %v244
    %634 = vmatpush1.msra.mxu0 %v243
    %635 = vmatprep.subr.mxu0 %v248
    %636 = vmatpush1.msra.mxu0 %v247
    %637 = vmatprep.subr.mxu0 %v252
    %638 = vmatpush1.msra.mxu0 %v251
    %639 = vmatprep.subr.mxu0 %v256
    %640 = vmatpush1.msra.mxu0 %v255
    %641 = vmatprep.subr.mxu0 %v260
    %642 = vmatpush1.msra.mxu0 %v259
    %643 = vmatprep.subr.mxu0 %v264
    %644 = vmatpush1.msra.mxu0 %v263
    %645 = vmatprep.subr.mxu0 %v268
    %646 = vmatpush1.msra.mxu0 %v267
    %647 = vmatprep.subr.mxu0 %v272
    %648 = vmatpush1.msra.mxu0 %v271
    %649 = vmatprep.subr.mxu0 %v276
    %650 = vmatpush1.msra.mxu0 %v275
    %651 = vmatprep.subr.mxu0 %v280
    %652 = vmatpush1.msra.mxu0 %v279
    %653 = vmatprep.subr.mxu0 %v284
    %654 = vmatpush1.msra.mxu0 %v283
    %655 = vmatprep.mubr.f32.mxu0 0.0
    %656 = vmatmul.mubr.f32.gmra.mrb[0].mxu0 %v498
    %v657 = vpop.f32.mrb[0].mxu0
    %v658 = vadd.f32 %v511, %v657
    %v659 = vpop.f32.mrb[0].mxu0
    %v660 = vadd.f32 %v515, %v659
    %661 = vdwg.mxu0
    %v662 = vxor.u32 %v587, 2147483648
    %v663 = vmul.f32 %v662, 1.442695
    %v664 = vpow.pop %v663
    %v665 = vadd.f32 %v664, 1.0
    %v666 = vrcp.pop %v665
    %v667 = vmul.f32 1.0, %v666
    %v668 = vxor.u32 %v589, 2147483648
    %v669 = vmul.f32 %v668, 1.442695
    %v670 = vpow.pop %v669
    %v671 = vadd.f32 %v670, 1.0
    %v672 = vrcp.pop %v671
    %v673 = vmul.f32 1.0, %v672
    %v674 = vtanh.pop %v658
    %v675 = vxor.u32 %v660, 2147483648
    %v676 = vmul.f32 %v675, 1.442695
    %v677 = vpow.pop %v676
    %v678 = vadd.f32 %v677, 1.0
    %v679 = vrcp.pop %v678
    %v680 = vmul.f32 1.0, %v679
    %v681 = vmul.f32 %v673, 0.0
    %v682 = vmul.f32 %v667, %v674
    %v683 = vadd.f32 %v681, %v682
    %v684 = vtanh.pop %v683
    %v685 = vmul.f32 %v680, %v684
    %686 = vst [vmem:[#allocation2] sm:$0x1] %v685
    %s687 = sld [smem:[#allocation3 + $0x1]]
    %s688 = sshra.s32 %s687, 3
    %s689 = sand.u32 %s687, 7
    %s690 = sshra.s32 %s687, 3
    %s691 = sand.u32 %s687, 7
    %s692 = smul.u32 %s688, 4
    %s693 = smul.u32 %s692, 8
    %s694 = sadd.s32 %s693, %s691
    %s695 = scalar_lea.vmem [#allocation7], %s694
    %v696 = vld [vmem:[%s695] ss:$8 sm:$0xf]
    %697 = vmatprep.subr.mxu0 %v94
    %698 = vmatpush1.msra.mxu0 %v93
    %699 = vmatprep.subr.mxu0 %v98
    %700 = vmatpush1.msra.mxu0 %v97
    %701 = vmatprep.subr.mxu0 %v102
    %702 = vmatpush1.msra.mxu0 %v101
    %703 = vmatprep.subr.mxu0 %v106
    %704 = vmatpush1.msra.mxu0 %v105
    %705 = vmatprep.subr.mxu0 %v110
    %706 = vmatpush1.msra.mxu0 %v109
    %707 = vmatprep.subr.mxu0 %v114
    %708 = vmatpush1.msra.mxu0 %v113
    %709 = vmatprep.subr.mxu0 %v118
    %710 = vmatpush1.msra.mxu0 %v117
    %711 = vmatprep.subr.mxu0 %v122
    %712 = vmatpush1.msra.mxu0 %v121
    %713 = vmatprep.subr.mxu0 %v126
    %714 = vmatpush1.msra.mxu0 %v125
    %715 = vmatprep.subr.mxu0 %v130
    %716 = vmatpush1.msra.mxu0 %v129
    %717 = vmatprep.subr.mxu0 %v134
    %718 = vmatpush1.msra.mxu0 %v133
    %719 = vmatprep.subr.mxu0 %v138
    %720 = vmatpush1.msra.mxu0 %v137
    %721 = vmatprep.subr.mxu0 %v142
    %722 = vmatpush1.msra.mxu0 %v141
    %723 = vmatprep.subr.mxu0 %v146
    %724 = vmatpush1.msra.mxu0 %v145
    %725 = vmatprep.subr.mxu0 %v150
    %726 = vmatpush1.msra.mxu0 %v149
    %727 = vmatprep.subr.mxu0 %v154
    %728 = vmatpush1.msra.mxu0 %v153
    %729 = vmatprep.subr.mxu0 0.0
    %730 = vmatpush1.msra.mxu0 0.0
    %731 = vmatprep.subr.mxu0 0.0
    %732 = vmatpush1.msra.mxu0 0.0
    %733 = vmatprep.subr.mxu0 0.0
    %734 = vmatpush1.msra.mxu0 0.0
    %735 = vmatprep.subr.mxu0 0.0
    %736 = vmatpush1.msra.mxu0 0.0
    %737 = vmatprep.subr.mxu0 0.0
    %738 = vmatpush1.msra.mxu0 0.0
    %739 = vmatprep.subr.mxu0 0.0
    %740 = vmatpush1.msra.mxu0 0.0
    %741 = vmatprep.subr.mxu0 0.0
    %742 = vmatpush1.msra.mxu0 0.0
    %743 = vmatprep.subr.mxu0 0.0
    %744 = vmatpush1.msra.mxu0 0.0
    %745 = vmatprep.subr.mxu0 0.0
    %746 = vmatpush1.msra.mxu0 0.0
    %747 = vmatprep.subr.mxu0 0.0
    %748 = vmatpush1.msra.mxu0 0.0
    %749 = vmatprep.subr.mxu0 0.0
    %750 = vmatpush1.msra.mxu0 0.0
    %751 = vmatprep.subr.mxu0 0.0
    %752 = vmatpush1.msra.mxu0 0.0
    %753 = vmatprep.subr.mxu0 0.0
    %754 = vmatpush1.msra.mxu0 0.0
    %755 = vmatprep.subr.mxu0 0.0
    %756 = vmatpush1.msra.mxu0 0.0
    %757 = vmatprep.subr.mxu0 0.0
    %758 = vmatpush1.msra.mxu0 0.0
    %759 = vmatprep.subr.mxu0 0.0
    %760 = vmatpush1.msra.mxu0 0.0
    %761 = vmatprep.mubr.f32.mxu0 0.0
    %762 = vmatmul.mubr.f32.gmra.mrb[0].mxu0 %v498
    %v763 = vpop.f32.mrb[0].mxu0
    %v764 = vadd.f32 0.0, %v763
    %v765 = vpop.f32.mrb[0].mxu0
    %v766 = vadd.f32 0.0, %v765
    %767 = vdwg.mxu0
    %768 = vmatprep.subr.mxu0 %v96
    %769 = vmatpush1.msra.mxu0 %v95
    %770 = vmatprep.subr.mxu0 %v100
    %771 = vmatpush1.msra.mxu0 %v99
    %772 = vmatprep.subr.mxu0 %v104
    %773 = vmatpush1.msra.mxu0 %v103
    %774 = vmatprep.subr.mxu0 %v108
    %775 = vmatpush1.msra.mxu0 %v107
    %776 = vmatprep.subr.mxu0 %v112
    %777 = vmatpush1.msra.mxu0 %v111
    %778 = vmatprep.subr.mxu0 %v116
    %779 = vmatpush1.msra.mxu0 %v115
    %780 = vmatprep.subr.mxu0 %v120
    %781 = vmatpush1.msra.mxu0 %v119
    %782 = vmatprep.subr.mxu0 %v124
    %783 = vmatpush1.msra.mxu0 %v123
    %784 = vmatprep.subr.mxu0 %v128
    %785 = vmatpush1.msra.mxu0 %v127
    %786 = vmatprep.subr.mxu0 %v132
    %787 = vmatpush1.msra.mxu0 %v131
    %788 = vmatprep.subr.mxu0 %v136
    %789 = vmatpush1.msra.mxu0 %v135
    %790 = vmatprep.subr.mxu0 %v140
    %791 = vmatpush1.msra.mxu0 %v139
    %792 = vmatprep.subr.mxu0 %v144
    %793 = vmatpush1.msra.mxu0 %v143
    %794 = vmatprep.subr.mxu0 %v148
    %795 = vmatpush1.msra.mxu0 %v147
    %796 = vmatprep.subr.mxu0 %v152
    %797 = vmatpush1.msra.mxu0 %v151
    %798 = vmatprep.subr.mxu0 %v156
    %799 = vmatpush1.msra.mxu0 %v155
    %800 = vmatprep.subr.mxu0 0.0
    %801 = vmatpush1.msra.mxu0 0.0
    %802 = vmatprep.subr.mxu0 0.0
    %803 = vmatpush1.msra.mxu0 0.0
    %804 = vmatprep.subr.mxu0 0.0
    %805 = vmatpush1.msra.mxu0 0.0
    %806 = vmatprep.subr.mxu0 0.0
    %807 = vmatpush1.msra.mxu0 0.0
    %808 = vmatprep.subr.mxu0 0.0
    %809 = vmatpush1.msra.mxu0 0.0
    %810 = vmatprep.subr.mxu0 0.0
    %811 = vmatpush1.msra.mxu0 0.0
    %812 = vmatprep.subr.mxu0 0.0
    %813 = vmatpush1.msra.mxu0 0.0
    %814 = vmatprep.subr.mxu0 0.0
    %815 = vmatpush1.msra.mxu0 0.0
    %816 = vmatprep.subr.mxu0 0.0
    %817 = vmatpush1.msra.mxu0 0.0
    %818 = vmatprep.subr.mxu0 0.0
    %819 = vmatpush1.msra.mxu0 0.0
    %820 = vmatprep.subr.mxu0 0.0
    %821 = vmatpush1.msra.mxu0 0.0
    %822 = vmatprep.subr.mxu0 0.0
    %823 = vmatpush1.msra.mxu0 0.0
    %824 = vmatprep.subr.mxu0 0.0
    %825 = vmatpush1.msra.mxu0 0.0
    %826 = vmatprep.subr.mxu0 0.0
    %827 = vmatpush1.msra.mxu0 0.0
    %828 = vmatprep.subr.mxu0 0.0
    %829 = vmatpush1.msra.mxu0 0.0
    %830 = vmatprep.subr.mxu0 0.0
    %831 = vmatpush1.msra.mxu0 0.0
    %832 = vmatprep.mubr.f32.mxu0 0.0
    %833 = vmatmul.mubr.f32.gmra.mrb[0].mxu0 %v498
    %v834 = vpop.f32.mrb[0].mxu0
    %v835 = vadd.f32 0.0, %v834
    %v836 = vpop.f32.mrb[0].mxu0
    %v837 = vadd.f32 0.0, %v836
    %838 = vdwg.mxu0
    %v843 = vcombine.low %v764, %v766
    %v844 = vcombine.low %v835, %v837
    %v846 = vunpack.c.l.s4 1966171168
    %v847 = vunpack.c.0.s8 %v846
    %v848 = vlaneseq
    %v849 = vshrl.u32 %v848, 7
    %v850 = vsub.s32 %v847, %v849
    %v851 = vrot.slane %v843, %v850
    %v853 = vunpack.c.l.s4 1966171168
    %v854 = vunpack.c.0.s8 %v853
    %v855 = vlaneseq
    %v856 = vshrl.u32 %v855, 7
    %v857 = vsub.s32 %v854, %v856
    %v858 = vrot.slane %v844, %v857
    %v859 = vcombine.low %v851, %v858
    %v861 = vunpack.c.l.s4 1966171168
    %v862 = vunpack.c.0.s8 %v861
    %v863 = vlaneseq
    %v864 = vshrl.u32 %v863, 7
    %v865 = vsub.s32 %v862, %v864
    %v866 = vrot.slane %v859, %v865
    %v868 = vadd.f32 %v696, %v866
    %v869 = vxor.u32 %v868, 2147483648
    %v870 = vmul.f32 %v869, 1.442695
    %v871 = vpow.pop %v870
    %v872 = vadd.f32 %v871, 1.0
    %v873 = vrcp.pop %v872
    %v874 = vmul.f32 1.0, %v873
    %v876 = vrot.slane %v868, 1
    %v878 = vxor.u32 %v876, 2147483648
    %v879 = vmul.f32 %v878, 1.442695
    %v880 = vpow.pop %v879
    %v881 = vadd.f32 %v880, 1.0
    %v882 = vrcp.pop %v881
    %v883 = vmul.f32 1.0, %v882
    %v884 = vrot.slane %v868, 2
    %v886 = vtanh.pop %v884
    %v887 = vrot.slane %v868, 3
    %v889 = vxor.u32 %v887, 2147483648
    %v890 = vmul.f32 %v889, 1.442695
    %v891 = vpow.pop %v890
    %v892 = vadd.f32 %v891, 1.0
    %v893 = vrcp.pop %v892
    %v894 = vmul.f32 1.0, %v893
    %v895 = vmul.f32 %v883, %v496
    %v896 = vmul.f32 %v874, %v886
    %v897 = vadd.f32 %v895, %v896
    %v898 = vtanh.pop %v897
    %v899 = vmul.f32 %v894, %v898
    %900 = vmatprep.subr.mxu0 %v158
    %901 = vmatpush1.msra.mxu0 %v157
    %902 = vmatprep.subr.mxu0 %v162
    %903 = vmatpush1.msra.mxu0 %v161
    %904 = vmatprep.subr.mxu0 %v166
    %905 = vmatpush1.msra.mxu0 %v165
    %906 = vmatprep.subr.mxu0 %v170
    %907 = vmatpush1.msra.mxu0 %v169
    %908 = vmatprep.subr.mxu0 %v174
    %909 = vmatpush1.msra.mxu0 %v173
    %910 = vmatprep.subr.mxu0 %v178
    %911 = vmatpush1.msra.mxu0 %v177
    %912 = vmatprep.subr.mxu0 %v182
    %913 = vmatpush1.msra.mxu0 %v181
    %914 = vmatprep.subr.mxu0 %v186
    %915 = vmatpush1.msra.mxu0 %v185
    %916 = vmatprep.subr.mxu0 %v190
    %917 = vmatpush1.msra.mxu0 %v189
    %918 = vmatprep.subr.mxu0 %v194
    %919 = vmatpush1.msra.mxu0 %v193
    %920 = vmatprep.subr.mxu0 %v198
    %921 = vmatpush1.msra.mxu0 %v197
    %922 = vmatprep.subr.mxu0 %v202
    %923 = vmatpush1.msra.mxu0 %v201
    %924 = vmatprep.subr.mxu0 %v206
    %925 = vmatpush1.msra.mxu0 %v205
    %926 = vmatprep.subr.mxu0 %v210
    %927 = vmatpush1.msra.mxu0 %v209
    %928 = vmatprep.subr.mxu0 %v214
    %929 = vmatpush1.msra.mxu0 %v213
    %930 = vmatprep.subr.mxu0 %v218
    %931 = vmatpush1.msra.mxu0 %v217
    %932 = vmatprep.subr.mxu0 %v222
    %933 = vmatpush1.msra.mxu0 %v221
    %934 = vmatprep.subr.mxu0 %v226
    %935 = vmatpush1.msra.mxu0 %v225
    %936 = vmatprep.subr.mxu0 %v230
    %937 = vmatpush1.msra.mxu0 %v229
    %938 = vmatprep.subr.mxu0 %v234
    %939 = vmatpush1.msra.mxu0 %v233
    %940 = vmatprep.subr.mxu0 %v238
    %941 = vmatpush1.msra.mxu0 %v237
    %942 = vmatprep.subr.mxu0 %v242
    %943 = vmatpush1.msra.mxu0 %v241
    %944 = vmatprep.subr.mxu0 %v246
    %945 = vmatpush1.msra.mxu0 %v245
    %946 = vmatprep.subr.mxu0 %v250
    %947 = vmatpush1.msra.mxu0 %v249
    %948 = vmatprep.subr.mxu0 %v254
    %949 = vmatpush1.msra.mxu0 %v253
    %950 = vmatprep.subr.mxu0 %v258
    %951 = vmatpush1.msra.mxu0 %v257
    %952 = vmatprep.subr.mxu0 %v262
    %953 = vmatpush1.msra.mxu0 %v261
    %954 = vmatprep.subr.mxu0 %v266
    %955 = vmatpush1.msra.mxu0 %v265
    %956 = vmatprep.subr.mxu0 %v270
    %957 = vmatpush1.msra.mxu0 %v269
    %958 = vmatprep.subr.mxu0 %v274
    %959 = vmatpush1.msra.mxu0 %v273
    %960 = vmatprep.subr.mxu0 %v278
    %961 = vmatpush1.msra.mxu0 %v277
    %962 = vmatprep.subr.mxu0 %v282
    %963 = vmatpush1.msra.mxu0 %v281
    %964 = vmatprep.mubr.f32.mxu0 %v685
    %965 = vmatmul.mubr.f32.gmra.mrb[0].mxu0 %v899
    %v966 = vpop.f32.mrb[0].mxu0
    %v967 = vadd.f32 %v503, %v966
    %v968 = vpop.f32.mrb[0].mxu0
    %v969 = vadd.f32 %v507, %v968
    %970 = vdwg.mxu0
    %971 = vmatprep.subr.mxu0 %v160
    %972 = vmatpush1.msra.mxu0 %v159
    %973 = vmatprep.subr.mxu0 %v164
    %974 = vmatpush1.msra.mxu0 %v163
    %975 = vmatprep.subr.mxu0 %v168
    %976 = vmatpush1.msra.mxu0 %v167
    %977 = vmatprep.subr.mxu0 %v172
    %978 = vmatpush1.msra.mxu0 %v171
    %979 = vmatprep.subr.mxu0 %v176
    %980 = vmatpush1.msra.mxu0 %v175
    %981 = vmatprep.subr.mxu0 %v180
    %982 = vmatpush1.msra.mxu0 %v179
    %983 = vmatprep.subr.mxu0 %v184
    %984 = vmatpush1.msra.mxu0 %v183
    %985 = vmatprep.subr.mxu0 %v188
    %986 = vmatpush1.msra.mxu0 %v187
    %987 = vmatprep.subr.mxu0 %v192
    %988 = vmatpush1.msra.mxu0 %v191
    %989 = vmatprep.subr.mxu0 %v196
    %990 = vmatpush1.msra.mxu0 %v195
    %991 = vmatprep.subr.mxu0 %v200
    %992 = vmatpush1.msra.mxu0 %v199
    %993 = vmatprep.subr.mxu0 %v204
    %994 = vmatpush1.msra.mxu0 %v203
    %995 = vmatprep.subr.mxu0 %v208
    %996 = vmatpush1.msra.mxu0 %v207
    %997 = vmatprep.subr.mxu0 %v212
    %998 = vmatpush1.msra.mxu0 %v211
    %999 = vmatprep.subr.mxu0 %v216
    %1000 = vmatpush1.msra.mxu0 %v215
    %1001 = vmatprep.subr.mxu0 %v220
    %1002 = vmatpush1.msra.mxu0 %v219
    %1003 = vmatprep.subr.mxu0 %v224
    %1004 = vmatpush1.msra.mxu0 %v223
    %1005 = vmatprep.subr.mxu0 %v228
    %1006 = vmatpush1.msra.mxu0 %v227
    %1007 = vmatprep.subr.mxu0 %v232
    %1008 = vmatpush1.msra.mxu0 %v231
    %1009 = vmatprep.subr.mxu0 %v236
    %1010 = vmatpush1.msra.mxu0 %v235
    %1011 = vmatprep.subr.mxu0 %v240
    %1012 = vmatpush1.msra.mxu0 %v239
    %1013 = vmatprep.subr.mxu0 %v244
    %1014 = vmatpush1.msra.mxu0 %v243
    %1015 = vmatprep.subr.mxu0 %v248
    %1016 = vmatpush1.msra.mxu0 %v247
    %1017 = vmatprep.subr.mxu0 %v252
    %1018 = vmatpush1.msra.mxu0 %v251
    %1019 = vmatprep.subr.mxu0 %v256
    %1020 = vmatpush1.msra.mxu0 %v255
    %1021 = vmatprep.subr.mxu0 %v260
    %1022 = vmatpush1.msra.mxu0 %v259
    %1023 = vmatprep.subr.mxu0 %v264
    %1024 = vmatpush1.msra.mxu0 %v263
    %1025 = vmatprep.subr.mxu0 %v268
    %1026 = vmatpush1.msra.mxu0 %v267
    %1027 = vmatprep.subr.mxu0 %v272
    %1028 = vmatpush1.msra.mxu0 %v271
    %1029 = vmatprep.subr.mxu0 %v276
    %1030 = vmatpush1.msra.mxu0 %v275
    %1031 = vmatprep.subr.mxu0 %v280
    %1032 = vmatpush1.msra.mxu0 %v279
    %1033 = vmatprep.subr.mxu0 %v284
    %1034 = vmatpush1.msra.mxu0 %v283
    %1035 = vmatprep.mubr.f32.mxu0 %v685
    %1036 = vmatmul.mubr.f32.gmra.mrb[0].mxu0 %v899
    %v1037 = vpop.f32.mrb[0].mxu0
    %v1038 = vadd.f32 %v511, %v1037
    %v1039 = vpop.f32.mrb[0].mxu0
    %v1040 = vadd.f32 %v515, %v1039
    %1041 = vdwg.mxu0
    %v1042 = vxor.u32 %v967, 2147483648
    %v1043 = vmul.f32 %v1042, 1.442695
    %v1044 = vpow.pop %v1043
    %v1045 = vadd.f32 %v1044, 1.0
    %v1046 = vrcp.pop %v1045
    %v1047 = vmul.f32 1.0, %v1046
    %v1048 = vxor.u32 %v969, 2147483648
    %v1049 = vmul.f32 %v1048, 1.442695
    %v1050 = vpow.pop %v1049
    %v1051 = vadd.f32 %v1050, 1.0
    %v1052 = vrcp.pop %v1051
    %v1053 = vmul.f32 1.0, %v1052
    %v1054 = vtanh.pop %v1038
    %v1055 = vxor.u32 %v1040, 2147483648
    %v1056 = vmul.f32 %v1055, 1.442695
    %v1057 = vpow.pop %v1056
    %v1058 = vadd.f32 %v1057, 1.0
    %v1059 = vrcp.pop %v1058
    %v1060 = vmul.f32 1.0, %v1059
    %v1061 = vmul.f32 %v1053, %v683
    %v1062 = vmul.f32 %v1047, %v1054
    %v1063 = vadd.f32 %v1061, %v1062
    %v1064 = vtanh.pop %v1063
    %v1065 = vmul.f32 %v1060, %v1064
    %1066 = vst [vmem:[#allocation2 + $0x1] sm:$0x1] %v1065
    %s1067 = sld [smem:[#allocation3 + $0x2]]
    %s1068 = sshra.s32 %s1067, 3
    %s1069 = sand.u32 %s1067, 7
    %s1070 = sshra.s32 %s1067, 3
    %s1071 = sand.u32 %s1067, 7
    %s1072 = smul.u32 %s1068, 4
    %s1073 = smul.u32 %s1072, 8
    %s1074 = sadd.s32 %s1073, %s1071
    %s1075 = scalar_lea.vmem [#allocation7], %s1074
    %v1076 = vld [vmem:[%s1075] ss:$8 sm:$0xf]
    %1077 = vmatprep.subr.mxu0 %v94
    %1078 = vmatpush1.msra.mxu0 %v93
    %1079 = vmatprep.subr.mxu0 %v98
    %1080 = vmatpush1.msra.mxu0 %v97
    %1081 = vmatprep.subr.mxu0 %v102
    %1082 = vmatpush1.msra.mxu0 %v101
    %1083 = vmatprep.subr.mxu0 %v106
    %1084 = vmatpush1.msra.mxu0 %v105
    %1085 = vmatprep.subr.mxu0 %v110
    %1086 = vmatpush1.msra.mxu0 %v109
    %1087 = vmatprep.subr.mxu0 %v114
    %1088 = vmatpush1.msra.mxu0 %v113
    %1089 = vmatprep.subr.mxu0 %v118
    %1090 = vmatpush1.msra.mxu0 %v117
    %1091 = vmatprep.subr.mxu0 %v122
    %1092 = vmatpush1.msra.mxu0 %v121
    %1093 = vmatprep.subr.mxu0 %v126
    %1094 = vmatpush1.msra.mxu0 %v125
    %1095 = vmatprep.subr.mxu0 %v130
    %1096 = vmatpush1.msra.mxu0 %v129
    %1097 = vmatprep.subr.mxu0 %v134
    %1098 = vmatpush1.msra.mxu0 %v133
    %1099 = vmatprep.subr.mxu0 %v138
    %1100 = vmatpush1.msra.mxu0 %v137
    %1101 = vmatprep.subr.mxu0 %v142
    %1102 = vmatpush1.msra.mxu0 %v141
    %1103 = vmatprep.subr.mxu0 %v146
    %1104 = vmatpush1.msra.mxu0 %v145
    %1105 = vmatprep.subr.mxu0 %v150
    %1106 = vmatpush1.msra.mxu0 %v149
    %1107 = vmatprep.subr.mxu0 %v154
    %1108 = vmatpush1.msra.mxu0 %v153
    %1109 = vmatprep.subr.mxu0 0.0
    %1110 = vmatpush1.msra.mxu0 0.0
    %1111 = vmatprep.subr.mxu0 0.0
    %1112 = vmatpush1.msra.mxu0 0.0
    %1113 = vmatprep.subr.mxu0 0.0
    %1114 = vmatpush1.msra.mxu0 0.0
    %1115 = vmatprep.subr.mxu0 0.0
    %1116 = vmatpush1.msra.mxu0 0.0
    %1117 = vmatprep.subr.mxu0 0.0
    %1118 = vmatpush1.msra.mxu0 0.0
    %1119 = vmatprep.subr.mxu0 0.0
    %1120 = vmatpush1.msra.mxu0 0.0
    %1121 = vmatprep.subr.mxu0 0.0
    %1122 = vmatpush1.msra.mxu0 0.0
    %1123 = vmatprep.subr.mxu0 0.0
    %1124 = vmatpush1.msra.mxu0 0.0
    %1125 = vmatprep.subr.mxu0 0.0
    %1126 = vmatpush1.msra.mxu0 0.0
    %1127 = vmatprep.subr.mxu0 0.0
    %1128 = vmatpush1.msra.mxu0 0.0
    %1129 = vmatprep.subr.mxu0 0.0
    %1130 = vmatpush1.msra.mxu0 0.0
    %1131 = vmatprep.subr.mxu0 0.0
    %1132 = vmatpush1.msra.mxu0 0.0
    %1133 = vmatprep.subr.mxu0 0.0
    %1134 = vmatpush1.msra.mxu0 0.0
    %1135 = vmatprep.subr.mxu0 0.0
    %1136 = vmatpush1.msra.mxu0 0.0
    %1137 = vmatprep.subr.mxu0 0.0
    %1138 = vmatpush1.msra.mxu0 0.0
    %1139 = vmatprep.subr.mxu0 0.0
    %1140 = vmatpush1.msra.mxu0 0.0
    %1141 = vmatprep.mubr.f32.mxu0 0.0
    %1142 = vmatmul.mubr.f32.gmra.mrb[0].mxu0 %v899
    %v1143 = vpop.f32.mrb[0].mxu0
    %v1144 = vadd.f32 0.0, %v1143
    %v1145 = vpop.f32.mrb[0].mxu0
    %v1146 = vadd.f32 0.0, %v1145
    %1147 = vdwg.mxu0
    %1148 = vmatprep.subr.mxu0 %v96
    %1149 = vmatpush1.msra.mxu0 %v95
    %1150 = vmatprep.subr.mxu0 %v100
    %1151 = vmatpush1.msra.mxu0 %v99
    %1152 = vmatprep.subr.mxu0 %v104
    %1153 = vmatpush1.msra.mxu0 %v103
    %1154 = vmatprep.subr.mxu0 %v108
    %1155 = vmatpush1.msra.mxu0 %v107
    %1156 = vmatprep.subr.mxu0 %v112
    %1157 = vmatpush1.msra.mxu0 %v111
    %1158 = vmatprep.subr.mxu0 %v116
    %1159 = vmatpush1.msra.mxu0 %v115
    %1160 = vmatprep.subr.mxu0 %v120
    %1161 = vmatpush1.msra.mxu0 %v119
    %1162 = vmatprep.subr.mxu0 %v124
    %1163 = vmatpush1.msra.mxu0 %v123
    %1164 = vmatprep.subr.mxu0 %v128
    %1165 = vmatpush1.msra.mxu0 %v127
    %1166 = vmatprep.subr.mxu0 %v132
    %1167 = vmatpush1.msra.mxu0 %v131
    %1168 = vmatprep.subr.mxu0 %v136
    %1169 = vmatpush1.msra.mxu0 %v135
    %1170 = vmatprep.subr.mxu0 %v140
    %1171 = vmatpush1.msra.mxu0 %v139
    %1172 = vmatprep.subr.mxu0 %v144
    %1173 = vmatpush1.msra.mxu0 %v143
    %1174 = vmatprep.subr.mxu0 %v148
    %1175 = vmatpush1.msra.mxu0 %v147
    %1176 = vmatprep.subr.mxu0 %v152
    %1177 = vmatpush1.msra.mxu0 %v151
    %1178 = vmatprep.subr.mxu0 %v156
    %1179 = vmatpush1.msra.mxu0 %v155
    %1180 = vmatprep.subr.mxu0 0.0
    %1181 = vmatpush1.msra.mxu0 0.0
    %1182 = vmatprep.subr.mxu0 0.0
    %1183 = vmatpush1.msra.mxu0 0.0
    %1184 = vmatprep.subr.mxu0 0.0
    %1185 = vmatpush1.msra.mxu0 0.0
    %1186 = vmatprep.subr.mxu0 0.0
    %1187 = vmatpush1.msra.mxu0 0.0
    %1188 = vmatprep.subr.mxu0 0.0
    %1189 = vmatpush1.msra.mxu0 0.0
    %1190 = vmatprep.subr.mxu0 0.0
    %1191 = vmatpush1.msra.mxu0 0.0
    %1192 = vmatprep.subr.mxu0 0.0
    %1193 = vmatpush1.msra.mxu0 0.0
    %1194 = vmatprep.subr.mxu0 0.0
    %1195 = vmatpush1.msra.mxu0 0.0
    %1196 = vmatprep.subr.mxu0 0.0
    %1197 = vmatpush1.msra.mxu0 0.0
    %1198 = vmatprep.subr.mxu0 0.0
    %1199 = vmatpush1.msra.mxu0 0.0
    %1200 = vmatprep.subr.mxu0 0.0
    %1201 = vmatpush1.msra.mxu0 0.0
    %1202 = vmatprep.subr.mxu0 0.0
    %1203 = vmatpush1.msra.mxu0 0.0
    %1204 = vmatprep.subr.mxu0 0.0
    %1205 = vmatpush1.msra.mxu0 0.0
    %1206 = vmatprep.subr.mxu0 0.0
    %1207 = vmatpush1.msra.mxu0 0.0
    %1208 = vmatprep.subr.mxu0 0.0
    %1209 = vmatpush1.msra.mxu0 0.0
    %1210 = vmatprep.subr.mxu0 0.0
    %1211 = vmatpush1.msra.mxu0 0.0
    %1212 = vmatprep.mubr.f32.mxu0 0.0
    %1213 = vmatmul.mubr.f32.gmra.mrb[0].mxu0 %v899
    %v1214 = vpop.f32.mrb[0].mxu0
    %v1215 = vadd.f32 0.0, %v1214
    %v1216 = vpop.f32.mrb[0].mxu0
    %v1217 = vadd.f32 0.0, %v1216
    %1218 = vdwg.mxu0
    %v1223 = vcombine.low %v1144, %v1146
    %v1224 = vcombine.low %v1215, %v1217
    %v1226 = vunpack.c.l.s4 1966171168
    %v1227 = vunpack.c.0.s8 %v1226
    %v1228 = vlaneseq
    %v1229 = vshrl.u32 %v1228, 7
    %v1230 = vsub.s32 %v1227, %v1229
    %v1231 = vrot.slane %v1223, %v1230
    %v1233 = vunpack.c.l.s4 1966171168
    %v1234 = vunpack.c.0.s8 %v1233
    %v1235 = vlaneseq
    %v1236 = vshrl.u32 %v1235, 7
    %v1237 = vsub.s32 %v1234, %v1236
    %v1238 = vrot.slane %v1224, %v1237
    %v1239 = vcombine.low %v1231, %v1238
    %v1241 = vunpack.c.l.s4 1966171168
    %v1242 = vunpack.c.0.s8 %v1241
    %v1243 = vlaneseq
    %v1244 = vshrl.u32 %v1243, 7
    %v1245 = vsub.s32 %v1242, %v1244
    %v1246 = vrot.slane %v1239, %v1245
    %v1248 = vadd.f32 %v1076, %v1246
    %v1249 = vxor.u32 %v1248, 2147483648
    %v1250 = vmul.f32 %v1249, 1.442695
    %v1251 = vpow.pop %v1250
    %v1252 = vadd.f32 %v1251, 1.0
    %v1253 = vrcp.pop %v1252
    %v1254 = vmul.f32 1.0, %v1253
    %v1256 = vrot.slane %v1248, 1
    %v1258 = vxor.u32 %v1256, 2147483648
    %v1259 = vmul.f32 %v1258, 1.442695
    %v1260 = vpow.pop %v1259
    %v1261 = vadd.f32 %v1260, 1.0
    %v1262 = vrcp.pop %v1261
    %v1263 = vmul.f32 1.0, %v1262
    %v1264 = vrot.slane %v1248, 2
    %v1266 = vtanh.pop %v1264
    %v1267 = vrot.slane %v1248, 3
    %v1269 = vxor.u32 %v1267, 2147483648
    %v1270 = vmul.f32 %v1269, 1.442695
    %v1271 = vpow.pop %v1270
    %v1272 = vadd.f32 %v1271, 1.0
    %v1273 = vrcp.pop %v1272
    %v1274 = vmul.f32 1.0, %v1273
    %v1275 = vmul.f32 %v1263, %v897
    %v1276 = vmul.f32 %v1254, %v1266
    %v1277 = vadd.f32 %v1275, %v1276
    %v1278 = vtanh.pop %v1277
    %v1279 = vmul.f32 %v1274, %v1278
    %1280 = vmatprep.subr.mxu0 %v158
    %1281 = vmatpush1.msra.mxu0 %v157
    %1282 = vmatprep.subr.mxu0 %v162
    %1283 = vmatpush1.msra.mxu0 %v161
    %1284 = vmatprep.subr.mxu0 %v166
    %1285 = vmatpush1.msra.mxu0 %v165
    %1286 = vmatprep.subr.mxu0 %v170
    %1287 = vmatpush1.msra.mxu0 %v169
    %1288 = vmatprep.subr.mxu0 %v174
    %1289 = vmatpush1.msra.mxu0 %v173
    %1290 = vmatprep.subr.mxu0 %v178
    %1291 = vmatpush1.msra.mxu0 %v177
    %1292 = vmatprep.subr.mxu0 %v182
    %1293 = vmatpush1.msra.mxu0 %v181
    %1294 = vmatprep.subr.mxu0 %v186
    %1295 = vmatpush1.msra.mxu0 %v185
    %1296 = vmatprep.subr.mxu0 %v190
    %1297 = vmatpush1.msra.mxu0 %v189
    %1298 = vmatprep.subr.mxu0 %v194
    %1299 = vmatpush1.msra.mxu0 %v193
    %1300 = vmatprep.subr.mxu0 %v198
    %1301 = vmatpush1.msra.mxu0 %v197
    %1302 = vmatprep.subr.mxu0 %v202
    %1303 = vmatpush1.msra.mxu0 %v201
    %1304 = vmatprep.subr.mxu0 %v206
    %1305 = vmatpush1.msra.mxu0 %v205
    %1306 = vmatprep.subr.mxu0 %v210
    %1307 = vmatpush1.msra.mxu0 %v209
    %1308 = vmatprep.subr.mxu0 %v214
    %1309 = vmatpush1.msra.mxu0 %v213
    %1310 = vmatprep.subr.mxu0 %v218
    %1311 = vmatpush1.msra.mxu0 %v217
    %1312 = vmatprep.subr.mxu0 %v222
    %1313 = vmatpush1.msra.mxu0 %v221
    %1314 = vmatprep.subr.mxu0 %v226
    %1315 = vmatpush1.msra.mxu0 %v225
    %1316 = vmatprep.subr.mxu0 %v230
    %1317 = vmatpush1.msra.mxu0 %v229
    %1318 = vmatprep.subr.mxu0 %v234
    %1319 = vmatpush1.msra.mxu0 %v233
    %1320 = vmatprep.subr.mxu0 %v238
    %1321 = vmatpush1.msra.mxu0 %v237
    %1322 = vmatprep.subr.mxu0 %v242
    %1323 = vmatpush1.msra.mxu0 %v241
    %1324 = vmatprep.subr.mxu0 %v246
    %1325 = vmatpush1.msra.mxu0 %v245
    %1326 = vmatprep.subr.mxu0 %v250
    %1327 = vmatpush1.msra.mxu0 %v249
    %1328 = vmatprep.subr.mxu0 %v254
    %1329 = vmatpush1.msra.mxu0 %v253
    %1330 = vmatprep.subr.mxu0 %v258
    %1331 = vmatpush1.msra.mxu0 %v257
    %1332 = vmatprep.subr.mxu0 %v262
    %1333 = vmatpush1.msra.mxu0 %v261
    %1334 = vmatprep.subr.mxu0 %v266
    %1335 = vmatpush1.msra.mxu0 %v265
    %1336 = vmatprep.subr.mxu0 %v270
    %1337 = vmatpush1.msra.mxu0 %v269
    %1338 = vmatprep.subr.mxu0 %v274
    %1339 = vmatpush1.msra.mxu0 %v273
    %1340 = vmatprep.subr.mxu0 %v278
    %1341 = vmatpush1.msra.mxu0 %v277
    %1342 = vmatprep.subr.mxu0 %v282
    %1343 = vmatpush1.msra.mxu0 %v281
    %1344 = vmatprep.mubr.f32.mxu0 %v1065
    %1345 = vmatmul.mubr.f32.gmra.mrb[0].mxu0 %v1279
    %v1346 = vpop.f32.mrb[0].mxu0
    %v1347 = vadd.f32 %v503, %v1346
    %v1348 = vpop.f32.mrb[0].mxu0
    %v1349 = vadd.f32 %v507, %v1348
    %1350 = vdwg.mxu0
    %1351 = vmatprep.subr.mxu0 %v160
    %1352 = vmatpush1.msra.mxu0 %v159
    %1353 = vmatprep.subr.mxu0 %v164
    %1354 = vmatpush1.msra.mxu0 %v163
    %1355 = vmatprep.subr.mxu0 %v168
    %1356 = vmatpush1.msra.mxu0 %v167
    %1357 = vmatprep.subr.mxu0 %v172
    %1358 = vmatpush1.msra.mxu0 %v171
    %1359 = vmatprep.subr.mxu0 %v176
    %1360 = vmatpush1.msra.mxu0 %v175
    %1361 = vmatprep.subr.mxu0 %v180
    %1362 = vmatpush1.msra.mxu0 %v179
    %1363 = vmatprep.subr.mxu0 %v184
    %1364 = vmatpush1.msra.mxu0 %v183
    %1365 = vmatprep.subr.mxu0 %v188
    %1366 = vmatpush1.msra.mxu0 %v187
    %1367 = vmatprep.subr.mxu0 %v192
    %1368 = vmatpush1.msra.mxu0 %v191
    %1369 = vmatprep.subr.mxu0 %v196
    %1370 = vmatpush1.msra.mxu0 %v195
    %1371 = vmatprep.subr.mxu0 %v200
    %1372 = vmatpush1.msra.mxu0 %v199
    %1373 = vmatprep.subr.mxu0 %v204
    %1374 = vmatpush1.msra.mxu0 %v203
    %1375 = vmatprep.subr.mxu0 %v208
    %1376 = vmatpush1.msra.mxu0 %v207
    %1377 = vmatprep.subr.mxu0 %v212
    %1378 = vmatpush1.msra.mxu0 %v211
    %1379 = vmatprep.subr.mxu0 %v216
    %1380 = vmatpush1.msra.mxu0 %v215
    %1381 = vmatprep.subr.mxu0 %v220
    %1382 = vmatpush1.msra.mxu0 %v219
    %1383 = vmatprep.subr.mxu0 %v224
    %1384 = vmatpush1.msra.mxu0 %v223
    %1385 = vmatprep.subr.mxu0 %v228
    %1386 = vmatpush1.msra.mxu0 %v227
    %1387 = vmatprep.subr.mxu0 %v232
    %1388 = vmatpush1.msra.mxu0 %v231
    %1389 = vmatprep.subr.mxu0 %v236
    %1390 = vmatpush1.msra.mxu0 %v235
    %1391 = vmatprep.subr.mxu0 %v240
    %1392 = vmatpush1.msra.mxu0 %v239
    %1393 = vmatprep.subr.mxu0 %v244
    %1394 = vmatpush1.msra.mxu0 %v243
    %1395 = vmatprep.subr.mxu0 %v248
    %1396 = vmatpush1.msra.mxu0 %v247
    %1397 = vmatprep.subr.mxu0 %v252
    %1398 = vmatpush1.msra.mxu0 %v251
    %1399 = vmatprep.subr.mxu0 %v256
    %1400 = vmatpush1.msra.mxu0 %v255
    %1401 = vmatprep.subr.mxu0 %v260
    %1402 = vmatpush1.msra.mxu0 %v259
    %1403 = vmatprep.subr.mxu0 %v264
    %1404 = vmatpush1.msra.mxu0 %v263
    %1405 = vmatprep.subr.mxu0 %v268
    %1406 = vmatpush1.msra.mxu0 %v267
    %1407 = vmatprep.subr.mxu0 %v272
    %1408 = vmatpush1.msra.mxu0 %v271
    %1409 = vmatprep.subr.mxu0 %v276
    %1410 = vmatpush1.msra.mxu0 %v275
    %1411 = vmatprep.subr.mxu0 %v280
    %1412 = vmatpush1.msra.mxu0 %v279
    %1413 = vmatprep.subr.mxu0 %v284
    %1414 = vmatpush1.msra.mxu0 %v283
    %1415 = vmatprep.mubr.f32.mxu0 %v1065
    %1416 = vmatmul.mubr.f32.gmra.mrb[0].mxu0 %v1279
    %v1417 = vpop.f32.mrb[0].mxu0
    %v1418 = vadd.f32 %v511, %v1417
    %v1419 = vpop.f32.mrb[0].mxu0
    %v1420 = vadd.f32 %v515, %v1419
    %1421 = vdwg.mxu0
    %v1422 = vxor.u32 %v1347, 2147483648
    %v1423 = vmul.f32 %v1422, 1.442695
    %v1424 = vpow.pop %v1423
    %v1425 = vadd.f32 %v1424, 1.0
    %v1426 = vrcp.pop %v1425
    %v1427 = vmul.f32 1.0, %v1426
    %v1428 = vxor.u32 %v1349, 2147483648
    %v1429 = vmul.f32 %v1428, 1.442695
    %v1430 = vpow.pop %v1429
    %v1431 = vadd.f32 %v1430, 1.0
    %v1432 = vrcp.pop %v1431
    %v1433 = vmul.f32 1.0, %v1432
    %v1434 = vtanh.pop %v1418
    %v1435 = vxor.u32 %v1420, 2147483648
    %v1436 = vmul.f32 %v1435, 1.442695
    %v1437 = vpow.pop %v1436
    %v1438 = vadd.f32 %v1437, 1.0
    %v1439 = vrcp.pop %v1438
    %v1440 = vmul.f32 1.0, %v1439
    %v1441 = vmul.f32 %v1433, %v1063
    %v1442 = vmul.f32 %v1427, %v1434
    %v1443 = vadd.f32 %v1441, %v1442
    %v1444 = vtanh.pop %v1443
    %v1445 = vmul.f32 %v1440, %v1444
    %1446 = vst [vmem:[#allocation2 + $0x2] sm:$0x1] %v1445
    %s1447 = sld [smem:[#allocation3 + $0x3]]
    %s1448 = sshra.s32 %s1447, 3
    %s1449 = sand.u32 %s1447, 7
    %s1450 = sshra.s32 %s1447, 3
    %s1451 = sand.u32 %s1447, 7
    %s1452 = smul.u32 %s1448, 4
    %s1453 = smul.u32 %s1452, 8
    %s1454 = sadd.s32 %s1453, %s1451
    %s1455 = scalar_lea.vmem [#allocation7], %s1454
    %v1456 = vld [vmem:[%s1455] ss:$8 sm:$0xf]
    %1457 = vmatprep.subr.mxu0 %v94
    %1458 = vmatpush1.msra.mxu0 %v93
    %1459 = vmatprep.subr.mxu0 %v98
    %1460 = vmatpush1.msra.mxu0 %v97
    %1461 = vmatprep.subr.mxu0 %v102
    %1462 = vmatpush1.msra.mxu0 %v101
    %1463 = vmatprep.subr.mxu0 %v106
    %1464 = vmatpush1.msra.mxu0 %v105
    %1465 = vmatprep.subr.mxu0 %v110
    %1466 = vmatpush1.msra.mxu0 %v109
    %1467 = vmatprep.subr.mxu0 %v114
    %1468 = vmatpush1.msra.mxu0 %v113
    %1469 = vmatprep.subr.mxu0 %v118
    %1470 = vmatpush1.msra.mxu0 %v117
    %1471 = vmatprep.subr.mxu0 %v122
    %1472 = vmatpush1.msra.mxu0 %v121
    %1473 = vmatprep.subr.mxu0 %v126
    %1474 = vmatpush1.msra.mxu0 %v125
    %1475 = vmatprep.subr.mxu0 %v130
    %1476 = vmatpush1.msra.mxu0 %v129
    %1477 = vmatprep.subr.mxu0 %v134
    %1478 = vmatpush1.msra.mxu0 %v133
    %1479 = vmatprep.subr.mxu0 %v138
    %1480 = vmatpush1.msra.mxu0 %v137
    %1481 = vmatprep.subr.mxu0 %v142
    %1482 = vmatpush1.msra.mxu0 %v141
    %1483 = vmatprep.subr.mxu0 %v146
    %1484 = vmatpush1.msra.mxu0 %v145
    %1485 = vmatprep.subr.mxu0 %v150
    %1486 = vmatpush1.msra.mxu0 %v149
    %1487 = vmatprep.subr.mxu0 %v154
    %1488 = vmatpush1.msra.mxu0 %v153
    %1489 = vmatprep.subr.mxu0 0.0
    %1490 = vmatpush1.msra.mxu0 0.0
    %1491 = vmatprep.subr.mxu0 0.0
    %1492 = vmatpush1.msra.mxu0 0.0
    %1493 = vmatprep.subr.mxu0 0.0
    %1494 = vmatpush1.msra.mxu0 0.0
    %1495 = vmatprep.subr.mxu0 0.0
    %1496 = vmatpush1.msra.mxu0 0.0
    %1497 = vmatprep.subr.mxu0 0.0
    %1498 = vmatpush1.msra.mxu0 0.0
    %1499 = vmatprep.subr.mxu0 0.0
    %1500 = vmatpush1.msra.mxu0 0.0
    %1501 = vmatprep.subr.mxu0 0.0
    %1502 = vmatpush1.msra.mxu0 0.0
    %1503 = vmatprep.subr.mxu0 0.0
    %1504 = vmatpush1.msra.mxu0 0.0
    %1505 = vmatprep.subr.mxu0 0.0
    %1506 = vmatpush1.msra.mxu0 0.0
    %1507 = vmatprep.subr.mxu0 0.0
    %1508 = vmatpush1.msra.mxu0 0.0
    %1509 = vmatprep.subr.mxu0 0.0
    %1510 = vmatpush1.msra.mxu0 0.0
    %1511 = vmatprep.subr.mxu0 0.0
    %1512 = vmatpush1.msra.mxu0 0.0
    %1513 = vmatprep.subr.mxu0 0.0
    %1514 = vmatpush1.msra.mxu0 0.0
    %1515 = vmatprep.subr.mxu0 0.0
    %1516 = vmatpush1.msra.mxu0 0.0
    %1517 = vmatprep.subr.mxu0 0.0
    %1518 = vmatpush1.msra.mxu0 0.0
    %1519 = vmatprep.subr.mxu0 0.0
    %1520 = vmatpush1.msra.mxu0 0.0
    %1521 = vmatprep.mubr.f32.mxu0 0.0
    %1522 = vmatmul.mubr.f32.gmra.mrb[0].mxu0 %v1279
    %v1523 = vpop.f32.mrb[0].mxu0
    %v1524 = vadd.f32 0.0, %v1523
    %v1525 = vpop.f32.mrb[0].mxu0
    %v1526 = vadd.f32 0.0, %v1525
    %1527 = vdwg.mxu0
    %1528 = vmatprep.subr.mxu0 %v96
    %1529 = vmatpush1.msra.mxu0 %v95
    %1530 = vmatprep.subr.mxu0 %v100
    %1531 = vmatpush1.msra.mxu0 %v99
    %1532 = vmatprep.subr.mxu0 %v104
    %1533 = vmatpush1.msra.mxu0 %v103
    %1534 = vmatprep.subr.mxu0 %v108
    %1535 = vmatpush1.msra.mxu0 %v107
    %1536 = vmatprep.subr.mxu0 %v112
    %1537 = vmatpush1.msra.mxu0 %v111
    %1538 = vmatprep.subr.mxu0 %v116
    %1539 = vmatpush1.msra.mxu0 %v115
    %1540 = vmatprep.subr.mxu0 %v120
    %1541 = vmatpush1.msra.mxu0 %v119
    %1542 = vmatprep.subr.mxu0 %v124
    %1543 = vmatpush1.msra.mxu0 %v123
    %1544 = vmatprep.subr.mxu0 %v128
    %1545 = vmatpush1.msra.mxu0 %v127
    %1546 = vmatprep.subr.mxu0 %v132
    %1547 = vmatpush1.msra.mxu0 %v131
    %1548 = vmatprep.subr.mxu0 %v136
    %1549 = vmatpush1.msra.mxu0 %v135
    %1550 = vmatprep.subr.mxu0 %v140
    %1551 = vmatpush1.msra.mxu0 %v139
    %1552 = vmatprep.subr.mxu0 %v144
    %1553 = vmatpush1.msra.mxu0 %v143
    %1554 = vmatprep.subr.mxu0 %v148
    %1555 = vmatpush1.msra.mxu0 %v147
    %1556 = vmatprep.subr.mxu0 %v152
    %1557 = vmatpush1.msra.mxu0 %v151
    %1558 = vmatprep.subr.mxu0 %v156
    %1559 = vmatpush1.msra.mxu0 %v155
    %1560 = vmatprep.subr.mxu0 0.0
    %1561 = vmatpush1.msra.mxu0 0.0
    %1562 = vmatprep.subr.mxu0 0.0
    %1563 = vmatpush1.msra.mxu0 0.0
    %1564 = vmatprep.subr.mxu0 0.0
    %1565 = vmatpush1.msra.mxu0 0.0
    %1566 = vmatprep.subr.mxu0 0.0
    %1567 = vmatpush1.msra.mxu0 0.0
    %1568 = vmatprep.subr.mxu0 0.0
    %1569 = vmatpush1.msra.mxu0 0.0
    %1570 = vmatprep.subr.mxu0 0.0
    %1571 = vmatpush1.msra.mxu0 0.0
    %1572 = vmatprep.subr.mxu0 0.0
    %1573 = vmatpush1.msra.mxu0 0.0
    %1574 = vmatprep.subr.mxu0 0.0
    %1575 = vmatpush1.msra.mxu0 0.0
    %1576 = vmatprep.subr.mxu0 0.0
    %1577 = vmatpush1.msra.mxu0 0.0
    %1578 = vmatprep.subr.mxu0 0.0
    %1579 = vmatpush1.msra.mxu0 0.0
    %1580 = vmatprep.subr.mxu0 0.0
    %1581 = vmatpush1.msra.mxu0 0.0
    %1582 = vmatprep.subr.mxu0 0.0
    %1583 = vmatpush1.msra.mxu0 0.0
    %1584 = vmatprep.subr.mxu0 0.0
    %1585 = vmatpush1.msra.mxu0 0.0
    %1586 = vmatprep.subr.mxu0 0.0
    %1587 = vmatpush1.msra.mxu0 0.0
    %1588 = vmatprep.subr.mxu0 0.0
    %1589 = vmatpush1.msra.mxu0 0.0
    %1590 = vmatprep.subr.mxu0 0.0
    %1591 = vmatpush1.msra.mxu0 0.0
    %1592 = vmatprep.mubr.f32.mxu0 0.0
    %1593 = vmatmul.mubr.f32.gmra.mrb[0].mxu0 %v1279
    %v1594 = vpop.f32.mrb[0].mxu0
    %v1595 = vadd.f32 0.0, %v1594
    %v1596 = vpop.f32.mrb[0].mxu0
    %v1597 = vadd.f32 0.0, %v1596
    %1598 = vdwg.mxu0
    %v1603 = vcombine.low %v1524, %v1526
    %v1604 = vcombine.low %v1595, %v1597
    %v1606 = vunpack.c.l.s4 1966171168
    %v1607 = vunpack.c.0.s8 %v1606
    %v1608 = vlaneseq
    %v1609 = vshrl.u32 %v1608, 7
    %v1610 = vsub.s32 %v1607, %v1609
    %v1611 = vrot.slane %v1603, %v1610
    %v1613 = vunpack.c.l.s4 1966171168
    %v1614 = vunpack.c.0.s8 %v1613
    %v1615 = vlaneseq
    %v1616 = vshrl.u32 %v1615, 7
    %v1617 = vsub.s32 %v1614, %v1616
    %v1618 = vrot.slane %v1604, %v1617
    %v1619 = vcombine.low %v1611, %v1618
    %v1621 = vunpack.c.l.s4 1966171168
    %v1622 = vunpack.c.0.s8 %v1621
    %v1623 = vlaneseq
    %v1624 = vshrl.u32 %v1623, 7
    %v1625 = vsub.s32 %v1622, %v1624
    %v1626 = vrot.slane %v1619, %v1625
    %v1628 = vadd.f32 %v1456, %v1626
    %v1629 = vxor.u32 %v1628, 2147483648
    %v1630 = vmul.f32 %v1629, 1.442695
    %v1631 = vpow.pop %v1630
    %v1632 = vadd.f32 %v1631, 1.0
    %v1633 = vrcp.pop %v1632
    %v1634 = vmul.f32 1.0, %v1633
    %v1636 = vrot.slane %v1628, 1
    %v1638 = vxor.u32 %v1636, 2147483648
    %v1639 = vmul.f32 %v1638, 1.442695
    %v1640 = vpow.pop %v1639
    %v1641 = vadd.f32 %v1640, 1.0
    %v1642 = vrcp.pop %v1641
    %v1643 = vmul.f32 1.0, %v1642
    %v1644 = vrot.slane %v1628, 2
    %v1646 = vtanh.pop %v1644
    %v1647 = vrot.slane %v1628, 3
    %v1649 = vxor.u32 %v1647, 2147483648
    %v1650 = vmul.f32 %v1649, 1.442695
    %v1651 = vpow.pop %v1650
    %v1652 = vadd.f32 %v1651, 1.0
    %v1653 = vrcp.pop %v1652
    %v1654 = vmul.f32 1.0, %v1653
    %v1655 = vmul.f32 %v1643, %v1277
    %v1656 = vmul.f32 %v1634, %v1646
    %v1657 = vadd.f32 %v1655, %v1656
    %v1658 = vtanh.pop %v1657
    %v1659 = vmul.f32 %v1654, %v1658
    %1660 = vmatprep.subr.mxu0 %v158
    %1661 = vmatpush1.msra.mxu0 %v157
    %1662 = vmatprep.subr.mxu0 %v162
    %1663 = vmatpush1.msra.mxu0 %v161
    %1664 = vmatprep.subr.mxu0 %v166
    %1665 = vmatpush1.msra.mxu0 %v165
    %1666 = vmatprep.subr.mxu0 %v170
    %1667 = vmatpush1.msra.mxu0 %v169
    %1668 = vmatprep.subr.mxu0 %v174
    %1669 = vmatpush1.msra.mxu0 %v173
    %1670 = vmatprep.subr.mxu0 %v178
    %1671 = vmatpush1.msra.mxu0 %v177
    %1672 = vmatprep.subr.mxu0 %v182
    %1673 = vmatpush1.msra.mxu0 %v181
    %1674 = vmatprep.subr.mxu0 %v186
    %1675 = vmatpush1.msra.mxu0 %v185
    %1676 = vmatprep.subr.mxu0 %v190
    %1677 = vmatpush1.msra.mxu0 %v189
    %1678 = vmatprep.subr.mxu0 %v194
    %1679 = vmatpush1.msra.mxu0 %v193
    %1680 = vmatprep.subr.mxu0 %v198
    %1681 = vmatpush1.msra.mxu0 %v197
    %1682 = vmatprep.subr.mxu0 %v202
    %1683 = vmatpush1.msra.mxu0 %v201
    %1684 = vmatprep.subr.mxu0 %v206
    %1685 = vmatpush1.msra.mxu0 %v205
    %1686 = vmatprep.subr.mxu0 %v210
    %1687 = vmatpush1.msra.mxu0 %v209
    %1688 = vmatprep.subr.mxu0 %v214
    %1689 = vmatpush1.msra.mxu0 %v213
    %1690 = vmatprep.subr.mxu0 %v218
    %1691 = vmatpush1.msra.mxu0 %v217
    %1692 = vmatprep.subr.mxu0 %v222
    %1693 = vmatpush1.msra.mxu0 %v221
    %1694 = vmatprep.subr.mxu0 %v226
    %1695 = vmatpush1.msra.mxu0 %v225
    %1696 = vmatprep.subr.mxu0 %v230
    %1697 = vmatpush1.msra.mxu0 %v229
    %1698 = vmatprep.subr.mxu0 %v234
    %1699 = vmatpush1.msra.mxu0 %v233
    %1700 = vmatprep.subr.mxu0 %v238
    %1701 = vmatpush1.msra.mxu0 %v237
    %1702 = vmatprep.subr.mxu0 %v242
    %1703 = vmatpush1.msra.mxu0 %v241
    %1704 = vmatprep.subr.mxu0 %v246
    %1705 = vmatpush1.msra.mxu0 %v245
    %1706 = vmatprep.subr.mxu0 %v250
    %1707 = vmatpush1.msra.mxu0 %v249
    %1708 = vmatprep.subr.mxu0 %v254
    %1709 = vmatpush1.msra.mxu0 %v253
    %1710 = vmatprep.subr.mxu0 %v258
    %1711 = vmatpush1.msra.mxu0 %v257
    %1712 = vmatprep.subr.mxu0 %v262
    %1713 = vmatpush1.msra.mxu0 %v261
    %1714 = vmatprep.subr.mxu0 %v266
    %1715 = vmatpush1.msra.mxu0 %v265
    %1716 = vmatprep.subr.mxu0 %v270
    %1717 = vmatpush1.msra.mxu0 %v269
    %1718 = vmatprep.subr.mxu0 %v274
    %1719 = vmatpush1.msra.mxu0 %v273
    %1720 = vmatprep.subr.mxu0 %v278
    %1721 = vmatpush1.msra.mxu0 %v277
    %1722 = vmatprep.subr.mxu0 %v282
    %1723 = vmatpush1.msra.mxu0 %v281
    %1724 = vmatprep.mubr.f32.mxu0 %v1445
    %1725 = vmatmul.mubr.f32.gmra.mrb[0].mxu0 %v1659
    %v1726 = vpop.f32.mrb[0].mxu0
    %v1727 = vadd.f32 %v503, %v1726
    %v1728 = vpop.f32.mrb[0].mxu0
    %v1729 = vadd.f32 %v507, %v1728
    %1730 = vdwg.mxu0
    %1731 = vmatprep.subr.mxu0 %v160
    %1732 = vmatpush1.msra.mxu0 %v159
    %1733 = vmatprep.subr.mxu0 %v164
    %1734 = vmatpush1.msra.mxu0 %v163
    %1735 = vmatprep.subr.mxu0 %v168
    %1736 = vmatpush1.msra.mxu0 %v167
    %1737 = vmatprep.subr.mxu0 %v172
    %1738 = vmatpush1.msra.mxu0 %v171
    %1739 = vmatprep.subr.mxu0 %v176
    %1740 = vmatpush1.msra.mxu0 %v175
    %1741 = vmatprep.subr.mxu0 %v180
    %1742 = vmatpush1.msra.mxu0 %v179
    %1743 = vmatprep.subr.mxu0 %v184
    %1744 = vmatpush1.msra.mxu0 %v183
    %1745 = vmatprep.subr.mxu0 %v188
    %1746 = vmatpush1.msra.mxu0 %v187
    %1747 = vmatprep.subr.mxu0 %v192
    %1748 = vmatpush1.msra.mxu0 %v191
    %1749 = vmatprep.subr.mxu0 %v196
    %1750 = vmatpush1.msra.mxu0 %v195
    %1751 = vmatprep.subr.mxu0 %v200
    %1752 = vmatpush1.msra.mxu0 %v199
    %1753 = vmatprep.subr.mxu0 %v204
    %1754 = vmatpush1.msra.mxu0 %v203
    %1755 = vmatprep.subr.mxu0 %v208
    %1756 = vmatpush1.msra.mxu0 %v207
    %1757 = vmatprep.subr.mxu0 %v212
    %1758 = vmatpush1.msra.mxu0 %v211
    %1759 = vmatprep.subr.mxu0 %v216
    %1760 = vmatpush1.msra.mxu0 %v215
    %1761 = vmatprep.subr.mxu0 %v220
    %1762 = vmatpush1.msra.mxu0 %v219
    %1763 = vmatprep.subr.mxu0 %v224
    %1764 = vmatpush1.msra.mxu0 %v223
    %1765 = vmatprep.subr.mxu0 %v228
    %1766 = vmatpush1.msra.mxu0 %v227
    %1767 = vmatprep.subr.mxu0 %v232
    %1768 = vmatpush1.msra.mxu0 %v231
    %1769 = vmatprep.subr.mxu0 %v236
    %1770 = vmatpush1.msra.mxu0 %v235
    %1771 = vmatprep.subr.mxu0 %v240
    %1772 = vmatpush1.msra.mxu0 %v239
    %1773 = vmatprep.subr.mxu0 %v244
    %1774 = vmatpush1.msra.mxu0 %v243
    %1775 = vmatprep.subr.mxu0 %v248
    %1776 = vmatpush1.msra.mxu0 %v247
    %1777 = vmatprep.subr.mxu0 %v252
    %1778 = vmatpush1.msra.mxu0 %v251
    %1779 = vmatprep.subr.mxu0 %v256
    %1780 = vmatpush1.msra.mxu0 %v255
    %1781 = vmatprep.subr.mxu0 %v260
    %1782 = vmatpush1.msra.mxu0 %v259
    %1783 = vmatprep.subr.mxu0 %v264
    %1784 = vmatpush1.msra.mxu0 %v263
    %1785 = vmatprep.subr.mxu0 %v268
    %1786 = vmatpush1.msra.mxu0 %v267
    %1787 = vmatprep.subr.mxu0 %v272
    %1788 = vmatpush1.msra.mxu0 %v271
    %1789 = vmatprep.subr.mxu0 %v276
    %1790 = vmatpush1.msra.mxu0 %v275
    %1791 = vmatprep.subr.mxu0 %v280
    %1792 = vmatpush1.msra.mxu0 %v279
    %1793 = vmatprep.subr.mxu0 %v284
    %1794 = vmatpush1.msra.mxu0 %v283
    %1795 = vmatprep.mubr.f32.mxu0 %v1445
    %1796 = vmatmul.mubr.f32.gmra.mrb[0].mxu0 %v1659
    %v1797 = vpop.f32.mrb[0].mxu0
    %v1798 = vadd.f32 %v511, %v1797
    %v1799 = vpop.f32.mrb[0].mxu0
    %v1800 = vadd.f32 %v515, %v1799
    %1801 = vdwg.mxu0
    %v1802 = vxor.u32 %v1727, 2147483648
    %v1803 = vmul.f32 %v1802, 1.442695
    %v1804 = vpow.pop %v1803
    %v1805 = vadd.f32 %v1804, 1.0
    %v1806 = vrcp.pop %v1805
    %v1807 = vmul.f32 1.0, %v1806
    %v1808 = vxor.u32 %v1729, 2147483648
    %v1809 = vmul.f32 %v1808, 1.442695
    %v1810 = vpow.pop %v1809
    %v1811 = vadd.f32 %v1810, 1.0
    %v1812 = vrcp.pop %v1811
    %v1813 = vmul.f32 1.0, %v1812
    %v1814 = vtanh.pop %v1798
    %v1815 = vxor.u32 %v1800, 2147483648
    %v1816 = vmul.f32 %v1815, 1.442695
    %v1817 = vpow.pop %v1816
    %v1818 = vadd.f32 %v1817, 1.0
    %v1819 = vrcp.pop %v1818
    %v1820 = vmul.f32 1.0, %v1819
    %v1821 = vmul.f32 %v1813, %v1443
    %v1822 = vmul.f32 %v1807, %v1814
    %v1823 = vadd.f32 %v1821, %v1822
    %v1824 = vtanh.pop %v1823
    %v1825 = vmul.f32 %v1820, %v1824
    %1826 = vst [vmem:[#allocation2 + $0x3] sm:$0x1] %v1825
    %s1827 = sld [smem:[#allocation3 + $0x4]]
    %s1828 = sshra.s32 %s1827, 3
    %s1829 = sand.u32 %s1827, 7
    %s1830 = sshra.s32 %s1827, 3
    %s1831 = sand.u32 %s1827, 7
    %s1832 = smul.u32 %s1828, 4
    %s1833 = smul.u32 %s1832, 8
    %s1834 = sadd.s32 %s1833, %s1831
    %s1835 = scalar_lea.vmem [#allocation7], %s1834
    %v1836 = vld [vmem:[%s1835] ss:$8 sm:$0xf]
    %1837 = vmatprep.subr.mxu0 %v94
    %1838 = vmatpush1.msra.mxu0 %v93
    %1839 = vmatprep.subr.mxu0 %v98
    %1840 = vmatpush1.msra.mxu0 %v97
    %1841 = vmatprep.subr.mxu0 %v102
    %1842 = vmatpush1.msra.mxu0 %v101
    %1843 = vmatprep.subr.mxu0 %v106
    %1844 = vmatpush1.msra.mxu0 %v105
    %1845 = vmatprep.subr.mxu0 %v110
    %1846 = vmatpush1.msra.mxu0 %v109
    %1847 = vmatprep.subr.mxu0 %v114
    %1848 = vmatpush1.msra.mxu0 %v113
    %1849 = vmatprep.subr.mxu0 %v118
    %1850 = vmatpush1.msra.mxu0 %v117
    %1851 = vmatprep.subr.mxu0 %v122
    %1852 = vmatpush1.msra.mxu0 %v121
    %1853 = vmatprep.subr.mxu0 %v126
    %1854 = vmatpush1.msra.mxu0 %v125
    %1855 = vmatprep.subr.mxu0 %v130
    %1856 = vmatpush1.msra.mxu0 %v129
    %1857 = vmatprep.subr.mxu0 %v134
    %1858 = vmatpush1.msra.mxu0 %v133
    %1859 = vmatprep.subr.mxu0 %v138
    %1860 = vmatpush1.msra.mxu0 %v137
    %1861 = vmatprep.subr.mxu0 %v142
    %1862 = vmatpush1.msra.mxu0 %v141
    %1863 = vmatprep.subr.mxu0 %v146
    %1864 = vmatpush1.msra.mxu0 %v145
    %1865 = vmatprep.subr.mxu0 %v150
    %1866 = vmatpush1.msra.mxu0 %v149
    %1867 = vmatprep.subr.mxu0 %v154
    %1868 = vmatpush1.msra.mxu0 %v153
    %1869 = vmatprep.subr.mxu0 0.0
    %1870 = vmatpush1.msra.mxu0 0.0
    %1871 = vmatprep.subr.mxu0 0.0
    %1872 = vmatpush1.msra.mxu0 0.0
    %1873 = vmatprep.subr.mxu0 0.0
    %1874 = vmatpush1.msra.mxu0 0.0
    %1875 = vmatprep.subr.mxu0 0.0
    %1876 = vmatpush1.msra.mxu0 0.0
    %1877 = vmatprep.subr.mxu0 0.0
    %1878 = vmatpush1.msra.mxu0 0.0
    %1879 = vmatprep.subr.mxu0 0.0
    %1880 = vmatpush1.msra.mxu0 0.0
    %1881 = vmatprep.subr.mxu0 0.0
    %1882 = vmatpush1.msra.mxu0 0.0
    %1883 = vmatprep.subr.mxu0 0.0
    %1884 = vmatpush1.msra.mxu0 0.0
    %1885 = vmatprep.subr.mxu0 0.0
    %1886 = vmatpush1.msra.mxu0 0.0
    %1887 = vmatprep.subr.mxu0 0.0
    %1888 = vmatpush1.msra.mxu0 0.0
    %1889 = vmatprep.subr.mxu0 0.0
    %1890 = vmatpush1.msra.mxu0 0.0
    %1891 = vmatprep.subr.mxu0 0.0
    %1892 = vmatpush1.msra.mxu0 0.0
    %1893 = vmatprep.subr.mxu0 0.0
    %1894 = vmatpush1.msra.mxu0 0.0
    %1895 = vmatprep.subr.mxu0 0.0
    %1896 = vmatpush1.msra.mxu0 0.0
    %1897 = vmatprep.subr.mxu0 0.0
    %1898 = vmatpush1.msra.mxu0 0.0
    %1899 = vmatprep.subr.mxu0 0.0
    %1900 = vmatpush1.msra.mxu0 0.0
    %1901 = vmatprep.mubr.f32.mxu0 0.0
    %1902 = vmatmul.mubr.f32.gmra.mrb[0].mxu0 %v1659
    %v1903 = vpop.f32.mrb[0].mxu0
    %v1904 = vadd.f32 0.0, %v1903
    %v1905 = vpop.f32.mrb[0].mxu0
    %v1906 = vadd.f32 0.0, %v1905
    %1907 = vdwg.mxu0
    %1908 = vmatprep.subr.mxu0 %v96
    %1909 = vmatpush1.msra.mxu0 %v95
    %1910 = vmatprep.subr.mxu0 %v100
    %1911 = vmatpush1.msra.mxu0 %v99
    %1912 = vmatprep.subr.mxu0 %v104
    %1913 = vmatpush1.msra.mxu0 %v103
    %1914 = vmatprep.subr.mxu0 %v108
    %1915 = vmatpush1.msra.mxu0 %v107
    %1916 = vmatprep.subr.mxu0 %v112
    %1917 = vmatpush1.msra.mxu0 %v111
    %1918 = vmatprep.subr.mxu0 %v116
    %1919 = vmatpush1.msra.mxu0 %v115
    %1920 = vmatprep.subr.mxu0 %v120
    %1921 = vmatpush1.msra.mxu0 %v119
    %1922 = vmatprep.subr.mxu0 %v124
    %1923 = vmatpush1.msra.mxu0 %v123
    %1924 = vmatprep.subr.mxu0 %v128
    %1925 = vmatpush1.msra.mxu0 %v127
    %1926 = vmatprep.subr.mxu0 %v132
    %1927 = vmatpush1.msra.mxu0 %v131
    %1928 = vmatprep.subr.mxu0 %v136
    %1929 = vmatpush1.msra.mxu0 %v135
    %1930 = vmatprep.subr.mxu0 %v140
    %1931 = vmatpush1.msra.mxu0 %v139
    %1932 = vmatprep.subr.mxu0 %v144
    %1933 = vmatpush1.msra.mxu0 %v143
    %1934 = vmatprep.subr.mxu0 %v148
    %1935 = vmatpush1.msra.mxu0 %v147
    %1936 = vmatprep.subr.mxu0 %v152
    %1937 = vmatpush1.msra.mxu0 %v151
    %1938 = vmatprep.subr.mxu0 %v156
    %1939 = vmatpush1.msra.mxu0 %v155
    %1940 = vmatprep.subr.mxu0 0.0
    %1941 = vmatpush1.msra.mxu0 0.0
    %1942 = vmatprep.subr.mxu0 0.0
    %1943 = vmatpush1.msra.mxu0 0.0
    %1944 = vmatprep.subr.mxu0 0.0
    %1945 = vmatpush1.msra.mxu0 0.0
    %1946 = vmatprep.subr.mxu0 0.0
    %1947 = vmatpush1.msra.mxu0 0.0
    %1948 = vmatprep.subr.mxu0 0.0
    %1949 = vmatpush1.msra.mxu0 0.0
    %1950 = vmatprep.subr.mxu0 0.0
    %1951 = vmatpush1.msra.mxu0 0.0
    %1952 = vmatprep.subr.mxu0 0.0
    %1953 = vmatpush1.msra.mxu0 0.0
    %1954 = vmatprep.subr.mxu0 0.0
    %1955 = vmatpush1.msra.mxu0 0.0
    %1956 = vmatprep.subr.mxu0 0.0
    %1957 = vmatpush1.msra.mxu0 0.0
    %1958 = vmatprep.subr.mxu0 0.0
    %1959 = vmatpush1.msra.mxu0 0.0
    %1960 = vmatprep.subr.mxu0 0.0
    %1961 = vmatpush1.msra.mxu0 0.0
    %1962 = vmatprep.subr.mxu0 0.0
    %1963 = vmatpush1.msra.mxu0 0.0
    %1964 = vmatprep.subr.mxu0 0.0
    %1965 = vmatpush1.msra.mxu0 0.0
    %1966 = vmatprep.subr.mxu0 0.0
    %1967 = vmatpush1.msra.mxu0 0.0
    %1968 = vmatprep.subr.mxu0 0.0
    %1969 = vmatpush1.msra.mxu0 0.0
    %1970 = vmatprep.subr.mxu0 0.0
    %1971 = vmatpush1.msra.mxu0 0.0
    %1972 = vmatprep.mubr.f32.mxu0 0.0
    %1973 = vmatmul.mubr.f32.gmra.mrb[0].mxu0 %v1659
    %v1974 = vpop.f32.mrb[0].mxu0
    %v1975 = vadd.f32 0.0, %v1974
    %v1976 = vpop.f32.mrb[0].mxu0
    %v1977 = vadd.f32 0.0, %v1976
    %1978 = vdwg.mxu0
    %v1983 = vcombine.low %v1904, %v1906
    %v1984 = vcombine.low %v1975, %v1977
    %v1986 = vunpack.c.l.s4 1966171168
    %v1987 = vunpack.c.0.s8 %v1986
    %v1988 = vlaneseq
    %v1989 = vshrl.u32 %v1988, 7
    %v1990 = vsub.s32 %v1987, %v1989
    %v1991 = vrot.slane %v1983, %v1990
    %v1993 = vunpack.c.l.s4 1966171168
    %v1994 = vunpack.c.0.s8 %v1993
    %v1995 = vlaneseq
    %v1996 = vshrl.u32 %v1995, 7
    %v1997 = vsub.s32 %v1994, %v1996
    %v1998 = vrot.slane %v1984, %v1997
    %v1999 = vcombine.low %v1991, %v1998
    %v2001 = vunpack.c.l.s4 1966171168
    %v2002 = vunpack.c.0.s8 %v2001
    %v2003 = vlaneseq
    %v2004 = vshrl.u32 %v2003, 7
    %v2005 = vsub.s32 %v2002, %v2004
    %v2006 = vrot.slane %v1999, %v2005
    %v2008 = vadd.f32 %v1836, %v2006
    %v2009 = vxor.u32 %v2008, 2147483648
    %v2010 = vmul.f32 %v2009, 1.442695
    %v2011 = vpow.pop %v2010
    %v2012 = vadd.f32 %v2011, 1.0
    %v2013 = vrcp.pop %v2012
    %v2014 = vmul.f32 1.0, %v2013
    %v2016 = vrot.slane %v2008, 1
    %v2018 = vxor.u32 %v2016, 2147483648
    %v2019 = vmul.f32 %v2018, 1.442695
    %v2020 = vpow.pop %v2019
    %v2021 = vadd.f32 %v2020, 1.0
    %v2022 = vrcp.pop %v2021
    %v2023 = vmul.f32 1.0, %v2022
    %v2024 = vrot.slane %v2008, 2
    %v2026 = vtanh.pop %v2024
    %v2027 = vrot.slane %v2008, 3
    %v2029 = vxor.u32 %v2027, 2147483648
    %v2030 = vmul.f32 %v2029, 1.442695
    %v2031 = vpow.pop %v2030
    %v2032 = vadd.f32 %v2031, 1.0
    %v2033 = vrcp.pop %v2032
    %v2034 = vmul.f32 1.0, %v2033
    %v2035 = vmul.f32 %v2023, %v1657
    %v2036 = vmul.f32 %v2014, %v2026
    %v2037 = vadd.f32 %v2035, %v2036
    %v2038 = vtanh.pop %v2037
    %v2039 = vmul.f32 %v2034, %v2038
    %2040 = vmatprep.subr.mxu0 %v158
    %2041 = vmatpush1.msra.mxu0 %v157
    %2042 = vmatprep.subr.mxu0 %v162
    %2043 = vmatpush1.msra.mxu0 %v161
    %2044 = vmatprep.subr.mxu0 %v166
    %2045 = vmatpush1.msra.mxu0 %v165
    %2046 = vmatprep.subr.mxu0 %v170
    %2047 = vmatpush1.msra.mxu0 %v169
    %2048 = vmatprep.subr.mxu0 %v174
    %2049 = vmatpush1.msra.mxu0 %v173
    %2050 = vmatprep.subr.mxu0 %v178
    %2051 = vmatpush1.msra.mxu0 %v177
    %2052 = vmatprep.subr.mxu0 %v182
    %2053 = vmatpush1.msra.mxu0 %v181
    %2054 = vmatprep.subr.mxu0 %v186
    %2055 = vmatpush1.msra.mxu0 %v185
    %2056 = vmatprep.subr.mxu0 %v190
    %2057 = vmatpush1.msra.mxu0 %v189
    %2058 = vmatprep.subr.mxu0 %v194
    %2059 = vmatpush1.msra.mxu0 %v193
    %2060 = vmatprep.subr.mxu0 %v198
    %2061 = vmatpush1.msra.mxu0 %v197
    %2062 = vmatprep.subr.mxu0 %v202
    %2063 = vmatpush1.msra.mxu0 %v201
    %2064 = vmatprep.subr.mxu0 %v206
    %2065 = vmatpush1.msra.mxu0 %v205
    %2066 = vmatprep.subr.mxu0 %v210
    %2067 = vmatpush1.msra.mxu0 %v209
    %2068 = vmatprep.subr.mxu0 %v214
    %2069 = vmatpush1.msra.mxu0 %v213
    %2070 = vmatprep.subr.mxu0 %v218
    %2071 = vmatpush1.msra.mxu0 %v217
    %2072 = vmatprep.subr.mxu0 %v222
    %2073 = vmatpush1.msra.mxu0 %v221
    %2074 = vmatprep.subr.mxu0 %v226
    %2075 = vmatpush1.msra.mxu0 %v225
    %2076 = vmatprep.subr.mxu0 %v230
    %2077 = vmatpush1.msra.mxu0 %v229
    %2078 = vmatprep.subr.mxu0 %v234
    %2079 = vmatpush1.msra.mxu0 %v233
    %2080 = vmatprep.subr.mxu0 %v238
    %2081 = vmatpush1.msra.mxu0 %v237
    %2082 = vmatprep.subr.mxu0 %v242
    %2083 = vmatpush1.msra.mxu0 %v241
    %2084 = vmatprep.subr.mxu0 %v246
    %2085 = vmatpush1.msra.mxu0 %v245
    %2086 = vmatprep.subr.mxu0 %v250
    %2087 = vmatpush1.msra.mxu0 %v249
    %2088 = vmatprep.subr.mxu0 %v254
    %2089 = vmatpush1.msra.mxu0 %v253
    %2090 = vmatprep.subr.mxu0 %v258
    %2091 = vmatpush1.msra.mxu0 %v257
    %2092 = vmatprep.subr.mxu0 %v262
    %2093 = vmatpush1.msra.mxu0 %v261
    %2094 = vmatprep.subr.mxu0 %v266
    %2095 = vmatpush1.msra.mxu0 %v265
    %2096 = vmatprep.subr.mxu0 %v270
    %2097 = vmatpush1.msra.mxu0 %v269
    %2098 = vmatprep.subr.mxu0 %v274
    %2099 = vmatpush1.msra.mxu0 %v273
    %2100 = vmatprep.subr.mxu0 %v278
    %2101 = vmatpush1.msra.mxu0 %v277
    %2102 = vmatprep.subr.mxu0 %v282
    %2103 = vmatpush1.msra.mxu0 %v281
    %2104 = vmatprep.mubr.f32.mxu0 %v1825
    %2105 = vmatmul.mubr.f32.gmra.mrb[0].mxu0 %v2039
    %v2106 = vpop.f32.mrb[0].mxu0
    %v2107 = vadd.f32 %v503, %v2106
    %v2108 = vpop.f32.mrb[0].mxu0
    %v2109 = vadd.f32 %v507, %v2108
    %2110 = vdwg.mxu0
    %2111 = vmatprep.subr.mxu0 %v160
    %2112 = vmatpush1.msra.mxu0 %v159
    %2113 = vmatprep.subr.mxu0 %v164
    %2114 = vmatpush1.msra.mxu0 %v163
    %2115 = vmatprep.subr.mxu0 %v168
    %2116 = vmatpush1.msra.mxu0 %v167
    %2117 = vmatprep.subr.mxu0 %v172
    %2118 = vmatpush1.msra.mxu0 %v171
    %2119 = vmatprep.subr.mxu0 %v176
    %2120 = vmatpush1.msra.mxu0 %v175
    %2121 = vmatprep.subr.mxu0 %v180
    %2122 = vmatpush1.msra.mxu0 %v179
    %2123 = vmatprep.subr.mxu0 %v184
    %2124 = vmatpush1.msra.mxu0 %v183
    %2125 = vmatprep.subr.mxu0 %v188
    %2126 = vmatpush1.msra.mxu0 %v187
    %2127 = vmatprep.subr.mxu0 %v192
    %2128 = vmatpush1.msra.mxu0 %v191
    %2129 = vmatprep.subr.mxu0 %v196
    %2130 = vmatpush1.msra.mxu0 %v195
    %2131 = vmatprep.subr.mxu0 %v200
    %2132 = vmatpush1.msra.mxu0 %v199
    %2133 = vmatprep.subr.mxu0 %v204
    %2134 = vmatpush1.msra.mxu0 %v203
    %2135 = vmatprep.subr.mxu0 %v208
    %2136 = vmatpush1.msra.mxu0 %v207
    %2137 = vmatprep.subr.mxu0 %v212
    %2138 = vmatpush1.msra.mxu0 %v211
    %2139 = vmatprep.subr.mxu0 %v216
    %2140 = vmatpush1.msra.mxu0 %v215
    %2141 = vmatprep.subr.mxu0 %v220
    %2142 = vmatpush1.msra.mxu0 %v219
    %2143 = vmatprep.subr.mxu0 %v224
    %2144 = vmatpush1.msra.mxu0 %v223
    %2145 = vmatprep.subr.mxu0 %v228
    %2146 = vmatpush1.msra.mxu0 %v227
    %2147 = vmatprep.subr.mxu0 %v232
    %2148 = vmatpush1.msra.mxu0 %v231
    %2149 = vmatprep.subr.mxu0 %v236
    %2150 = vmatpush1.msra.mxu0 %v235
    %2151 = vmatprep.subr.mxu0 %v240
    %2152 = vmatpush1.msra.mxu0 %v239
    %2153 = vmatprep.subr.mxu0 %v244
    %2154 = vmatpush1.msra.mxu0 %v243
    %2155 = vmatprep.subr.mxu0 %v248
    %2156 = vmatpush1.msra.mxu0 %v247
    %2157 = vmatprep.subr.mxu0 %v252
    %2158 = vmatpush1.msra.mxu0 %v251
    %2159 = vmatprep.subr.mxu0 %v256
    %2160 = vmatpush1.msra.mxu0 %v255
    %2161 = vmatprep.subr.mxu0 %v260
    %2162 = vmatpush1.msra.mxu0 %v259
    %2163 = vmatprep.subr.mxu0 %v264
    %2164 = vmatpush1.msra.mxu0 %v263
    %2165 = vmatprep.subr.mxu0 %v268
    %2166 = vmatpush1.msra.mxu0 %v267
    %2167 = vmatprep.subr.mxu0 %v272
    %2168 = vmatpush1.msra.mxu0 %v271
    %2169 = vmatprep.subr.mxu0 %v276
    %2170 = vmatpush1.msra.mxu0 %v275
    %2171 = vmatprep.subr.mxu0 %v280
    %2172 = vmatpush1.msra.mxu0 %v279
    %2173 = vmatprep.subr.mxu0 %v284
    %2174 = vmatpush1.msra.mxu0 %v283
    %2175 = vmatprep.mubr.f32.mxu0 %v1825
    %2176 = vmatmul.mubr.f32.gmra.mrb[0].mxu0 %v2039
    %v2177 = vpop.f32.mrb[0].mxu0
    %v2178 = vadd.f32 %v511, %v2177
    %v2179 = vpop.f32.mrb[0].mxu0
    %v2180 = vadd.f32 %v515, %v2179
    %2181 = vdwg.mxu0
    %v2182 = vxor.u32 %v2107, 2147483648
    %v2183 = vmul.f32 %v2182, 1.442695
    %v2184 = vpow.pop %v2183
    %v2185 = vadd.f32 %v2184, 1.0
    %v2186 = vrcp.pop %v2185
    %v2187 = vmul.f32 1.0, %v2186
    %v2188 = vxor.u32 %v2109, 2147483648
    %v2189 = vmul.f32 %v2188, 1.442695
    %v2190 = vpow.pop %v2189
    %v2191 = vadd.f32 %v2190, 1.0
    %v2192 = vrcp.pop %v2191
    %v2193 = vmul.f32 1.0, %v2192
    %v2194 = vtanh.pop %v2178
    %v2195 = vxor.u32 %v2180, 2147483648
    %v2196 = vmul.f32 %v2195, 1.442695
    %v2197 = vpow.pop %v2196
    %v2198 = vadd.f32 %v2197, 1.0
    %v2199 = vrcp.pop %v2198
    %v2200 = vmul.f32 1.0, %v2199
    %v2201 = vmul.f32 %v2193, %v1823
    %v2202 = vmul.f32 %v2187, %v2194
    %v2203 = vadd.f32 %v2201, %v2202
    %v2204 = vtanh.pop %v2203
    %v2205 = vmul.f32 %v2200, %v2204
    %2206 = vst [vmem:[#allocation2 + $0x4] sm:$0x1] %v2205
    %s2207 = sld [smem:[#allocation3 + $0x5]]
    %s2208 = sshra.s32 %s2207, 3
    %s2209 = sand.u32 %s2207, 7
    %s2210 = sshra.s32 %s2207, 3
    %s2211 = sand.u32 %s2207, 7
    %s2212 = smul.u32 %s2208, 4
    %s2213 = smul.u32 %s2212, 8
    %s2214 = sadd.s32 %s2213, %s2211
    %s2215 = scalar_lea.vmem [#allocation7], %s2214
    %v2216 = vld [vmem:[%s2215] ss:$8 sm:$0xf]
    %2217 = vmatprep.subr.mxu0 %v94
    %2218 = vmatpush1.msra.mxu0 %v93
    %2219 = vmatprep.subr.mxu0 %v98
    %2220 = vmatpush1.msra.mxu0 %v97
    %2221 = vmatprep.subr.mxu0 %v102
    %2222 = vmatpush1.msra.mxu0 %v101
    %2223 = vmatprep.subr.mxu0 %v106
    %2224 = vmatpush1.msra.mxu0 %v105
    %2225 = vmatprep.subr.mxu0 %v110
    %2226 = vmatpush1.msra.mxu0 %v109
    %2227 = vmatprep.subr.mxu0 %v114
    %2228 = vmatpush1.msra.mxu0 %v113
    %2229 = vmatprep.subr.mxu0 %v118
    %2230 = vmatpush1.msra.mxu0 %v117
    %2231 = vmatprep.subr.mxu0 %v122
    %2232 = vmatpush1.msra.mxu0 %v121
    %2233 = vmatprep.subr.mxu0 %v126
    %2234 = vmatpush1.msra.mxu0 %v125
    %2235 = vmatprep.subr.mxu0 %v130
    %2236 = vmatpush1.msra.mxu0 %v129
    %2237 = vmatprep.subr.mxu0 %v134
    %2238 = vmatpush1.msra.mxu0 %v133
    %2239 = vmatprep.subr.mxu0 %v138
    %2240 = vmatpush1.msra.mxu0 %v137
    %2241 = vmatprep.subr.mxu0 %v142
    %2242 = vmatpush1.msra.mxu0 %v141
    %2243 = vmatprep.subr.mxu0 %v146
    %2244 = vmatpush1.msra.mxu0 %v145
    %2245 = vmatprep.subr.mxu0 %v150
    %2246 = vmatpush1.msra.mxu0 %v149
    %2247 = vmatprep.subr.mxu0 %v154
    %2248 = vmatpush1.msra.mxu0 %v153
    %2249 = vmatprep.subr.mxu0 0.0
    %2250 = vmatpush1.msra.mxu0 0.0
    %2251 = vmatprep.subr.mxu0 0.0
    %2252 = vmatpush1.msra.mxu0 0.0
    %2253 = vmatprep.subr.mxu0 0.0
    %2254 = vmatpush1.msra.mxu0 0.0
    %2255 = vmatprep.subr.mxu0 0.0
    %2256 = vmatpush1.msra.mxu0 0.0
    %2257 = vmatprep.subr.mxu0 0.0
    %2258 = vmatpush1.msra.mxu0 0.0
    %2259 = vmatprep.subr.mxu0 0.0
    %2260 = vmatpush1.msra.mxu0 0.0
    %2261 = vmatprep.subr.mxu0 0.0
    %2262 = vmatpush1.msra.mxu0 0.0
    %2263 = vmatprep.subr.mxu0 0.0
    %2264 = vmatpush1.msra.mxu0 0.0
    %2265 = vmatprep.subr.mxu0 0.0
    %2266 = vmatpush1.msra.mxu0 0.0
    %2267 = vmatprep.subr.mxu0 0.0
    %2268 = vmatpush1.msra.mxu0 0.0
    %2269 = vmatprep.subr.mxu0 0.0
    %2270 = vmatpush1.msra.mxu0 0.0
    %2271 = vmatprep.subr.mxu0 0.0
    %2272 = vmatpush1.msra.mxu0 0.0
    %2273 = vmatprep.subr.mxu0 0.0
    %2274 = vmatpush1.msra.mxu0 0.0
    %2275 = vmatprep.subr.mxu0 0.0
    %2276 = vmatpush1.msra.mxu0 0.0
    %2277 = vmatprep.subr.mxu0 0.0
    %2278 = vmatpush1.msra.mxu0 0.0
    %2279 = vmatprep.subr.mxu0 0.0
    %2280 = vmatpush1.msra.mxu0 0.0
    %2281 = vmatprep.mubr.f32.mxu0 0.0
    %2282 = vmatmul.mubr.f32.gmra.mrb[0].mxu0 %v2039
    %v2283 = vpop.f32.mrb[0].mxu0
    %v2284 = vadd.f32 0.0, %v2283
    %v2285 = vpop.f32.mrb[0].mxu0
    %v2286 = vadd.f32 0.0, %v2285
    %2287 = vdwg.mxu0
    %2288 = vmatprep.subr.mxu0 %v96
    %2289 = vmatpush1.msra.mxu0 %v95
    %2290 = vmatprep.subr.mxu0 %v100
    %2291 = vmatpush1.msra.mxu0 %v99
    %2292 = vmatprep.subr.mxu0 %v104
    %2293 = vmatpush1.msra.mxu0 %v103
    %2294 = vmatprep.subr.mxu0 %v108
    %2295 = vmatpush1.msra.mxu0 %v107
    %2296 = vmatprep.subr.mxu0 %v112
    %2297 = vmatpush1.msra.mxu0 %v111
    %2298 = vmatprep.subr.mxu0 %v116
    %2299 = vmatpush1.msra.mxu0 %v115
    %2300 = vmatprep.subr.mxu0 %v120
    %2301 = vmatpush1.msra.mxu0 %v119
    %2302 = vmatprep.subr.mxu0 %v124
    %2303 = vmatpush1.msra.mxu0 %v123
    %2304 = vmatprep.subr.mxu0 %v128
    %2305 = vmatpush1.msra.mxu0 %v127
    %2306 = vmatprep.subr.mxu0 %v132
    %2307 = vmatpush1.msra.mxu0 %v131
    %2308 = vmatprep.subr.mxu0 %v136
    %2309 = vmatpush1.msra.mxu0 %v135
    %2310 = vmatprep.subr.mxu0 %v140
    %2311 = vmatpush1.msra.mxu0 %v139
    %2312 = vmatprep.subr.mxu0 %v144
    %2313 = vmatpush1.msra.mxu0 %v143
    %2314 = vmatprep.subr.mxu0 %v148
    %2315 = vmatpush1.msra.mxu0 %v147
    %2316 = vmatprep.subr.mxu0 %v152
    %2317 = vmatpush1.msra.mxu0 %v151
    %2318 = vmatprep.subr.mxu0 %v156
    %2319 = vmatpush1.msra.mxu0 %v155
    %2320 = vmatprep.subr.mxu0 0.0
    %2321 = vmatpush1.msra.mxu0 0.0
    %2322 = vmatprep.subr.mxu0 0.0
    %2323 = vmatpush1.msra.mxu0 0.0
    %2324 = vmatprep.subr.mxu0 0.0
    %2325 = vmatpush1.msra.mxu0 0.0
    %2326 = vmatprep.subr.mxu0 0.0
    %2327 = vmatpush1.msra.mxu0 0.0
    %2328 = vmatprep.subr.mxu0 0.0
    %2329 = vmatpush1.msra.mxu0 0.0
    %2330 = vmatprep.subr.mxu0 0.0
    %2331 = vmatpush1.msra.mxu0 0.0
    %2332 = vmatprep.subr.mxu0 0.0
    %2333 = vmatpush1.msra.mxu0 0.0
    %2334 = vmatprep.subr.mxu0 0.0
    %2335 = vmatpush1.msra.mxu0 0.0
    %2336 = vmatprep.subr.mxu0 0.0
    %2337 = vmatpush1.msra.mxu0 0.0
    %2338 = vmatprep.subr.mxu0 0.0
    %2339 = vmatpush1.msra.mxu0 0.0
    %2340 = vmatprep.subr.mxu0 0.0
    %2341 = vmatpush1.msra.mxu0 0.0
    %2342 = vmatprep.subr.mxu0 0.0
    %2343 = vmatpush1.msra.mxu0 0.0
    %2344 = vmatprep.subr.mxu0 0.0
    %2345 = vmatpush1.msra.mxu0 0.0
    %2346 = vmatprep.subr.mxu0 0.0
    %2347 = vmatpush1.msra.mxu0 0.0
    %2348 = vmatprep.subr.mxu0 0.0
    %2349 = vmatpush1.msra.mxu0 0.0
    %2350 = vmatprep.subr.mxu0 0.0
    %2351 = vmatpush1.msra.mxu0 0.0
    %2352 = vmatprep.mubr.f32.mxu0 0.0
    %2353 = vmatmul.mubr.f32.gmra.mrb[0].mxu0 %v2039
    %v2354 = vpop.f32.mrb[0].mxu0
    %v2355 = vadd.f32 0.0, %v2354
    %v2356 = vpop.f32.mrb[0].mxu0
    %v2357 = vadd.f32 0.0, %v2356
    %2358 = vdwg.mxu0
    %v2363 = vcombine.low %v2284, %v2286
    %v2364 = vcombine.low %v2355, %v2357
    %v2366 = vunpack.c.l.s4 1966171168
    %v2367 = vunpack.c.0.s8 %v2366
    %v2368 = vlaneseq
    %v2369 = vshrl.u32 %v2368, 7
    %v2370 = vsub.s32 %v2367, %v2369
    %v2371 = vrot.slane %v2363, %v2370
    %v2373 = vunpack.c.l.s4 1966171168
    %v2374 = vunpack.c.0.s8 %v2373
    %v2375 = vlaneseq
    %v2376 = vshrl.u32 %v2375, 7
    %v2377 = vsub.s32 %v2374, %v2376
    %v2378 = vrot.slane %v2364, %v2377
    %v2379 = vcombine.low %v2371, %v2378
    %v2381 = vunpack.c.l.s4 1966171168
    %v2382 = vunpack.c.0.s8 %v2381
    %v2383 = vlaneseq
    %v2384 = vshrl.u32 %v2383, 7
    %v2385 = vsub.s32 %v2382, %v2384
    %v2386 = vrot.slane %v2379, %v2385
    %v2388 = vadd.f32 %v2216, %v2386
    %v2389 = vxor.u32 %v2388, 2147483648
    %v2390 = vmul.f32 %v2389, 1.442695
    %v2391 = vpow.pop %v2390
    %v2392 = vadd.f32 %v2391, 1.0
    %v2393 = vrcp.pop %v2392
    %v2394 = vmul.f32 1.0, %v2393
    %v2396 = vrot.slane %v2388, 1
    %v2398 = vxor.u32 %v2396, 2147483648
    %v2399 = vmul.f32 %v2398, 1.442695
    %v2400 = vpow.pop %v2399
    %v2401 = vadd.f32 %v2400, 1.0
    %v2402 = vrcp.pop %v2401
    %v2403 = vmul.f32 1.0, %v2402
    %v2404 = vrot.slane %v2388, 2
    %v2406 = vtanh.pop %v2404
    %v2407 = vrot.slane %v2388, 3
    %v2409 = vxor.u32 %v2407, 2147483648
    %v2410 = vmul.f32 %v2409, 1.442695
    %v2411 = vpow.pop %v2410
    %v2412 = vadd.f32 %v2411, 1.0
    %v2413 = vrcp.pop %v2412
    %v2414 = vmul.f32 1.0, %v2413
    %v2415 = vmul.f32 %v2403, %v2037
    %v2416 = vmul.f32 %v2394, %v2406
    %v2417 = vadd.f32 %v2415, %v2416
    %v2418 = vtanh.pop %v2417
    %v2419 = vmul.f32 %v2414, %v2418
    %2420 = vmatprep.subr.mxu0 %v158
    %2421 = vmatpush1.msra.mxu0 %v157
    %2422 = vmatprep.subr.mxu0 %v162
    %2423 = vmatpush1.msra.mxu0 %v161
    %2424 = vmatprep.subr.mxu0 %v166
    %2425 = vmatpush1.msra.mxu0 %v165
    %2426 = vmatprep.subr.mxu0 %v170
    %2427 = vmatpush1.msra.mxu0 %v169
    %2428 = vmatprep.subr.mxu0 %v174
    %2429 = vmatpush1.msra.mxu0 %v173
    %2430 = vmatprep.subr.mxu0 %v178
    %2431 = vmatpush1.msra.mxu0 %v177
    %2432 = vmatprep.subr.mxu0 %v182
    %2433 = vmatpush1.msra.mxu0 %v181
    %2434 = vmatprep.subr.mxu0 %v186
    %2435 = vmatpush1.msra.mxu0 %v185
    %2436 = vmatprep.subr.mxu0 %v190
    %2437 = vmatpush1.msra.mxu0 %v189
    %2438 = vmatprep.subr.mxu0 %v194
    %2439 = vmatpush1.msra.mxu0 %v193
    %2440 = vmatprep.subr.mxu0 %v198
    %2441 = vmatpush1.msra.mxu0 %v197
    %2442 = vmatprep.subr.mxu0 %v202
    %2443 = vmatpush1.msra.mxu0 %v201
    %2444 = vmatprep.subr.mxu0 %v206
    %2445 = vmatpush1.msra.mxu0 %v205
    %2446 = vmatprep.subr.mxu0 %v210
    %2447 = vmatpush1.msra.mxu0 %v209
    %2448 = vmatprep.subr.mxu0 %v214
    %2449 = vmatpush1.msra.mxu0 %v213
    %2450 = vmatprep.subr.mxu0 %v218
    %2451 = vmatpush1.msra.mxu0 %v217
    %2452 = vmatprep.subr.mxu0 %v222
    %2453 = vmatpush1.msra.mxu0 %v221
    %2454 = vmatprep.subr.mxu0 %v226
    %2455 = vmatpush1.msra.mxu0 %v225
    %2456 = vmatprep.subr.mxu0 %v230
    %2457 = vmatpush1.msra.mxu0 %v229
    %2458 = vmatprep.subr.mxu0 %v234
    %2459 = vmatpush1.msra.mxu0 %v233
    %2460 = vmatprep.subr.mxu0 %v238
    %2461 = vmatpush1.msra.mxu0 %v237
    %2462 = vmatprep.subr.mxu0 %v242
    %2463 = vmatpush1.msra.mxu0 %v241
    %2464 = vmatprep.subr.mxu0 %v246
    %2465 = vmatpush1.msra.mxu0 %v245
    %2466 = vmatprep.subr.mxu0 %v250
    %2467 = vmatpush1.msra.mxu0 %v249
    %2468 = vmatprep.subr.mxu0 %v254
    %2469 = vmatpush1.msra.mxu0 %v253
    %2470 = vmatprep.subr.mxu0 %v258
    %2471 = vmatpush1.msra.mxu0 %v257
    %2472 = vmatprep.subr.mxu0 %v262
    %2473 = vmatpush1.msra.mxu0 %v261
    %2474 = vmatprep.subr.mxu0 %v266
    %2475 = vmatpush1.msra.mxu0 %v265
    %2476 = vmatprep.subr.mxu0 %v270
    %2477 = vmatpush1.msra.mxu0 %v269
    %2478 = vmatprep.subr.mxu0 %v274
    %2479 = vmatpush1.msra.mxu0 %v273
    %2480 = vmatprep.subr.mxu0 %v278
    %2481 = vmatpush1.msra.mxu0 %v277
    %2482 = vmatprep.subr.mxu0 %v282
    %2483 = vmatpush1.msra.mxu0 %v281
    %2484 = vmatprep.mubr.f32.mxu0 %v2205
    %2485 = vmatmul.mubr.f32.gmra.mrb[0].mxu0 %v2419
    %v2486 = vpop.f32.mrb[0].mxu0
    %v2487 = vadd.f32 %v503, %v2486
    %v2488 = vpop.f32.mrb[0].mxu0
    %v2489 = vadd.f32 %v507, %v2488
    %2490 = vdwg.mxu0
    %2491 = vmatprep.subr.mxu0 %v160
    %2492 = vmatpush1.msra.mxu0 %v159
    %2493 = vmatprep.subr.mxu0 %v164
    %2494 = vmatpush1.msra.mxu0 %v163
    %2495 = vmatprep.subr.mxu0 %v168
    %2496 = vmatpush1.msra.mxu0 %v167
    %2497 = vmatprep.subr.mxu0 %v172
    %2498 = vmatpush1.msra.mxu0 %v171
    %2499 = vmatprep.subr.mxu0 %v176
    %2500 = vmatpush1.msra.mxu0 %v175
    %2501 = vmatprep.subr.mxu0 %v180
    %2502 = vmatpush1.msra.mxu0 %v179
    %2503 = vmatprep.subr.mxu0 %v184
    %2504 = vmatpush1.msra.mxu0 %v183
    %2505 = vmatprep.subr.mxu0 %v188
    %2506 = vmatpush1.msra.mxu0 %v187
    %2507 = vmatprep.subr.mxu0 %v192
    %2508 = vmatpush1.msra.mxu0 %v191
    %2509 = vmatprep.subr.mxu0 %v196
    %2510 = vmatpush1.msra.mxu0 %v195
    %2511 = vmatprep.subr.mxu0 %v200
    %2512 = vmatpush1.msra.mxu0 %v199
    %2513 = vmatprep.subr.mxu0 %v204
    %2514 = vmatpush1.msra.mxu0 %v203
    %2515 = vmatprep.subr.mxu0 %v208
    %2516 = vmatpush1.msra.mxu0 %v207
    %2517 = vmatprep.subr.mxu0 %v212
    %2518 = vmatpush1.msra.mxu0 %v211
    %2519 = vmatprep.subr.mxu0 %v216
    %2520 = vmatpush1.msra.mxu0 %v215
    %2521 = vmatprep.subr.mxu0 %v220
    %2522 = vmatpush1.msra.mxu0 %v219
    %2523 = vmatprep.subr.mxu0 %v224
    %2524 = vmatpush1.msra.mxu0 %v223
    %2525 = vmatprep.subr.mxu0 %v228
    %2526 = vmatpush1.msra.mxu0 %v227
    %2527 = vmatprep.subr.mxu0 %v232
    %2528 = vmatpush1.msra.mxu0 %v231
    %2529 = vmatprep.subr.mxu0 %v236
    %2530 = vmatpush1.msra.mxu0 %v235
    %2531 = vmatprep.subr.mxu0 %v240
    %2532 = vmatpush1.msra.mxu0 %v239
    %2533 = vmatprep.subr.mxu0 %v244
    %2534 = vmatpush1.msra.mxu0 %v243
    %2535 = vmatprep.subr.mxu0 %v248
    %2536 = vmatpush1.msra.mxu0 %v247
    %2537 = vmatprep.subr.mxu0 %v252
    %2538 = vmatpush1.msra.mxu0 %v251
    %2539 = vmatprep.subr.mxu0 %v256
    %2540 = vmatpush1.msra.mxu0 %v255
    %2541 = vmatprep.subr.mxu0 %v260
    %2542 = vmatpush1.msra.mxu0 %v259
    %2543 = vmatprep.subr.mxu0 %v264
    %2544 = vmatpush1.msra.mxu0 %v263
    %2545 = vmatprep.subr.mxu0 %v268
    %2546 = vmatpush1.msra.mxu0 %v267
    %2547 = vmatprep.subr.mxu0 %v272
    %2548 = vmatpush1.msra.mxu0 %v271
    %2549 = vmatprep.subr.mxu0 %v276
    %2550 = vmatpush1.msra.mxu0 %v275
    %2551 = vmatprep.subr.mxu0 %v280
    %2552 = vmatpush1.msra.mxu0 %v279
    %2553 = vmatprep.subr.mxu0 %v284
    %2554 = vmatpush1.msra.mxu0 %v283
    %2555 = vmatprep.mubr.f32.mxu0 %v2205
    %2556 = vmatmul.mubr.f32.gmra.mrb[0].mxu0 %v2419
    %v2557 = vpop.f32.mrb[0].mxu0
    %v2558 = vadd.f32 %v511, %v2557
    %v2559 = vpop.f32.mrb[0].mxu0
    %v2560 = vadd.f32 %v515, %v2559
    %2561 = vdwg.mxu0
    %v2562 = vxor.u32 %v2487, 2147483648
    %v2563 = vmul.f32 %v2562, 1.442695
    %v2564 = vpow.pop %v2563
    %v2565 = vadd.f32 %v2564, 1.0
    %v2566 = vrcp.pop %v2565
    %v2567 = vmul.f32 1.0, %v2566
    %v2568 = vxor.u32 %v2489, 2147483648
    %v2569 = vmul.f32 %v2568, 1.442695
    %v2570 = vpow.pop %v2569
    %v2571 = vadd.f32 %v2570, 1.0
    %v2572 = vrcp.pop %v2571
    %v2573 = vmul.f32 1.0, %v2572
    %v2574 = vtanh.pop %v2558
    %v2575 = vxor.u32 %v2560, 2147483648
    %v2576 = vmul.f32 %v2575, 1.442695
    %v2577 = vpow.pop %v2576
    %v2578 = vadd.f32 %v2577, 1.0
    %v2579 = vrcp.pop %v2578
    %v2580 = vmul.f32 1.0, %v2579
    %v2581 = vmul.f32 %v2573, %v2203
    %v2582 = vmul.f32 %v2567, %v2574
    %v2583 = vadd.f32 %v2581, %v2582
    %v2584 = vtanh.pop %v2583
    %v2585 = vmul.f32 %v2580, %v2584
    %2586 = vst [vmem:[#allocation2 + $0x5] sm:$0x1] %v2585
    %s2587 = sld [smem:[#allocation3 + $0x6]]
    %s2588 = sshra.s32 %s2587, 3
    %s2589 = sand.u32 %s2587, 7
    %s2590 = sshra.s32 %s2587, 3
    %s2591 = sand.u32 %s2587, 7
    %s2592 = smul.u32 %s2588, 4
    %s2593 = smul.u32 %s2592, 8
    %s2594 = sadd.s32 %s2593, %s2591
    %s2595 = scalar_lea.vmem [#allocation7], %s2594
    %v2596 = vld [vmem:[%s2595] ss:$8 sm:$0xf]
    %2597 = vmatprep.subr.mxu0 %v94
    %2598 = vmatpush1.msra.mxu0 %v93
    %2599 = vmatprep.subr.mxu0 %v98
    %2600 = vmatpush1.msra.mxu0 %v97
    %2601 = vmatprep.subr.mxu0 %v102
    %2602 = vmatpush1.msra.mxu0 %v101
    %2603 = vmatprep.subr.mxu0 %v106
    %2604 = vmatpush1.msra.mxu0 %v105
    %2605 = vmatprep.subr.mxu0 %v110
    %2606 = vmatpush1.msra.mxu0 %v109
    %2607 = vmatprep.subr.mxu0 %v114
    %2608 = vmatpush1.msra.mxu0 %v113
    %2609 = vmatprep.subr.mxu0 %v118
    %2610 = vmatpush1.msra.mxu0 %v117
    %2611 = vmatprep.subr.mxu0 %v122
    %2612 = vmatpush1.msra.mxu0 %v121
    %2613 = vmatprep.subr.mxu0 %v126
    %2614 = vmatpush1.msra.mxu0 %v125
    %2615 = vmatprep.subr.mxu0 %v130
    %2616 = vmatpush1.msra.mxu0 %v129
    %2617 = vmatprep.subr.mxu0 %v134
    %2618 = vmatpush1.msra.mxu0 %v133
    %2619 = vmatprep.subr.mxu0 %v138
    %2620 = vmatpush1.msra.mxu0 %v137
    %2621 = vmatprep.subr.mxu0 %v142
    %2622 = vmatpush1.msra.mxu0 %v141
    %2623 = vmatprep.subr.mxu0 %v146
    %2624 = vmatpush1.msra.mxu0 %v145
    %2625 = vmatprep.subr.mxu0 %v150
    %2626 = vmatpush1.msra.mxu0 %v149
    %2627 = vmatprep.subr.mxu0 %v154
    %2628 = vmatpush1.msra.mxu0 %v153
    %2629 = vmatprep.subr.mxu0 0.0
    %2630 = vmatpush1.msra.mxu0 0.0
    %2631 = vmatprep.subr.mxu0 0.0
    %2632 = vmatpush1.msra.mxu0 0.0
    %2633 = vmatprep.subr.mxu0 0.0
    %2634 = vmatpush1.msra.mxu0 0.0
    %2635 = vmatprep.subr.mxu0 0.0
    %2636 = vmatpush1.msra.mxu0 0.0
    %2637 = vmatprep.subr.mxu0 0.0
    %2638 = vmatpush1.msra.mxu0 0.0
    %2639 = vmatprep.subr.mxu0 0.0
    %2640 = vmatpush1.msra.mxu0 0.0
    %2641 = vmatprep.subr.mxu0 0.0
    %2642 = vmatpush1.msra.mxu0 0.0
    %2643 = vmatprep.subr.mxu0 0.0
    %2644 = vmatpush1.msra.mxu0 0.0
    %2645 = vmatprep.subr.mxu0 0.0
    %2646 = vmatpush1.msra.mxu0 0.0
    %2647 = vmatprep.subr.mxu0 0.0
    %2648 = vmatpush1.msra.mxu0 0.0
    %2649 = vmatprep.subr.mxu0 0.0
    %2650 = vmatpush1.msra.mxu0 0.0
    %2651 = vmatprep.subr.mxu0 0.0
    %2652 = vmatpush1.msra.mxu0 0.0
    %2653 = vmatprep.subr.mxu0 0.0
    %2654 = vmatpush1.msra.mxu0 0.0
    %2655 = vmatprep.subr.mxu0 0.0
    %2656 = vmatpush1.msra.mxu0 0.0
    %2657 = vmatprep.subr.mxu0 0.0
    %2658 = vmatpush1.msra.mxu0 0.0
    %2659 = vmatprep.subr.mxu0 0.0
    %2660 = vmatpush1.msra.mxu0 0.0
    %2661 = vmatprep.mubr.f32.mxu0 0.0
    %2662 = vmatmul.mubr.f32.gmra.mrb[0].mxu0 %v2419
    %v2663 = vpop.f32.mrb[0].mxu0
    %v2664 = vadd.f32 0.0, %v2663
    %v2665 = vpop.f32.mrb[0].mxu0
    %v2666 = vadd.f32 0.0, %v2665
    %2667 = vdwg.mxu0
    %2668 = vmatprep.subr.mxu0 %v96
    %2669 = vmatpush1.msra.mxu0 %v95
    %2670 = vmatprep.subr.mxu0 %v100
    %2671 = vmatpush1.msra.mxu0 %v99
    %2672 = vmatprep.subr.mxu0 %v104
    %2673 = vmatpush1.msra.mxu0 %v103
    %2674 = vmatprep.subr.mxu0 %v108
    %2675 = vmatpush1.msra.mxu0 %v107
    %2676 = vmatprep.subr.mxu0 %v112
    %2677 = vmatpush1.msra.mxu0 %v111
    %2678 = vmatprep.subr.mxu0 %v116
    %2679 = vmatpush1.msra.mxu0 %v115
    %2680 = vmatprep.subr.mxu0 %v120
    %2681 = vmatpush1.msra.mxu0 %v119
    %2682 = vmatprep.subr.mxu0 %v124
    %2683 = vmatpush1.msra.mxu0 %v123
    %2684 = vmatprep.subr.mxu0 %v128
    %2685 = vmatpush1.msra.mxu0 %v127
    %2686 = vmatprep.subr.mxu0 %v132
    %2687 = vmatpush1.msra.mxu0 %v131
    %2688 = vmatprep.subr.mxu0 %v136
    %2689 = vmatpush1.msra.mxu0 %v135
    %2690 = vmatprep.subr.mxu0 %v140
    %2691 = vmatpush1.msra.mxu0 %v139
    %2692 = vmatprep.subr.mxu0 %v144
    %2693 = vmatpush1.msra.mxu0 %v143
    %2694 = vmatprep.subr.mxu0 %v148
    %2695 = vmatpush1.msra.mxu0 %v147
    %2696 = vmatprep.subr.mxu0 %v152
    %2697 = vmatpush1.msra.mxu0 %v151
    %2698 = vmatprep.subr.mxu0 %v156
    %2699 = vmatpush1.msra.mxu0 %v155
    %2700 = vmatprep.subr.mxu0 0.0
    %2701 = vmatpush1.msra.mxu0 0.0
    %2702 = vmatprep.subr.mxu0 0.0
    %2703 = vmatpush1.msra.mxu0 0.0
    %2704 = vmatprep.subr.mxu0 0.0
    %2705 = vmatpush1.msra.mxu0 0.0
    %2706 = vmatprep.subr.mxu0 0.0
    %2707 = vmatpush1.msra.mxu0 0.0
    %2708 = vmatprep.subr.mxu0 0.0
    %2709 = vmatpush1.msra.mxu0 0.0
    %2710 = vmatprep.subr.mxu0 0.0
    %2711 = vmatpush1.msra.mxu0 0.0
    %2712 = vmatprep.subr.mxu0 0.0
    %2713 = vmatpush1.msra.mxu0 0.0
    %2714 = vmatprep.subr.mxu0 0.0
    %2715 = vmatpush1.msra.mxu0 0.0
    %2716 = vmatprep.subr.mxu0 0.0
    %2717 = vmatpush1.msra.mxu0 0.0
    %2718 = vmatprep.subr.mxu0 0.0
    %2719 = vmatpush1.msra.mxu0 0.0
    %2720 = vmatprep.subr.mxu0 0.0
    %2721 = vmatpush1.msra.mxu0 0.0
    %2722 = vmatprep.subr.mxu0 0.0
    %2723 = vmatpush1.msra.mxu0 0.0
    %2724 = vmatprep.subr.mxu0 0.0
    %2725 = vmatpush1.msra.mxu0 0.0
    %2726 = vmatprep.subr.mxu0 0.0
    %2727 = vmatpush1.msra.mxu0 0.0
    %2728 = vmatprep.subr.mxu0 0.0
    %2729 = vmatpush1.msra.mxu0 0.0
    %2730 = vmatprep.subr.mxu0 0.0
    %2731 = vmatpush1.msra.mxu0 0.0
    %2732 = vmatprep.mubr.f32.mxu0 0.0
    %2733 = vmatmul.mubr.f32.gmra.mrb[0].mxu0 %v2419
    %v2734 = vpop.f32.mrb[0].mxu0
    %v2735 = vadd.f32 0.0, %v2734
    %v2736 = vpop.f32.mrb[0].mxu0
    %v2737 = vadd.f32 0.0, %v2736
    %2738 = vdwg.mxu0
    %v2743 = vcombine.low %v2664, %v2666
    %v2744 = vcombine.low %v2735, %v2737
    %v2746 = vunpack.c.l.s4 1966171168
    %v2747 = vunpack.c.0.s8 %v2746
    %v2748 = vlaneseq
    %v2749 = vshrl.u32 %v2748, 7
    %v2750 = vsub.s32 %v2747, %v2749
    %v2751 = vrot.slane %v2743, %v2750
    %v2753 = vunpack.c.l.s4 1966171168
    %v2754 = vunpack.c.0.s8 %v2753
    %v2755 = vlaneseq
    %v2756 = vshrl.u32 %v2755, 7
    %v2757 = vsub.s32 %v2754, %v2756
    %v2758 = vrot.slane %v2744, %v2757
    %v2759 = vcombine.low %v2751, %v2758
    %v2761 = vunpack.c.l.s4 1966171168
    %v2762 = vunpack.c.0.s8 %v2761
    %v2763 = vlaneseq
    %v2764 = vshrl.u32 %v2763, 7
    %v2765 = vsub.s32 %v2762, %v2764
    %v2766 = vrot.slane %v2759, %v2765
    %v2768 = vadd.f32 %v2596, %v2766
    %v2769 = vxor.u32 %v2768, 2147483648
    %v2770 = vmul.f32 %v2769, 1.442695
    %v2771 = vpow.pop %v2770
    %v2772 = vadd.f32 %v2771, 1.0
    %v2773 = vrcp.pop %v2772
    %v2774 = vmul.f32 1.0, %v2773
    %v2776 = vrot.slane %v2768, 1
    %v2778 = vxor.u32 %v2776, 2147483648
    %v2779 = vmul.f32 %v2778, 1.442695
    %v2780 = vpow.pop %v2779
    %v2781 = vadd.f32 %v2780, 1.0
    %v2782 = vrcp.pop %v2781
    %v2783 = vmul.f32 1.0, %v2782
    %v2784 = vrot.slane %v2768, 2
    %v2786 = vtanh.pop %v2784
    %v2787 = vrot.slane %v2768, 3
    %v2789 = vxor.u32 %v2787, 2147483648
    %v2790 = vmul.f32 %v2789, 1.442695
    %v2791 = vpow.pop %v2790
    %v2792 = vadd.f32 %v2791, 1.0
    %v2793 = vrcp.pop %v2792
    %v2794 = vmul.f32 1.0, %v2793
    %v2795 = vmul.f32 %v2783, %v2417
    %v2796 = vmul.f32 %v2774, %v2786
    %v2797 = vadd.f32 %v2795, %v2796
    %v2798 = vtanh.pop %v2797
    %v2799 = vmul.f32 %v2794, %v2798
    %2800 = vmatprep.subr.mxu0 %v158
    %2801 = vmatpush1.msra.mxu0 %v157
    %2802 = vmatprep.subr.mxu0 %v162
    %2803 = vmatpush1.msra.mxu0 %v161
    %2804 = vmatprep.subr.mxu0 %v166
    %2805 = vmatpush1.msra.mxu0 %v165
    %2806 = vmatprep.subr.mxu0 %v170
    %2807 = vmatpush1.msra.mxu0 %v169
    %2808 = vmatprep.subr.mxu0 %v174
    %2809 = vmatpush1.msra.mxu0 %v173
    %2810 = vmatprep.subr.mxu0 %v178
    %2811 = vmatpush1.msra.mxu0 %v177
    %2812 = vmatprep.subr.mxu0 %v182
    %2813 = vmatpush1.msra.mxu0 %v181
    %2814 = vmatprep.subr.mxu0 %v186
    %2815 = vmatpush1.msra.mxu0 %v185
    %2816 = vmatprep.subr.mxu0 %v190
    %2817 = vmatpush1.msra.mxu0 %v189
    %2818 = vmatprep.subr.mxu0 %v194
    %2819 = vmatpush1.msra.mxu0 %v193
    %2820 = vmatprep.subr.mxu0 %v198
    %2821 = vmatpush1.msra.mxu0 %v197
    %2822 = vmatprep.subr.mxu0 %v202
    %2823 = vmatpush1.msra.mxu0 %v201
    %2824 = vmatprep.subr.mxu0 %v206
    %2825 = vmatpush1.msra.mxu0 %v205
    %2826 = vmatprep.subr.mxu0 %v210
    %2827 = vmatpush1.msra.mxu0 %v209
    %2828 = vmatprep.subr.mxu0 %v214
    %2829 = vmatpush1.msra.mxu0 %v213
    %2830 = vmatprep.subr.mxu0 %v218
    %2831 = vmatpush1.msra.mxu0 %v217
    %2832 = vmatprep.subr.mxu0 %v222
    %2833 = vmatpush1.msra.mxu0 %v221
    %2834 = vmatprep.subr.mxu0 %v226
    %2835 = vmatpush1.msra.mxu0 %v225
    %2836 = vmatprep.subr.mxu0 %v230
    %2837 = vmatpush1.msra.mxu0 %v229
    %2838 = vmatprep.subr.mxu0 %v234
    %2839 = vmatpush1.msra.mxu0 %v233
    %2840 = vmatprep.subr.mxu0 %v238
    %2841 = vmatpush1.msra.mxu0 %v237
    %2842 = vmatprep.subr.mxu0 %v242
    %2843 = vmatpush1.msra.mxu0 %v241
    %2844 = vmatprep.subr.mxu0 %v246
    %2845 = vmatpush1.msra.mxu0 %v245
    %2846 = vmatprep.subr.mxu0 %v250
    %2847 = vmatpush1.msra.mxu0 %v249
    %2848 = vmatprep.subr.mxu0 %v254
    %2849 = vmatpush1.msra.mxu0 %v253
    %2850 = vmatprep.subr.mxu0 %v258
    %2851 = vmatpush1.msra.mxu0 %v257
    %2852 = vmatprep.subr.mxu0 %v262
    %2853 = vmatpush1.msra.mxu0 %v261
    %2854 = vmatprep.subr.mxu0 %v266
    %2855 = vmatpush1.msra.mxu0 %v265
    %2856 = vmatprep.subr.mxu0 %v270
    %2857 = vmatpush1.msra.mxu0 %v269
    %2858 = vmatprep.subr.mxu0 %v274
    %2859 = vmatpush1.msra.mxu0 %v273
    %2860 = vmatprep.subr.mxu0 %v278
    %2861 = vmatpush1.msra.mxu0 %v277
    %2862 = vmatprep.subr.mxu0 %v282
    %2863 = vmatpush1.msra.mxu0 %v281
    %2864 = vmatprep.mubr.f32.mxu0 %v2585
    %2865 = vmatmul.mubr.f32.gmra.mrb[0].mxu0 %v2799
    %v2866 = vpop.f32.mrb[0].mxu0
    %v2867 = vadd.f32 %v503, %v2866
    %v2868 = vpop.f32.mrb[0].mxu0
    %v2869 = vadd.f32 %v507, %v2868
    %2870 = vdwg.mxu0
    %2871 = vmatprep.subr.mxu0 %v160
    %2872 = vmatpush1.msra.mxu0 %v159
    %2873 = vmatprep.subr.mxu0 %v164
    %2874 = vmatpush1.msra.mxu0 %v163
    %2875 = vmatprep.subr.mxu0 %v168
    %2876 = vmatpush1.msra.mxu0 %v167
    %2877 = vmatprep.subr.mxu0 %v172
    %2878 = vmatpush1.msra.mxu0 %v171
    %2879 = vmatprep.subr.mxu0 %v176
    %2880 = vmatpush1.msra.mxu0 %v175
    %2881 = vmatprep.subr.mxu0 %v180
    %2882 = vmatpush1.msra.mxu0 %v179
    %2883 = vmatprep.subr.mxu0 %v184
    %2884 = vmatpush1.msra.mxu0 %v183
    %2885 = vmatprep.subr.mxu0 %v188
    %2886 = vmatpush1.msra.mxu0 %v187
    %2887 = vmatprep.subr.mxu0 %v192
    %2888 = vmatpush1.msra.mxu0 %v191
    %2889 = vmatprep.subr.mxu0 %v196
    %2890 = vmatpush1.msra.mxu0 %v195
    %2891 = vmatprep.subr.mxu0 %v200
    %2892 = vmatpush1.msra.mxu0 %v199
    %2893 = vmatprep.subr.mxu0 %v204
    %2894 = vmatpush1.msra.mxu0 %v203
    %2895 = vmatprep.subr.mxu0 %v208
    %2896 = vmatpush1.msra.mxu0 %v207
    %2897 = vmatprep.subr.mxu0 %v212
    %2898 = vmatpush1.msra.mxu0 %v211
    %2899 = vmatprep.subr.mxu0 %v216
    %2900 = vmatpush1.msra.mxu0 %v215
    %2901 = vmatprep.subr.mxu0 %v220
    %2902 = vmatpush1.msra.mxu0 %v219
    %2903 = vmatprep.subr.mxu0 %v224
    %2904 = vmatpush1.msra.mxu0 %v223
    %2905 = vmatprep.subr.mxu0 %v228
    %2906 = vmatpush1.msra.mxu0 %v227
    %2907 = vmatprep.subr.mxu0 %v232
    %2908 = vmatpush1.msra.mxu0 %v231
    %2909 = vmatprep.subr.mxu0 %v236
    %2910 = vmatpush1.msra.mxu0 %v235
    %2911 = vmatprep.subr.mxu0 %v240
    %2912 = vmatpush1.msra.mxu0 %v239
    %2913 = vmatprep.subr.mxu0 %v244
    %2914 = vmatpush1.msra.mxu0 %v243
    %2915 = vmatprep.subr.mxu0 %v248
    %2916 = vmatpush1.msra.mxu0 %v247
    %2917 = vmatprep.subr.mxu0 %v252
    %2918 = vmatpush1.msra.mxu0 %v251
    %2919 = vmatprep.subr.mxu0 %v256
    %2920 = vmatpush1.msra.mxu0 %v255
    %2921 = vmatprep.subr.mxu0 %v260
    %2922 = vmatpush1.msra.mxu0 %v259
    %2923 = vmatprep.subr.mxu0 %v264
    %2924 = vmatpush1.msra.mxu0 %v263
    %2925 = vmatprep.subr.mxu0 %v268
    %2926 = vmatpush1.msra.mxu0 %v267
    %2927 = vmatprep.subr.mxu0 %v272
    %2928 = vmatpush1.msra.mxu0 %v271
    %2929 = vmatprep.subr.mxu0 %v276
    %2930 = vmatpush1.msra.mxu0 %v275
    %2931 = vmatprep.subr.mxu0 %v280
    %2932 = vmatpush1.msra.mxu0 %v279
    %2933 = vmatprep.subr.mxu0 %v284
    %2934 = vmatpush1.msra.mxu0 %v283
    %2935 = vmatprep.mubr.f32.mxu0 %v2585
    %2936 = vmatmul.mubr.f32.gmra.mrb[0].mxu0 %v2799
    %v2937 = vpop.f32.mrb[0].mxu0
    %v2938 = vadd.f32 %v511, %v2937
    %v2939 = vpop.f32.mrb[0].mxu0
    %v2940 = vadd.f32 %v515, %v2939
    %2941 = vdwg.mxu0
    %v2942 = vxor.u32 %v2867, 2147483648
    %v2943 = vmul.f32 %v2942, 1.442695
    %v2944 = vpow.pop %v2943
    %v2945 = vadd.f32 %v2944, 1.0
    %v2946 = vrcp.pop %v2945
    %v2947 = vmul.f32 1.0, %v2946
    %v2948 = vxor.u32 %v2869, 2147483648
    %v2949 = vmul.f32 %v2948, 1.442695
    %v2950 = vpow.pop %v2949
    %v2951 = vadd.f32 %v2950, 1.0
    %v2952 = vrcp.pop %v2951
    %v2953 = vmul.f32 1.0, %v2952
    %v2954 = vtanh.pop %v2938
    %v2955 = vxor.u32 %v2940, 2147483648
    %v2956 = vmul.f32 %v2955, 1.442695
    %v2957 = vpow.pop %v2956
    %v2958 = vadd.f32 %v2957, 1.0
    %v2959 = vrcp.pop %v2958
    %v2960 = vmul.f32 1.0, %v2959
    %v2961 = vmul.f32 %v2953, %v2583
    %v2962 = vmul.f32 %v2947, %v2954
    %v2963 = vadd.f32 %v2961, %v2962
    %v2964 = vtanh.pop %v2963
    %v2965 = vmul.f32 %v2960, %v2964
    %2966 = vst [vmem:[#allocation2 + $0x6] sm:$0x1] %v2965
    %s2967 = sld [smem:[#allocation3 + $0x7]]
    %s2968 = sshra.s32 %s2967, 3
    %s2969 = sand.u32 %s2967, 7
    %s2970 = sshra.s32 %s2967, 3
    %s2971 = sand.u32 %s2967, 7
    %s2972 = smul.u32 %s2968, 4
    %s2973 = smul.u32 %s2972, 8
    %s2974 = sadd.s32 %s2973, %s2971
    %s2975 = scalar_lea.vmem [#allocation7], %s2974
    %v2976 = vld [vmem:[%s2975] ss:$8 sm:$0xf]
    %2977 = vmatprep.subr.mxu0 %v94
    %2978 = vmatpush1.msra.mxu0 %v93
    %2979 = vmatprep.subr.mxu0 %v98
    %2980 = vmatpush1.msra.mxu0 %v97
    %2981 = vmatprep.subr.mxu0 %v102
    %2982 = vmatpush1.msra.mxu0 %v101
    %2983 = vmatprep.subr.mxu0 %v106
    %2984 = vmatpush1.msra.mxu0 %v105
    %2985 = vmatprep.subr.mxu0 %v110
    %2986 = vmatpush1.msra.mxu0 %v109
    %2987 = vmatprep.subr.mxu0 %v114
    %2988 = vmatpush1.msra.mxu0 %v113
    %2989 = vmatprep.subr.mxu0 %v118
    %2990 = vmatpush1.msra.mxu0 %v117
    %2991 = vmatprep.subr.mxu0 %v122
    %2992 = vmatpush1.msra.mxu0 %v121
    %2993 = vmatprep.subr.mxu0 %v126
    %2994 = vmatpush1.msra.mxu0 %v125
    %2995 = vmatprep.subr.mxu0 %v130
    %2996 = vmatpush1.msra.mxu0 %v129
    %2997 = vmatprep.subr.mxu0 %v134
    %2998 = vmatpush1.msra.mxu0 %v133
    %2999 = vmatprep.subr.mxu0 %v138
    %3000 = vmatpush1.msra.mxu0 %v137
    %3001 = vmatprep.subr.mxu0 %v142
    %3002 = vmatpush1.msra.mxu0 %v141
    %3003 = vmatprep.subr.mxu0 %v146
    %3004 = vmatpush1.msra.mxu0 %v145
    %3005 = vmatprep.subr.mxu0 %v150
    %3006 = vmatpush1.msra.mxu0 %v149
    %3007 = vmatprep.subr.mxu0 %v154
    %3008 = vmatpush1.msra.mxu0 %v153
    %3009 = vmatprep.subr.mxu0 0.0
    %3010 = vmatpush1.msra.mxu0 0.0
    %3011 = vmatprep.subr.mxu0 0.0
    %3012 = vmatpush1.msra.mxu0 0.0
    %3013 = vmatprep.subr.mxu0 0.0
    %3014 = vmatpush1.msra.mxu0 0.0
    %3015 = vmatprep.subr.mxu0 0.0
    %3016 = vmatpush1.msra.mxu0 0.0
    %3017 = vmatprep.subr.mxu0 0.0
    %3018 = vmatpush1.msra.mxu0 0.0
    %3019 = vmatprep.subr.mxu0 0.0
    %3020 = vmatpush1.msra.mxu0 0.0
    %3021 = vmatprep.subr.mxu0 0.0
    %3022 = vmatpush1.msra.mxu0 0.0
    %3023 = vmatprep.subr.mxu0 0.0
    %3024 = vmatpush1.msra.mxu0 0.0
    %3025 = vmatprep.subr.mxu0 0.0
    %3026 = vmatpush1.msra.mxu0 0.0
    %3027 = vmatprep.subr.mxu0 0.0
    %3028 = vmatpush1.msra.mxu0 0.0
    %3029 = vmatprep.subr.mxu0 0.0
    %3030 = vmatpush1.msra.mxu0 0.0
    %3031 = vmatprep.subr.mxu0 0.0
    %3032 = vmatpush1.msra.mxu0 0.0
    %3033 = vmatprep.subr.mxu0 0.0
    %3034 = vmatpush1.msra.mxu0 0.0
    %3035 = vmatprep.subr.mxu0 0.0
    %3036 = vmatpush1.msra.mxu0 0.0
    %3037 = vmatprep.subr.mxu0 0.0
    %3038 = vmatpush1.msra.mxu0 0.0
    %3039 = vmatprep.subr.mxu0 0.0
    %3040 = vmatpush1.msra.mxu0 0.0
    %3041 = vmatprep.mubr.f32.mxu0 0.0
    %3042 = vmatmul.mubr.f32.gmra.mrb[0].mxu0 %v2799
    %v3043 = vpop.f32.mrb[0].mxu0
    %v3044 = vadd.f32 0.0, %v3043
    %v3045 = vpop.f32.mrb[0].mxu0
    %v3046 = vadd.f32 0.0, %v3045
    %3047 = vdwg.mxu0
    %3048 = vmatprep.subr.mxu0 %v96
    %3049 = vmatpush1.msra.mxu0 %v95
    %3050 = vmatprep.subr.mxu0 %v100
    %3051 = vmatpush1.msra.mxu0 %v99
    %3052 = vmatprep.subr.mxu0 %v104
    %3053 = vmatpush1.msra.mxu0 %v103
    %3054 = vmatprep.subr.mxu0 %v108
    %3055 = vmatpush1.msra.mxu0 %v107
    %3056 = vmatprep.subr.mxu0 %v112
    %3057 = vmatpush1.msra.mxu0 %v111
    %3058 = vmatprep.subr.mxu0 %v116
    %3059 = vmatpush1.msra.mxu0 %v115
    %3060 = vmatprep.subr.mxu0 %v120
    %3061 = vmatpush1.msra.mxu0 %v119
    %3062 = vmatprep.subr.mxu0 %v124
    %3063 = vmatpush1.msra.mxu0 %v123
    %3064 = vmatprep.subr.mxu0 %v128
    %3065 = vmatpush1.msra.mxu0 %v127
    %3066 = vmatprep.subr.mxu0 %v132
    %3067 = vmatpush1.msra.mxu0 %v131
    %3068 = vmatprep.subr.mxu0 %v136
    %3069 = vmatpush1.msra.mxu0 %v135
    %3070 = vmatprep.subr.mxu0 %v140
    %3071 = vmatpush1.msra.mxu0 %v139
    %3072 = vmatprep.subr.mxu0 %v144
    %3073 = vmatpush1.msra.mxu0 %v143
    %3074 = vmatprep.subr.mxu0 %v148
    %3075 = vmatpush1.msra.mxu0 %v147
    %3076 = vmatprep.subr.mxu0 %v152
    %3077 = vmatpush1.msra.mxu0 %v151
    %3078 = vmatprep.subr.mxu0 %v156
    %3079 = vmatpush1.msra.mxu0 %v155
    %3080 = vmatprep.subr.mxu0 0.0
    %3081 = vmatpush1.msra.mxu0 0.0
    %3082 = vmatprep.subr.mxu0 0.0
    %3083 = vmatpush1.msra.mxu0 0.0
    %3084 = vmatprep.subr.mxu0 0.0
    %3085 = vmatpush1.msra.mxu0 0.0
    %3086 = vmatprep.subr.mxu0 0.0
    %3087 = vmatpush1.msra.mxu0 0.0
    %3088 = vmatprep.subr.mxu0 0.0
    %3089 = vmatpush1.msra.mxu0 0.0
    %3090 = vmatprep.subr.mxu0 0.0
    %3091 = vmatpush1.msra.mxu0 0.0
    %3092 = vmatprep.subr.mxu0 0.0
    %3093 = vmatpush1.msra.mxu0 0.0
    %3094 = vmatprep.subr.mxu0 0.0
    %3095 = vmatpush1.msra.mxu0 0.0
    %3096 = vmatprep.subr.mxu0 0.0
    %3097 = vmatpush1.msra.mxu0 0.0
    %3098 = vmatprep.subr.mxu0 0.0
    %3099 = vmatpush1.msra.mxu0 0.0
    %3100 = vmatprep.subr.mxu0 0.0
    %3101 = vmatpush1.msra.mxu0 0.0
    %3102 = vmatprep.subr.mxu0 0.0
    %3103 = vmatpush1.msra.mxu0 0.0
    %3104 = vmatprep.subr.mxu0 0.0
    %3105 = vmatpush1.msra.mxu0 0.0
    %3106 = vmatprep.subr.mxu0 0.0
    %3107 = vmatpush1.msra.mxu0 0.0
    %3108 = vmatprep.subr.mxu0 0.0
    %3109 = vmatpush1.msra.mxu0 0.0
    %3110 = vmatprep.subr.mxu0 0.0
    %3111 = vmatpush1.msra.mxu0 0.0
    %3112 = vmatprep.mubr.f32.mxu0 0.0
    %3113 = vmatmul.mubr.f32.gmra.mrb[0].mxu0 %v2799
    %v3114 = vpop.f32.mrb[0].mxu0
    %v3115 = vadd.f32 0.0, %v3114
    %v3116 = vpop.f32.mrb[0].mxu0
    %v3117 = vadd.f32 0.0, %v3116
    %3118 = vdwg.mxu0
    %v3123 = vcombine.low %v3044, %v3046
    %v3124 = vcombine.low %v3115, %v3117
    %v3126 = vunpack.c.l.s4 1966171168
    %v3127 = vunpack.c.0.s8 %v3126
    %v3128 = vlaneseq
    %v3129 = vshrl.u32 %v3128, 7
    %v3130 = vsub.s32 %v3127, %v3129
    %v3131 = vrot.slane %v3123, %v3130
    %v3133 = vunpack.c.l.s4 1966171168
    %v3134 = vunpack.c.0.s8 %v3133
    %v3135 = vlaneseq
    %v3136 = vshrl.u32 %v3135, 7
    %v3137 = vsub.s32 %v3134, %v3136
    %v3138 = vrot.slane %v3124, %v3137
    %v3139 = vcombine.low %v3131, %v3138
    %v3141 = vunpack.c.l.s4 1966171168
    %v3142 = vunpack.c.0.s8 %v3141
    %v3143 = vlaneseq
    %v3144 = vshrl.u32 %v3143, 7
    %v3145 = vsub.s32 %v3142, %v3144
    %v3146 = vrot.slane %v3139, %v3145
    %v3148 = vadd.f32 %v2976, %v3146
    %v3149 = vxor.u32 %v3148, 2147483648
    %v3150 = vmul.f32 %v3149, 1.442695
    %v3151 = vpow.pop %v3150
    %v3152 = vadd.f32 %v3151, 1.0
    %v3153 = vrcp.pop %v3152
    %v3154 = vmul.f32 1.0, %v3153
    %v3156 = vrot.slane %v3148, 1
    %v3158 = vxor.u32 %v3156, 2147483648
    %v3159 = vmul.f32 %v3158, 1.442695
    %v3160 = vpow.pop %v3159
    %v3161 = vadd.f32 %v3160, 1.0
    %v3162 = vrcp.pop %v3161
    %v3163 = vmul.f32 1.0, %v3162
    %v3164 = vrot.slane %v3148, 2
    %v3166 = vtanh.pop %v3164
    %v3167 = vrot.slane %v3148, 3
    %v3169 = vxor.u32 %v3167, 2147483648
    %v3170 = vmul.f32 %v3169, 1.442695
    %v3171 = vpow.pop %v3170
    %v3172 = vadd.f32 %v3171, 1.0
    %v3173 = vrcp.pop %v3172
    %v3174 = vmul.f32 1.0, %v3173
    %v3175 = vmul.f32 %v3163, %v2797
    %v3176 = vmul.f32 %v3154, %v3166
    %v3177 = vadd.f32 %v3175, %v3176
    %v3178 = vtanh.pop %v3177
    %v3179 = vmul.f32 %v3174, %v3178
    %3180 = vmatprep.subr.mxu0 %v158
    %3181 = vmatpush1.msra.mxu0 %v157
    %3182 = vmatprep.subr.mxu0 %v162
    %3183 = vmatpush1.msra.mxu0 %v161
    %3184 = vmatprep.subr.mxu0 %v166
    %3185 = vmatpush1.msra.mxu0 %v165
    %3186 = vmatprep.subr.mxu0 %v170
    %3187 = vmatpush1.msra.mxu0 %v169
    %3188 = vmatprep.subr.mxu0 %v174
    %3189 = vmatpush1.msra.mxu0 %v173
    %3190 = vmatprep.subr.mxu0 %v178
    %3191 = vmatpush1.msra.mxu0 %v177
    %3192 = vmatprep.subr.mxu0 %v182
    %3193 = vmatpush1.msra.mxu0 %v181
    %3194 = vmatprep.subr.mxu0 %v186
    %3195 = vmatpush1.msra.mxu0 %v185
    %3196 = vmatprep.subr.mxu0 %v190
    %3197 = vmatpush1.msra.mxu0 %v189
    %3198 = vmatprep.subr.mxu0 %v194
    %3199 = vmatpush1.msra.mxu0 %v193
    %3200 = vmatprep.subr.mxu0 %v198
    %3201 = vmatpush1.msra.mxu0 %v197
    %3202 = vmatprep.subr.mxu0 %v202
    %3203 = vmatpush1.msra.mxu0 %v201
    %3204 = vmatprep.subr.mxu0 %v206
    %3205 = vmatpush1.msra.mxu0 %v205
    %3206 = vmatprep.subr.mxu0 %v210
    %3207 = vmatpush1.msra.mxu0 %v209
    %3208 = vmatprep.subr.mxu0 %v214
    %3209 = vmatpush1.msra.mxu0 %v213
    %3210 = vmatprep.subr.mxu0 %v218
    %3211 = vmatpush1.msra.mxu0 %v217
    %3212 = vmatprep.subr.mxu0 %v222
    %3213 = vmatpush1.msra.mxu0 %v221
    %3214 = vmatprep.subr.mxu0 %v226
    %3215 = vmatpush1.msra.mxu0 %v225
    %3216 = vmatprep.subr.mxu0 %v230
    %3217 = vmatpush1.msra.mxu0 %v229
    %3218 = vmatprep.subr.mxu0 %v234
    %3219 = vmatpush1.msra.mxu0 %v233
    %3220 = vmatprep.subr.mxu0 %v238
    %3221 = vmatpush1.msra.mxu0 %v237
    %3222 = vmatprep.subr.mxu0 %v242
    %3223 = vmatpush1.msra.mxu0 %v241
    %3224 = vmatprep.subr.mxu0 %v246
    %3225 = vmatpush1.msra.mxu0 %v245
    %3226 = vmatprep.subr.mxu0 %v250
    %3227 = vmatpush1.msra.mxu0 %v249
    %3228 = vmatprep.subr.mxu0 %v254
    %3229 = vmatpush1.msra.mxu0 %v253
    %3230 = vmatprep.subr.mxu0 %v258
    %3231 = vmatpush1.msra.mxu0 %v257
    %3232 = vmatprep.subr.mxu0 %v262
    %3233 = vmatpush1.msra.mxu0 %v261
    %3234 = vmatprep.subr.mxu0 %v266
    %3235 = vmatpush1.msra.mxu0 %v265
    %3236 = vmatprep.subr.mxu0 %v270
    %3237 = vmatpush1.msra.mxu0 %v269
    %3238 = vmatprep.subr.mxu0 %v274
    %3239 = vmatpush1.msra.mxu0 %v273
    %3240 = vmatprep.subr.mxu0 %v278
    %3241 = vmatpush1.msra.mxu0 %v277
    %3242 = vmatprep.subr.mxu0 %v282
    %3243 = vmatpush1.msra.mxu0 %v281
    %3244 = vmatprep.mubr.f32.mxu0 %v2965
    %3245 = vmatmul.mubr.f32.gmra.mrb[0].mxu0 %v3179
    %v3246 = vpop.f32.mrb[0].mxu0
    %v3247 = vadd.f32 %v503, %v3246
    %v3248 = vpop.f32.mrb[0].mxu0
    %v3249 = vadd.f32 %v507, %v3248
    %3250 = vdwg.mxu0
    %3251 = vmatprep.subr.mxu0 %v160
    %3252 = vmatpush1.msra.mxu0 %v159
    %3253 = vmatprep.subr.mxu0 %v164
    %3254 = vmatpush1.msra.mxu0 %v163
    %3255 = vmatprep.subr.mxu0 %v168
    %3256 = vmatpush1.msra.mxu0 %v167
    %3257 = vmatprep.subr.mxu0 %v172
    %3258 = vmatpush1.msra.mxu0 %v171
    %3259 = vmatprep.subr.mxu0 %v176
    %3260 = vmatpush1.msra.mxu0 %v175
    %3261 = vmatprep.subr.mxu0 %v180
    %3262 = vmatpush1.msra.mxu0 %v179
    %3263 = vmatprep.subr.mxu0 %v184
    %3264 = vmatpush1.msra.mxu0 %v183
    %3265 = vmatprep.subr.mxu0 %v188
    %3266 = vmatpush1.msra.mxu0 %v187
    %3267 = vmatprep.subr.mxu0 %v192
    %3268 = vmatpush1.msra.mxu0 %v191
    %3269 = vmatprep.subr.mxu0 %v196
    %3270 = vmatpush1.msra.mxu0 %v195
    %3271 = vmatprep.subr.mxu0 %v200
    %3272 = vmatpush1.msra.mxu0 %v199
    %3273 = vmatprep.subr.mxu0 %v204
    %3274 = vmatpush1.msra.mxu0 %v203
    %3275 = vmatprep.subr.mxu0 %v208
    %3276 = vmatpush1.msra.mxu0 %v207
    %3277 = vmatprep.subr.mxu0 %v212
    %3278 = vmatpush1.msra.mxu0 %v211
    %3279 = vmatprep.subr.mxu0 %v216
    %3280 = vmatpush1.msra.mxu0 %v215
    %3281 = vmatprep.subr.mxu0 %v220
    %3282 = vmatpush1.msra.mxu0 %v219
    %3283 = vmatprep.subr.mxu0 %v224
    %3284 = vmatpush1.msra.mxu0 %v223
    %3285 = vmatprep.subr.mxu0 %v228
    %3286 = vmatpush1.msra.mxu0 %v227
    %3287 = vmatprep.subr.mxu0 %v232
    %3288 = vmatpush1.msra.mxu0 %v231
    %3289 = vmatprep.subr.mxu0 %v236
    %3290 = vmatpush1.msra.mxu0 %v235
    %3291 = vmatprep.subr.mxu0 %v240
    %3292 = vmatpush1.msra.mxu0 %v239
    %3293 = vmatprep.subr.mxu0 %v244
    %3294 = vmatpush1.msra.mxu0 %v243
    %3295 = vmatprep.subr.mxu0 %v248
    %3296 = vmatpush1.msra.mxu0 %v247
    %3297 = vmatprep.subr.mxu0 %v252
    %3298 = vmatpush1.msra.mxu0 %v251
    %3299 = vmatprep.subr.mxu0 %v256
    %3300 = vmatpush1.msra.mxu0 %v255
    %3301 = vmatprep.subr.mxu0 %v260
    %3302 = vmatpush1.msra.mxu0 %v259
    %3303 = vmatprep.subr.mxu0 %v264
    %3304 = vmatpush1.msra.mxu0 %v263
    %3305 = vmatprep.subr.mxu0 %v268
    %3306 = vmatpush1.msra.mxu0 %v267
    %3307 = vmatprep.subr.mxu0 %v272
    %3308 = vmatpush1.msra.mxu0 %v271
    %3309 = vmatprep.subr.mxu0 %v276
    %3310 = vmatpush1.msra.mxu0 %v275
    %3311 = vmatprep.subr.mxu0 %v280
    %3312 = vmatpush1.msra.mxu0 %v279
    %3313 = vmatprep.subr.mxu0 %v284
    %3314 = vmatpush1.msra.mxu0 %v283
    %3315 = vmatprep.mubr.f32.mxu0 %v2965
    %3316 = vmatmul.mubr.f32.gmra.mrb[0].mxu0 %v3179
    %v3317 = vpop.f32.mrb[0].mxu0
    %v3318 = vadd.f32 %v511, %v3317
    %v3319 = vpop.f32.mrb[0].mxu0
    %v3320 = vadd.f32 %v515, %v3319
    %3321 = vdwg.mxu0
    %v3322 = vxor.u32 %v3247, 2147483648
    %v3323 = vmul.f32 %v3322, 1.442695
    %v3324 = vpow.pop %v3323
    %v3325 = vadd.f32 %v3324, 1.0
    %v3326 = vrcp.pop %v3325
    %v3327 = vmul.f32 1.0, %v3326
    %v3328 = vxor.u32 %v3249, 2147483648
    %v3329 = vmul.f32 %v3328, 1.442695
    %v3330 = vpow.pop %v3329
    %v3331 = vadd.f32 %v3330, 1.0
    %v3332 = vrcp.pop %v3331
    %v3333 = vmul.f32 1.0, %v3332
    %v3334 = vtanh.pop %v3318
    %v3335 = vxor.u32 %v3320, 2147483648
    %v3336 = vmul.f32 %v3335, 1.442695
    %v3337 = vpow.pop %v3336
    %v3338 = vadd.f32 %v3337, 1.0
    %v3339 = vrcp.pop %v3338
    %v3340 = vmul.f32 1.0, %v3339
    %v3341 = vmul.f32 %v3333, %v2963
    %v3342 = vmul.f32 %v3327, %v3334
    %v3343 = vadd.f32 %v3341, %v3342
    %v3344 = vtanh.pop %v3343
    %v3345 = vmul.f32 %v3340, %v3344
    %3346 = vst [vmem:[#allocation2 + $0x7] sm:$0x1] %v3345
    %v3347 = vld [vmem:[#allocation2] sm:$0xff]
    %v3348 = vld [vmem:[#allocation11] sm:$0xff]
    %v3349 = vld [vmem:[#allocation11 + $0x8] sm:$0xff]
    %v3350 = vld [vmem:[#allocation11 + $0x10] sm:$0xff]
    %v3351 = vld [vmem:[#allocation11 + $0x18] sm:$0xff]
    %v3352 = vld [vmem:[#allocation11 + $0x20] sm:$0xff]
    %v3353 = vld [vmem:[#allocation11 + $0x28] sm:$0xff]
    %v3354 = vld [vmem:[#allocation11 + $0x30] sm:$0xff]
    %v3355 = vld [vmem:[#allocation11 + $0x38] sm:$0xff]
    %v3356 = vld [vmem:[#allocation11 + $0x40] sm:$0xff]
    %v3357 = vld [vmem:[#allocation11 + $0x48] sm:$0xff]
    %v3358 = vld [vmem:[#allocation11 + $0x50] sm:$0xff]
    %v3359 = vld [vmem:[#allocation11 + $0x58] sm:$0xff]
    %v3360 = vld [vmem:[#allocation11 + $0x60] sm:$0xff]
    %v3361 = vld [vmem:[#allocation11 + $0x68] sm:$0xff]
    %v3362 = vld [vmem:[#allocation11 + $0x70] sm:$0xff]
    %v3363 = vld [vmem:[#allocation11 + $0x78] sm:$0xff]
    %v3364 = vld [vmem:[%s6] sm:$0x1]
    %v3366 = vlaneseq
    %v3367 = vshrl.u32 %v3366, 7
    %v3368 = vsub.s32 0, %v3367
    %v3369 = vrot.slane %v3364, %v3368
    %3371 = vmatprep.subr.mxu0 0.0
    %3372 = vmatpush1.msra.mxu0 %v3348
    %3373 = vmatprep.subr.mxu0 0.0
    %3374 = vmatpush1.msra.mxu0 %v3349
    %3375 = vmatprep.subr.mxu0 0.0
    %3376 = vmatpush1.msra.mxu0 %v3350
    %3377 = vmatprep.subr.mxu0 0.0
    %3378 = vmatpush1.msra.mxu0 %v3351
    %3379 = vmatprep.subr.mxu0 0.0
    %3380 = vmatpush1.msra.mxu0 %v3352
    %3381 = vmatprep.subr.mxu0 0.0
    %3382 = vmatpush1.msra.mxu0 %v3353
    %3383 = vmatprep.subr.mxu0 0.0
    %3384 = vmatpush1.msra.mxu0 %v3354
    %3385 = vmatprep.subr.mxu0 0.0
    %3386 = vmatpush1.msra.mxu0 %v3355
    %3387 = vmatprep.subr.mxu0 0.0
    %3388 = vmatpush1.msra.mxu0 %v3356
    %3389 = vmatprep.subr.mxu0 0.0
    %3390 = vmatpush1.msra.mxu0 %v3357
    %3391 = vmatprep.subr.mxu0 0.0
    %3392 = vmatpush1.msra.mxu0 %v3358
    %3393 = vmatprep.subr.mxu0 0.0
    %3394 = vmatpush1.msra.mxu0 %v3359
    %3395 = vmatprep.subr.mxu0 0.0
    %3396 = vmatpush1.msra.mxu0 %v3360
    %3397 = vmatprep.subr.mxu0 0.0
    %3398 = vmatpush1.msra.mxu0 %v3361
    %3399 = vmatprep.subr.mxu0 0.0
    %3400 = vmatpush1.msra.mxu0 %v3362
    %3401 = vmatprep.subr.mxu0 0.0
    %3402 = vmatpush1.msra.mxu0 %v3363
    %3403 = vmatprep.subr.mxu0 0.0
    %3404 = vmatpush1.msra.mxu0 0.0
    %3405 = vmatprep.subr.mxu0 0.0
    %3406 = vmatpush1.msra.mxu0 0.0
    %3407 = vmatprep.subr.mxu0 0.0
    %3408 = vmatpush1.msra.mxu0 0.0
    %3409 = vmatprep.subr.mxu0 0.0
    %3410 = vmatpush1.msra.mxu0 0.0
    %3411 = vmatprep.subr.mxu0 0.0
    %3412 = vmatpush1.msra.mxu0 0.0
    %3413 = vmatprep.subr.mxu0 0.0
    %3414 = vmatpush1.msra.mxu0 0.0
    %3415 = vmatprep.subr.mxu0 0.0
    %3416 = vmatpush1.msra.mxu0 0.0
    %3417 = vmatprep.subr.mxu0 0.0
    %3418 = vmatpush1.msra.mxu0 0.0
    %3419 = vmatprep.subr.mxu0 0.0
    %3420 = vmatpush1.msra.mxu0 0.0
    %3421 = vmatprep.subr.mxu0 0.0
    %3422 = vmatpush1.msra.mxu0 0.0
    %3423 = vmatprep.subr.mxu0 0.0
    %3424 = vmatpush1.msra.mxu0 0.0
    %3425 = vmatprep.subr.mxu0 0.0
    %3426 = vmatpush1.msra.mxu0 0.0
    %3427 = vmatprep.subr.mxu0 0.0
    %3428 = vmatpush1.msra.mxu0 0.0
    %3429 = vmatprep.subr.mxu0 0.0
    %3430 = vmatpush1.msra.mxu0 0.0
    %3431 = vmatprep.subr.mxu0 0.0
    %3432 = vmatpush1.msra.mxu0 0.0
    %3433 = vmatprep.subr.mxu0 0.0
    %3434 = vmatpush1.msra.mxu0 0.0
    %3435 = vmatprep.mubr.f32.mxu0 0.0
    %3436 = vmatmul.mubr.f32.gmra.mrb[0].mxu0 %v3347
    %v3437 = vpop.f32.mrb[0].mxu0
    %v3438 = vadd.f32 %v3369, %v3437
    %v3439 = vpop.f32.mrb[0].mxu0
    %3440 = vdwg.mxu0
    %v3441 = vmax.f32 %v3438, 0.0
    %3442 = vmax.xlane.f32.xlu0 %v3441
    %v3443 = vpop.xlane.xlu0 %3442
    %v3444 = vsub.f32 %v3441, %v3443
    %v3445 = vmul.f32 %v3444, 1.442695
    %v3446 = vpow.pop %v3445
    %3447 = vadd.xlane.f32.xlu0 %v3446
    %v3448 = vpop.xlane.xlu0 %3447
    %v3449 = vlog2.pop %v3448
    %v3450 = vmul.f32 %v3449, 0.6931472
    %v3451 = vadd.f32 %v3443, %v3450
    %v3452 = vsub.f32 %v3441, %v3451
    %3453 = vst [vmem:[#allocation13] sm:$0xff] %v3452
    // Predicated region
    $region50: #{tpu_custom_call.1} parent=1 // pred_check
      _
    $region51: #{tpu_custom_call.1} parent=1 // pred_check_branch
      %3455 = sbr.rel (0) target = $region53
    $region52: #{tpu_custom_call.1} parent=1 // pred_region
      %s3457 = ssub.s32 128, 128
      %3458 = vsyncadd [#allocation5], %s3457
      %s3460 = sshll.u32 [#allocation13], 4
      %s3461 = int_to_ptr.vmem [resolvable:$true] %s3460
      %3463 = dma.vmem_to_hbm [thread:$0]  %s3461, 128, %s7, [#allocation5]
    $region53: #{tpu_custom_call.1} parent=1 // pred_fallthru
      _
    // Predicated region
    $region54: #{tpu_custom_call.1} parent=1 // pred_check
      _
    $region55: #{tpu_custom_call.1} parent=1 // pred_check_branch
      %3465 = sbr.rel (0) target = $region57
    $region56: #{tpu_custom_call.1} parent=1 // pred_region
      %3466 = dma.done [#allocation5], 128
    $region57: #{tpu_custom_call.1} parent=1 // pred_fallthru
      _
    %3467 = vsyncpa [#allocation4], 1
    %3468 = vsyncpa [#allocation9], 1
    %3469 = vsyncpa [#allocation12], 1
    %3470 = vsyncpa [#allocation5], 1
    %3471 = vsyncpa [#allocation6], 1

</llo_original>
